<compile_context>
chip_gen: v5e
topology: v5e:2x2
jax: 0.10.0
libtpu: 0.0.40
codegen_flags: <defaults>
</compile_context>

<pallas_src>
import functools
import math

import jax
import jax.numpy as jnp
from jax.experimental import pallas as pl
from jax.experimental.pallas import tpu as pltpu

F32 = jnp.float32
BF16 = jnp.bfloat16
_VMEM = pl.BlockSpec(memory_space=pltpu.MemorySpace.VMEM)


# ----------------------------------------------------------------------------- helpers
def _ln(x, g, b, eps):
    # x: (S, D) f32, g/b: (1, D) f32
    mean = jnp.mean(x, axis=-1, keepdims=True)
    var = jnp.mean((x - mean) ** 2, axis=-1, keepdims=True)
    return (x - mean) * jax.lax.rsqrt(var + eps) * g + b


def _full_spec(a):
    nd = a.ndim
    return pl.BlockSpec(a.shape, lambda *_: (0,) * nd)


# ----------------------------------------------------------------------------- kernels
def _encoder_layer_kernel(*refs, num_heads, scale, eps, pre_ln, quick_gelu,
                          masked, embed_patches):
    """One fused transformer layer (attention sub-block + FFN sub-block).

    Vision path additionally folds the patch-embedding matmul, CLS concat and
    positional add into the same kernel.
    """
    it = iter(refs)
    if embed_patches:
        patches_ref = next(it)
        w_patch_ref = next(it)
        cls_ref = next(it)
        pos_ref = next(it)
    else:
        x_ref = next(it)
    mask_ref = next(it) if masked else None
    ln_in_g, ln_in_b = next(it), next(it)
    ln1_g, ln1_b = next(it), next(it)
    wqkv_ref, bqkv_ref, wo_ref, bo_ref = next(it), next(it), next(it), next(it)
    ln2_g, ln2_b = next(it), next(it)
    w1_ref, b1_ref, w2_ref, b2_ref = next(it), next(it), next(it), next(it)
    o_ref = next(it)

    # ----------------------- input embedding
    if embed_patches:
        # conv(stride == kernel == patch) == matmul, bias=False
        pe = jnp.dot(patches_ref[0].astype(BF16), w_patch_ref[...],
                     preferred_element_type=jnp.float32)                    # (nP, D)
        x_raw = (jnp.concatenate([cls_ref[...].astype(jnp.float32), pe], axis=0)
                 + pos_ref[...].astype(jnp.float32))                        # (S, D)
    else:
        x_raw = x_ref[0].astype(jnp.float32)                                # (S, D)

    S, D = x_raw.shape
    H = num_heads
    Dh = D // H

    # embedding-LN (BERT) / ln_pre (CLIP) fused as the layer's input LN.
    # TODO(synk): a multi-layer stack must apply this only on layer 0.
    x = _ln(x_raw, ln_in_g[...], ln_in_b[...], eps)

    # ----------------------- attention sub-block
    h = _ln(x, ln1_g[...], ln1_b[...], eps) if pre_ln else x
    qkv = jnp.dot(h.astype(BF16), wqkv_ref[...],
                  preferred_element_type=jnp.float32) + bqkv_ref[...]       # (S, 3D)

    # heads as one batched (H,S,Dh) layout -> single batched dot_general,
    # no per-head Python loop / concatenate.
    q = (qkv[:, 0 * D:1 * D] * scale).reshape(S, H, Dh)                     # scale in q
    k = qkv[:, 1 * D:2 * D].reshape(S, H, Dh)
    v = qkv[:, 2 * D:3 * D].reshape(S, H, Dh)

    s = jnp.einsum("qhd,khd->hqk", q.astype(BF16), k.astype(BF16),
                   preferred_element_type=jnp.float32)                      # (H, S, S)
    if masked:
        bias = (1.0 - mask_ref[0].astype(jnp.float32)) * (-1e9)             # (1, S)
        s = s + bias[None]                                                  # one broadcast
    m = jnp.max(s, axis=-1, keepdims=True)
    p = jnp.exp(s - m)
    p = p * pl.reciprocal(jnp.sum(p, axis=-1, keepdims=True), approx=True)  # EUP slot
    ctx = jnp.einsum("hqk,khd->qhd", p.astype(BF16), v.astype(BF16),
                     preferred_element_type=jnp.float32)                    # (S, H, Dh)
    ctx = ctx.reshape(S, D)
    attn_out = jnp.dot(ctx.astype(BF16), wo_ref[...],
                       preferred_element_type=jnp.float32) + bo_ref[...]
    x = x + attn_out if pre_ln else _ln(x + attn_out, ln1_g[...], ln1_b[...], eps)

    # ----------------------- FFN sub-block
    h = _ln(x, ln2_g[...], ln2_b[...], eps) if pre_ln else x
    h1 = jnp.dot(h.astype(BF16), w1_ref[...],
                 preferred_element_type=jnp.float32) + b1_ref[...]
    if quick_gelu:
        h1 = h1 * jax.nn.sigmoid(1.702 * h1)                                # CLIP quick_gelu
    else:
        h1 = jax.nn.gelu(h1, approximate=True)                              # ALBERT gelu_new
    h2 = jnp.dot(h1.astype(BF16), w2_ref[...],
                 preferred_element_type=jnp.float32) + b2_ref[...]
    out = x + h2 if pre_ln else _ln(x + h2, ln2_g[...], ln2_b[...], eps)

    o_ref[0] = out.astype(o_ref.dtype)                                      # bf16 out


def _head_kernel(t_ref, i_ref, g_ref, b_ref, wproj_ref, wt_ref, wi_ref, bcls_ref,
                 o_ref, *, eps):
    """CLIP ln_post + visual_projection + fusion classifier, fused.

    concat([t, img_feat]) @ W + b == t @ W_t + img_feat @ W_i + b (no concat tensor).
    """
    img = _ln(i_ref[...].astype(jnp.float32), g_ref[...], b_ref[...], eps)  # (B, Dv)
    img_feat = jnp.dot(img.astype(BF16), wproj_ref[...],
                       preferred_element_type=jnp.float32)                  # (B, P)
    txt = t_ref[...].astype(jnp.float32)                                    # (B, Dt)
    o_ref[...] = (jnp.dot(txt, wt_ref[...], preferred_element_type=jnp.float32)
                  + jnp.dot(img_feat, wi_ref[...], preferred_element_type=jnp.float32)
                  + bcls_ref[...])


# ----------------------------------------------------------------------------- wrappers
def transformer_layer(*, x=None, mask=None, patch_inputs=None,
                      ln_in_g, ln_in_b, lp, num_heads, eps, pre_ln, quick_gelu):
    embed_patches = patch_inputs is not None
    masked = mask is not None
    if embed_patches:
        patches, w_patch, class_emb, pos_emb = patch_inputs
        B, nP, K = patches.shape
        D = w_patch.shape[1]
        S = pos_emb.shape[0]
    else:
        B, S, D = x.shape
    scale = 1.0 / math.sqrt(D // num_heads)

    kern = functools.partial(_encoder_layer_kernel, num_heads=num_heads, scale=scale,
                             eps=eps, pre_ln=pre_ln, quick_gelu=quick_gelu,
                             masked=masked, embed_patches=embed_patches)

    args, in_specs = [], []
    if embed_patches:
        args += [patches, w_patch, class_emb, pos_emb]
        in_specs += [pl.BlockSpec((1, nP, K), lambda b: (b, 0, 0)),
                     _full_spec(w_patch), _full_spec(class_emb), _full_spec(pos_emb)]
    else:
        args.append(x)
        in_specs.append(pl.BlockSpec((1, S, D), lambda b: (b, 0, 0)))
    if masked:
        args.append(mask)
        in_specs.append(pl.BlockSpec((1, 1, S), lambda b: (b, 0, 0)))
    weights = [ln_in_g, ln_in_b, lp["ln1_g"], lp["ln1_b"],
               lp["wqkv"], lp["bqkv"], lp["wo"], lp["bo"],
               lp["ln2_g"], lp["ln2_b"],
               lp["w_ffn1"], lp["b_ffn1"], lp["w_ffn2"], lp["b_ffn2"]]
    args += weights
    in_specs += [_full_spec(w) for w in weights]

    return pl.pallas_call(
        kern,
        grid=(B,),
        out_shape=jax.ShapeDtypeStruct((B, S, D), BF16),   # bf16 inter-kernel activations
        in_specs=in_specs,
        out_specs=pl.BlockSpec((1, S, D), lambda b: (b, 0, 0)),
        compiler_params=pltpu.CompilerParams(dimension_semantics=("parallel",)),
    )(*args)


def fusion_head(text_cls, img_cls, ln_g, ln_b, w_proj, w_t, w_i, b, *, eps):
    B = text_cls.shape[0]
    return pl.pallas_call(
        functools.partial(_head_kernel, eps=eps),
        out_shape=jax.ShapeDtypeStruct((B, 1), F32),
        in_specs=[_VMEM] * 8,
        out_specs=_VMEM,
    )(text_cls, img_cls, ln_g, ln_b, w_proj, w_t, w_i, b)


# ----------------------------------------------------------------------------- model glue
def text_encoder_forward(params, input_ids, attention_mask, cfg):
    """BERT-style (post-LN) encoder; returns last_hidden_state (B, S, D) bf16."""
    B, S = input_ids.shape
    emb = jnp.take(params["tok_emb"], input_ids, axis=0) + params["pos_emb"][:S][None]
    mask = attention_mask.astype(F32).reshape(B, 1, S)   # raw mask; -1e9 bias built in-kernel
    return transformer_layer(
        x=emb, mask=mask, patch_inputs=None,
        ln_in_g=params["ln_emb_g"], ln_in_b=params["ln_emb_b"], lp=params["layer"],
        num_heads=cfg["heads"], eps=1e-12, pre_ln=False, quick_gelu=False)


def clip_vision_forward(params, pixel_values, cfg):
    """CLIP ViT (pre-LN) vision tower; patch embedding fused into the layer kernel."""
    B, C, Himg, Wimg = pixel_values.shape
    p = cfg["patch"]
    nP = (Himg // p) * (Wimg // p)
    # patch extraction (NCHW -> (B, nP, C*p*p)); the conv(stride=patch) matmul runs in-kernel
    patches = pixel_values.reshape(B, C, Himg // p, p, Wimg // p, p)
    patches = patches.transpose(0, 2, 4, 1, 3, 5).reshape(B, nP, C * p * p)
    return transformer_layer(
        x=None, mask=None,
        patch_inputs=(patches, params["w_patch"], params["class_emb"], params["pos_emb"]),
        ln_in_g=params["ln_pre_g"], ln_in_b=params["ln_pre_b"], lp=params["layer"],
        num_heads=cfg["heads"], eps=1e-5, pre_ln=True, quick_gelu=True)


def multimodal_classifier_forward(params, input_ids, attention_mask, pixel_values, cfg):
    text_hidden = text_encoder_forward(params["text"], input_ids, attention_mask,
                                       cfg["text"])
    img_hidden = clip_vision_forward(params["clip"], pixel_values, cfg["clip"])
    text_cls = text_hidden[:, 0, :]                              # (B, Dt) CLS token
    img_cls = img_hidden[:, 0, :]                                # (B, Dv) CLS token
    return fusion_head(text_cls, img_cls,
                       params["clip"]["ln_post_g"], params["clip"]["ln_post_b"],
                       params["clip"]["w_proj"],
                       params["cls_w_text"], params["cls_w_img"], params["cls_b"],
                       eps=1e-5)


# ----------------------------------------------------------------------------- params
def _dense(key, din, dout, scale=0.02, dtype=F32):
    return (scale * jax.random.normal(key, (din, dout), F32)).astype(dtype)


def _block_params(key, d, dff):
    ks = jax.random.split(key, 6)
    wqkv = jnp.concatenate(
        [_dense(ks[0], d, d), _dense(ks[1], d, d), _dense(ks[2], d, d)], axis=1)
    return {
        "wqkv": wqkv.astype(BF16), "bqkv": jnp.zeros((1, 3 * d), F32),
        "wo": _dense(ks[3], d, d, dtype=BF16), "bo": jnp.zeros((1, d), F32),
        "ln1_g": jnp.ones((1, d), F32), "ln1_b": jnp.zeros((1, d), F32),
        "w_ffn1": _dense(ks[4], d, dff, dtype=BF16), "b_ffn1": jnp.zeros((1, dff), F32),
        "w_ffn2": _dense(ks[5], dff, d, dtype=BF16), "b_ffn2": jnp.zeros((1, d), F32),
        "ln2_g": jnp.ones((1, d), F32), "ln2_b": jnp.zeros((1, d), F32),
    }


def init_params(key, cfg):
    kt, kc, kcls = jax.random.split(key, 3)
    t, c = cfg["text"], cfg["clip"]
    kt1, kt2, kt3 = jax.random.split(kt, 3)
    text = {
        "tok_emb": _dense(kt1, t["vocab"], t["hidden"]),
        "pos_emb": _dense(kt2, t["max_pos"], t["hidden"]),
        "ln_emb_g": jnp.ones((1, t["hidden"]), F32),
        "ln_emb_b": jnp.zeros((1, t["hidden"]), F32),
        "layer": _block_params(kt3, t["hidden"], t["ffn"]),
    }
    kc1, kc2, kc3, kc4, kc5 = jax.random.split(kc, 5)
    n_tokens = (c["image"] // c["patch"]) ** 2 + 1
    clip = {
        "w_patch": _dense(kc1, c["channels"] * c["patch"] ** 2, c["hidden"], dtype=BF16),
        "class_emb": 0.02 * jax.random.normal(kc2, (1, c["hidden"]), F32),
        "pos_emb": _dense(kc3, n_tokens, c["hidden"]),
        "ln_pre_g": jnp.ones((1, c["hidden"]), F32),
        "ln_pre_b": jnp.zeros((1, c["hidden"]), F32),
        "layer": _block_params(kc4, c["hidden"], c["ffn"]),
        "ln_post_g": jnp.ones((1, c["hidden"]), F32),
        "ln_post_b": jnp.zeros((1, c["hidden"]), F32),
        "w_proj": _dense(kc5, c["hidden"], c["proj_dim"], dtype=BF16),
    }
    kcls1, kcls2 = jax.random.split(kcls, 2)
    # Linear(fused_dim, 1) split into text / image halves (mathematically identical).
    return {
        "text": text,
        "clip": clip,
        "cls_w_text": _dense(kcls1, t["hidden"], 1),
        "cls_w_img": _dense(kcls2, c["proj_dim"], 1),
        "cls_b": jnp.zeros((1, 1), F32),
    }


# ----------------------------------------------------------------------------- main
if __name__ == "__main__":
    cfg = {
        "text": {"vocab": 100, "max_pos": 16, "hidden": 32, "heads": 2, "ffn": 64},
        "clip": {"channels": 3, "image": 16, "patch": 8, "hidden": 32, "heads": 2,
                 "ffn": 64, "proj_dim": 16},
    }
    B, S = 2, 8

    key = jax.random.PRNGKey(0)
    kp, k_ids, k_px = jax.random.split(key, 3)
    params = init_params(kp, cfg)

    input_ids = jax.random.randint(k_ids, (B, S), 0, cfg["text"]["vocab"], jnp.int32)
    attention_mask = jnp.ones((B, S), jnp.int32).at[:, -2:].set(0)  # last 2 tokens padded
    pixel_values = jax.random.normal(
        k_px, (B, cfg["clip"]["channels"], cfg["clip"]["image"], cfg["clip"]["image"]),
        F32)

    fwd = jax.jit(functools.partial(multimodal_classifier_forward, cfg=cfg))
    logits = fwd(params, input_ids, attention_mask, pixel_values)
    logits = jax.block_until_ready(logits)
    assert logits.shape == (B, 1), logits.shape
    print("KERNEL_OK")
</pallas_src>

<mosaic_0001>
module attributes {stable_mosaic.version = 11 : i64} {
  func.func @_encoder_layer_kernel(%arg0: i32, %arg1: memref<1x4x192xf32, #tpu.memory_space<vmem>>, %arg2: memref<192x32xbf16, #tpu.memory_space<vmem>>, %arg3: memref<1x32xf32, #tpu.memory_space<vmem>>, %arg4: memref<5x32xf32, #tpu.memory_space<vmem>>, %arg5: memref<1x32xf32, #tpu.memory_space<vmem>>, %arg6: memref<1x32xf32, #tpu.memory_space<vmem>>, %arg7: memref<1x32xf32, #tpu.memory_space<vmem>>, %arg8: memref<1x32xf32, #tpu.memory_space<vmem>>, %arg9: memref<32x96xbf16, #tpu.memory_space<vmem>>, %arg10: memref<1x96xf32, #tpu.memory_space<vmem>>, %arg11: memref<32x32xbf16, #tpu.memory_space<vmem>>, %arg12: memref<1x32xf32, #tpu.memory_space<vmem>>, %arg13: memref<1x32xf32, #tpu.memory_space<vmem>>, %arg14: memref<1x32xf32, #tpu.memory_space<vmem>>, %arg15: memref<32x64xbf16, #tpu.memory_space<vmem>>, %arg16: memref<1x64xf32, #tpu.memory_space<vmem>>, %arg17: memref<64x32xbf16, #tpu.memory_space<vmem>>, %arg18: memref<1x32xf32, #tpu.memory_space<vmem>>, %arg19: memref<1x5x32xbf16, #tpu.memory_space<vmem>>) attributes {dimension_semantics = [#tpu.dimension_semantics<parallel>], iteration_bounds = array<i64: 2>, scalar_prefetch = 0 : i64, scratch_operands = 0 : i64, tpu.core_type = #tpu.core_type<tc>, window_params = [{transform_indices = @transform_0, window_bounds = array<i64: 1, 4, 192>}, {pipeline_mode = #tpu.pipeline_mode<synchronous>, transform_indices = @transform_1, window_bounds = array<i64: 192, 32>}, {pipeline_mode = #tpu.pipeline_mode<synchronous>, transform_indices = @transform_2, window_bounds = array<i64: 1, 32>}, {pipeline_mode = #tpu.pipeline_mode<synchronous>, transform_indices = @transform_3, window_bounds = array<i64: 5, 32>}, {pipeline_mode = #tpu.pipeline_mode<synchronous>, transform_indices = @transform_4, window_bounds = array<i64: 1, 32>}, {pipeline_mode = #tpu.pipeline_mode<synchronous>, transform_indices = @transform_5, window_bounds = array<i64: 1, 32>}, {pipeline_mode = #tpu.pipeline_mode<synchronous>, transform_indices = @transform_6, window_bounds = array<i64: 1, 32>}, {pipeline_mode = #tpu.pipeline_mode<synchronous>, transform_indices = @transform_7, window_bounds = array<i64: 1, 32>}, {pipeline_mode = #tpu.pipeline_mode<synchronous>, transform_indices = @transform_8, window_bounds = array<i64: 32, 96>}, {pipeline_mode = #tpu.pipeline_mode<synchronous>, transform_indices = @transform_9, window_bounds = array<i64: 1, 96>}, {pipeline_mode = #tpu.pipeline_mode<synchronous>, transform_indices = @transform_10, window_bounds = array<i64: 32, 32>}, {pipeline_mode = #tpu.pipeline_mode<synchronous>, transform_indices = @transform_11, window_bounds = array<i64: 1, 32>}, {pipeline_mode = #tpu.pipeline_mode<synchronous>, transform_indices = @transform_12, window_bounds = array<i64: 1, 32>}, {pipeline_mode = #tpu.pipeline_mode<synchronous>, transform_indices = @transform_13, window_bounds = array<i64: 1, 32>}, {pipeline_mode = #tpu.pipeline_mode<synchronous>, transform_indices = @transform_14, window_bounds = array<i64: 32, 64>}, {pipeline_mode = #tpu.pipeline_mode<synchronous>, transform_indices = @transform_15, window_bounds = array<i64: 1, 64>}, {pipeline_mode = #tpu.pipeline_mode<synchronous>, transform_indices = @transform_16, window_bounds = array<i64: 64, 32>}, {pipeline_mode = #tpu.pipeline_mode<synchronous>, transform_indices = @transform_17, window_bounds = array<i64: 1, 32>}, {transform_indices = @transform_18, window_bounds = array<i64: 1, 5, 32>}]} {
    %c0 = arith.constant 0 : index
    %c0_0 = arith.constant 0 : index
    %c0_1 = arith.constant 0 : index
    %0 = vector.load %arg1[%c0, %c0_0, %c0_1] : memref<1x4x192xf32, #tpu.memory_space<vmem>>, vector<1x4x192xf32>
    %1 = vector.shape_cast %0 : vector<1x4x192xf32> to vector<4x192xf32>
    %2 = arith.truncf %1 : vector<4x192xf32> to vector<4x192xbf16>
    %c0_2 = arith.constant 0 : index
    %c0_3 = arith.constant 0 : index
    %3 = vector.load %arg2[%c0_2, %c0_3] : memref<192x32xbf16, #tpu.memory_space<vmem>>, vector<192x32xbf16>
    %cst = arith.constant dense<0.000000e+00> : vector<4x32xf32>
    %4 = tpu.matmul %2, %3, %cst {dimension_numbers = #tpu.dot_dimension_numbers<[1], [0], [0], [1], [0, 0, 1, 1], [], []>} : vector<4x192xbf16>, vector<192x32xbf16>, vector<4x32xf32> -> vector<4x32xf32>
    %c0_4 = arith.constant 0 : index
    %c0_5 = arith.constant 0 : index
    %5 = vector.load %arg3[%c0_4, %c0_5] : memref<1x32xf32, #tpu.memory_space<vmem>>, vector<1x32xf32>
    %6 = tpu.concatenate %5, %4 in 0 : vector<1x32xf32>, vector<4x32xf32> -> vector<5x32xf32>
    %c0_6 = arith.constant 0 : index
    %c0_7 = arith.constant 0 : index
    %7 = vector.load %arg4[%c0_6, %c0_7] : memref<5x32xf32, #tpu.memory_space<vmem>>, vector<5x32xf32>
    %8 = arith.addf %6, %7 : vector<5x32xf32>
    %c0_8 = arith.constant 0 : index
    %c0_9 = arith.constant 0 : index
    %9 = vector.load %arg5[%c0_8, %c0_9] : memref<1x32xf32, #tpu.memory_space<vmem>>, vector<1x32xf32>
    %c0_10 = arith.constant 0 : index
    %c0_11 = arith.constant 0 : index
    %10 = vector.load %arg6[%c0_10, %c0_11] : memref<1x32xf32, #tpu.memory_space<vmem>>, vector<1x32xf32>
    %cst_12 = arith.constant dense<0.000000e+00> : vector<5xf32>
    %11 = vector.multi_reduction <add>, %8, %cst_12 [1] : vector<5x32xf32> to vector<5xf32>
    %12 = vector.shape_cast %11 : vector<5xf32> to vector<5x1xf32>
    %cst_13 = arith.constant 3.200000e+01 : f32
    %13 = vector.broadcast %cst_13 : f32 to vector<5x1xf32>
    %14 = arith.divf %12, %13 : vector<5x1xf32>
    %15 = vector.broadcast %14 : vector<5x1xf32> to vector<5x32xf32>
    %16 = arith.subf %8, %15 : vector<5x32xf32>
    %17 = arith.mulf %16, %16 : vector<5x32xf32>
    %cst_14 = arith.constant dense<0.000000e+00> : vector<5xf32>
    %18 = vector.multi_reduction <add>, %17, %cst_14 [1] : vector<5x32xf32> to vector<5xf32>
    %19 = vector.shape_cast %18 : vector<5xf32> to vector<5x1xf32>
    %cst_15 = arith.constant 3.200000e+01 : f32
    %20 = vector.broadcast %cst_15 : f32 to vector<5x1xf32>
    %21 = arith.divf %19, %20 : vector<5x1xf32>
    %22 = vector.broadcast %14 : vector<5x1xf32> to vector<5x32xf32>
    %23 = arith.subf %8, %22 : vector<5x32xf32>
    %cst_16 = arith.constant 9.99999974E-6 : f32
    %24 = vector.broadcast %cst_16 : f32 to vector<5x1xf32>
    %25 = arith.addf %21, %24 : vector<5x1xf32>
    %26 = math.rsqrt %25 : vector<5x1xf32>
    %27 = vector.broadcast %26 : vector<5x1xf32> to vector<5x32xf32>
    %28 = arith.mulf %23, %27 : vector<5x32xf32>
    %29 = vector.broadcast %9 : vector<1x32xf32> to vector<5x32xf32>
    %30 = arith.mulf %28, %29 : vector<5x32xf32>
    %31 = vector.broadcast %10 : vector<1x32xf32> to vector<5x32xf32>
    %32 = arith.addf %30, %31 : vector<5x32xf32>
    %c0_17 = arith.constant 0 : index
    %c0_18 = arith.constant 0 : index
    %33 = vector.load %arg7[%c0_17, %c0_18] : memref<1x32xf32, #tpu.memory_space<vmem>>, vector<1x32xf32>
    %c0_19 = arith.constant 0 : index
    %c0_20 = arith.constant 0 : index
    %34 = vector.load %arg8[%c0_19, %c0_20] : memref<1x32xf32, #tpu.memory_space<vmem>>, vector<1x32xf32>
    %cst_21 = arith.constant dense<0.000000e+00> : vector<5xf32>
    %35 = vector.multi_reduction <add>, %32, %cst_21 [1] : vector<5x32xf32> to vector<5xf32>
    %36 = vector.shape_cast %35 : vector<5xf32> to vector<5x1xf32>
    %cst_22 = arith.constant 3.200000e+01 : f32
    %37 = vector.broadcast %cst_22 : f32 to vector<5x1xf32>
    %38 = arith.divf %36, %37 : vector<5x1xf32>
    %39 = vector.broadcast %38 : vector<5x1xf32> to vector<5x32xf32>
    %40 = arith.subf %32, %39 : vector<5x32xf32>
    %41 = arith.mulf %40, %40 : vector<5x32xf32>
    %cst_23 = arith.constant dense<0.000000e+00> : vector<5xf32>
    %42 = vector.multi_reduction <add>, %41, %cst_23 [1] : vector<5x32xf32> to vector<5xf32>
    %43 = vector.shape_cast %42 : vector<5xf32> to vector<5x1xf32>
    %cst_24 = arith.constant 3.200000e+01 : f32
    %44 = vector.broadcast %cst_24 : f32 to vector<5x1xf32>
    %45 = arith.divf %43, %44 : vector<5x1xf32>
    %46 = vector.broadcast %38 : vector<5x1xf32> to vector<5x32xf32>
    %47 = arith.subf %32, %46 : vector<5x32xf32>
    %cst_25 = arith.constant 9.99999974E-6 : f32
    %48 = vector.broadcast %cst_25 : f32 to vector<5x1xf32>
    %49 = arith.addf %45, %48 : vector<5x1xf32>
    %50 = math.rsqrt %49 : vector<5x1xf32>
    %51 = vector.broadcast %50 : vector<5x1xf32> to vector<5x32xf32>
    %52 = arith.mulf %47, %51 : vector<5x32xf32>
    %53 = vector.broadcast %33 : vector<1x32xf32> to vector<5x32xf32>
    %54 = arith.mulf %52, %53 : vector<5x32xf32>
    %55 = vector.broadcast %34 : vector<1x32xf32> to vector<5x32xf32>
    %56 = arith.addf %54, %55 : vector<5x32xf32>
    %57 = arith.truncf %56 : vector<5x32xf32> to vector<5x32xbf16>
    %c0_26 = arith.constant 0 : index
    %c0_27 = arith.constant 0 : index
    %58 = vector.load %arg9[%c0_26, %c0_27] : memref<32x96xbf16, #tpu.memory_space<vmem>>, vector<32x96xbf16>
    %cst_28 = arith.constant dense<0.000000e+00> : vector<5x96xf32>
    %59 = tpu.matmul %57, %58, %cst_28 {dimension_numbers = #tpu.dot_dimension_numbers<[1], [0], [0], [1], [0, 0, 1, 1], [], []>} : vector<5x32xbf16>, vector<32x96xbf16>, vector<5x96xf32> -> vector<5x96xf32>
    %c0_29 = arith.constant 0 : index
    %c0_30 = arith.constant 0 : index
    %60 = vector.load %arg10[%c0_29, %c0_30] : memref<1x96xf32, #tpu.memory_space<vmem>>, vector<1x96xf32>
    %61 = vector.broadcast %60 : vector<1x96xf32> to vector<5x96xf32>
    %62 = arith.addf %59, %61 : vector<5x96xf32>
    %63 = vector.extract_strided_slice %62 {offsets = [0, 0], sizes = [5, 32], strides = [1, 1]} : vector<5x96xf32> to vector<5x32xf32>
    %cst_31 = arith.constant 2.500000e-01 : f32
    %64 = vector.broadcast %cst_31 : f32 to vector<5x32xf32>
    %65 = arith.mulf %63, %64 : vector<5x32xf32>
    %66 = vector.shape_cast %65 : vector<5x32xf32> to vector<5x2x16xf32>
    %67 = vector.extract_strided_slice %62 {offsets = [0, 32], sizes = [5, 32], strides = [1, 1]} : vector<5x96xf32> to vector<5x32xf32>
    %68 = vector.shape_cast %67 : vector<5x32xf32> to vector<5x2x16xf32>
    %69 = vector.extract_strided_slice %62 {offsets = [0, 64], sizes = [5, 32], strides = [1, 1]} : vector<5x96xf32> to vector<5x32xf32>
    %70 = vector.shape_cast %69 : vector<5x32xf32> to vector<5x2x16xf32>
    %71 = arith.truncf %66 : vector<5x2x16xf32> to vector<5x2x16xbf16>
    %72 = arith.truncf %68 : vector<5x2x16xf32> to vector<5x2x16xbf16>
    "tpu.trace_start"() <{level = 10 : i32, message = "qhd,khd->hqk"}> : () -> ()
    %cst_32 = arith.constant dense<0.000000e+00> : vector<2x5x5xf32>
    %73 = tpu.matmul %71, %72, %cst_32 {dimension_numbers = #tpu.dot_dimension_numbers<[2], [2], [0], [0], [0, 1, 0, 0, 1, 0], [1], [1]>} : vector<5x2x16xbf16>, vector<5x2x16xbf16>, vector<2x5x5xf32> -> vector<2x5x5xf32>
    "tpu.trace_stop"() : () -> ()
    %cst_33 = arith.constant dense<0xFF800000> : vector<2x5xf32>
    %74 = vector.multi_reduction <maximumf>, %73, %cst_33 [2] : vector<2x5x5xf32> to vector<2x5xf32>
    %75 = vector.shape_cast %74 : vector<2x5xf32> to vector<2x5x1xf32>
    %76 = vector.broadcast %75 : vector<2x5x1xf32> to vector<2x5x5xf32>
    %77 = arith.subf %73, %76 : vector<2x5x5xf32>
    %78 = math.exp %77 : vector<2x5x5xf32>
    %cst_34 = arith.constant dense<0.000000e+00> : vector<2x5xf32>
    %79 = vector.multi_reduction <add>, %78, %cst_34 [2] : vector<2x5x5xf32> to vector<2x5xf32>
    %80 = vector.shape_cast %79 : vector<2x5xf32> to vector<2x5x1xf32>
    %81 = tpu.reciprocal %80 {approx = true} : vector<2x5x1xf32> -> vector<2x5x1xf32>
    %82 = vector.broadcast %81 : vector<2x5x1xf32> to vector<2x5x5xf32>
    %83 = arith.mulf %78, %82 : vector<2x5x5xf32>
    %84 = arith.truncf %83 : vector<2x5x5xf32> to vector<2x5x5xbf16>
    %85 = arith.truncf %70 : vector<5x2x16xf32> to vector<5x2x16xbf16>
    "tpu.trace_start"() <{level = 10 : i32, message = "hqk,khd->qhd"}> : () -> ()
    %cst_35 = arith.constant dense<0.000000e+00> : vector<2x16x5xf32>
    %86 = tpu.matmul %85, %84, %cst_35 {dimension_numbers = #tpu.dot_dimension_numbers<[0], [2], [2], [1], [0, 1, 0, 2, 1, 1], [1], [0]>} : vector<5x2x16xbf16>, vector<2x5x5xbf16>, vector<2x16x5xf32> -> vector<2x16x5xf32>
    %87 = tpu.transpose %86, [2, 0, 1] : vector<2x16x5xf32> -> vector<5x2x16xf32>
    "tpu.trace_stop"() : () -> ()
    %88 = vector.shape_cast %87 : vector<5x2x16xf32> to vector<5x32xf32>
    %89 = arith.truncf %88 : vector<5x32xf32> to vector<5x32xbf16>
    %c0_36 = arith.constant 0 : index
    %c0_37 = arith.constant 0 : index
    %90 = vector.load %arg11[%c0_36, %c0_37] : memref<32x32xbf16, #tpu.memory_space<vmem>>, vector<32x32xbf16>
    %cst_38 = arith.constant dense<0.000000e+00> : vector<5x32xf32>
    %91 = tpu.matmul %89, %90, %cst_38 {dimension_numbers = #tpu.dot_dimension_numbers<[1], [0], [0], [1], [0, 0, 1, 1], [], []>} : vector<5x32xbf16>, vector<32x32xbf16>, vector<5x32xf32> -> vector<5x32xf32>
    %c0_39 = arith.constant 0 : index
    %c0_40 = arith.constant 0 : index
    %92 = vector.load %arg12[%c0_39, %c0_40] : memref<1x32xf32, #tpu.memory_space<vmem>>, vector<1x32xf32>
    %93 = vector.broadcast %92 : vector<1x32xf32> to vector<5x32xf32>
    %94 = arith.addf %91, %93 : vector<5x32xf32>
    %95 = arith.addf %32, %94 : vector<5x32xf32>
    %c0_41 = arith.constant 0 : index
    %c0_42 = arith.constant 0 : index
    %96 = vector.load %arg13[%c0_41, %c0_42] : memref<1x32xf32, #tpu.memory_space<vmem>>, vector<1x32xf32>
    %c0_43 = arith.constant 0 : index
    %c0_44 = arith.constant 0 : index
    %97 = vector.load %arg14[%c0_43, %c0_44] : memref<1x32xf32, #tpu.memory_space<vmem>>, vector<1x32xf32>
    %cst_45 = arith.constant dense<0.000000e+00> : vector<5xf32>
    %98 = vector.multi_reduction <add>, %95, %cst_45 [1] : vector<5x32xf32> to vector<5xf32>
    %99 = vector.shape_cast %98 : vector<5xf32> to vector<5x1xf32>
    %cst_46 = arith.constant 3.200000e+01 : f32
    %100 = vector.broadcast %cst_46 : f32 to vector<5x1xf32>
    %101 = arith.divf %99, %100 : vector<5x1xf32>
    %102 = vector.broadcast %101 : vector<5x1xf32> to vector<5x32xf32>
    %103 = arith.subf %95, %102 : vector<5x32xf32>
    %104 = arith.mulf %103, %103 : vector<5x32xf32>
    %cst_47 = arith.constant dense<0.000000e+00> : vector<5xf32>
    %105 = vector.multi_reduction <add>, %104, %cst_47 [1] : vector<5x32xf32> to vector<5xf32>
    %106 = vector.shape_cast %105 : vector<5xf32> to vector<5x1xf32>
    %cst_48 = arith.constant 3.200000e+01 : f32
    %107 = vector.broadcast %cst_48 : f32 to vector<5x1xf32>
    %108 = arith.divf %106, %107 : vector<5x1xf32>
    %109 = vector.broadcast %101 : vector<5x1xf32> to vector<5x32xf32>
    %110 = arith.subf %95, %109 : vector<5x32xf32>
    %cst_49 = arith.constant 9.99999974E-6 : f32
    %111 = vector.broadcast %cst_49 : f32 to vector<5x1xf32>
    %112 = arith.addf %108, %111 : vector<5x1xf32>
    %113 = math.rsqrt %112 : vector<5x1xf32>
    %114 = vector.broadcast %113 : vector<5x1xf32> to vector<5x32xf32>
    %115 = arith.mulf %110, %114 : vector<5x32xf32>
    %116 = vector.broadcast %96 : vector<1x32xf32> to vector<5x32xf32>
    %117 = arith.mulf %115, %116 : vector<5x32xf32>
    %118 = vector.broadcast %97 : vector<1x32xf32> to vector<5x32xf32>
    %119 = arith.addf %117, %118 : vector<5x32xf32>
    %120 = arith.truncf %119 : vector<5x32xf32> to vector<5x32xbf16>
    %c0_50 = arith.constant 0 : index
    %c0_51 = arith.constant 0 : index
    %121 = vector.load %arg15[%c0_50, %c0_51] : memref<32x64xbf16, #tpu.memory_space<vmem>>, vector<32x64xbf16>
    %cst_52 = arith.constant dense<0.000000e+00> : vector<5x64xf32>
    %122 = tpu.matmul %120, %121, %cst_52 {dimension_numbers = #tpu.dot_dimension_numbers<[1], [0], [0], [1], [0, 0, 1, 1], [], []>} : vector<5x32xbf16>, vector<32x64xbf16>, vector<5x64xf32> -> vector<5x64xf32>
    %c0_53 = arith.constant 0 : index
    %c0_54 = arith.constant 0 : index
    %123 = vector.load %arg16[%c0_53, %c0_54] : memref<1x64xf32, #tpu.memory_space<vmem>>, vector<1x64xf32>
    %124 = vector.broadcast %123 : vector<1x64xf32> to vector<5x64xf32>
    %125 = arith.addf %122, %124 : vector<5x64xf32>
    %cst_55 = arith.constant 1.702000e+00 : f32
    %126 = vector.broadcast %cst_55 : f32 to vector<5x64xf32>
    %127 = arith.mulf %126, %125 : vector<5x64xf32>
    %128 = arith.negf %127 : vector<5x64xf32>
    %129 = math.exp %128 : vector<5x64xf32>
    %cst_56 = arith.constant 1.000000e+00 : f32
    %130 = vector.broadcast %cst_56 : f32 to vector<5x64xf32>
    %131 = arith.addf %130, %129 : vector<5x64xf32>
    %132 = arith.divf %130, %131 : vector<5x64xf32>
    %133 = arith.mulf %125, %132 : vector<5x64xf32>
    %134 = arith.truncf %133 : vector<5x64xf32> to vector<5x64xbf16>
    %c0_57 = arith.constant 0 : index
    %c0_58 = arith.constant 0 : index
    %135 = vector.load %arg17[%c0_57, %c0_58] : memref<64x32xbf16, #tpu.memory_space<vmem>>, vector<64x32xbf16>
    %cst_59 = arith.constant dense<0.000000e+00> : vector<5x32xf32>
    %136 = tpu.matmul %134, %135, %cst_59 {dimension_numbers = #tpu.dot_dimension_numbers<[1], [0], [0], [1], [0, 0, 1, 1], [], []>} : vector<5x64xbf16>, vector<64x32xbf16>, vector<5x32xf32> -> vector<5x32xf32>
    %c0_60 = arith.constant 0 : index
    %c0_61 = arith.constant 0 : index
    %137 = vector.load %arg18[%c0_60, %c0_61] : memref<1x32xf32, #tpu.memory_space<vmem>>, vector<1x32xf32>
    %138 = vector.broadcast %137 : vector<1x32xf32> to vector<5x32xf32>
    %139 = arith.addf %136, %138 : vector<5x32xf32>
    %140 = arith.addf %95, %139 : vector<5x32xf32>
    %141 = arith.truncf %140 : vector<5x32xf32> to vector<5x32xbf16>
    %c0_62 = arith.constant 0 : index
    %c0_63 = arith.constant 0 : index
    %c0_64 = arith.constant 0 : index
    %142 = vector.load %arg19[%c0_62, %c0_63, %c0_64] : memref<1x5x32xbf16, #tpu.memory_space<vmem>>, vector<1x5x32xbf16>
    %143 = vector.shape_cast %142 : vector<1x5x32xbf16> to vector<5x32xbf16>
    %144 = vector.shape_cast %141 : vector<5x32xbf16> to vector<1x5x32xbf16>
    tpu.vector_store %arg19[%c0_62, %c0_63, %c0_64], %144 {strides = array<i32>} : memref<1x5x32xbf16, #tpu.memory_space<vmem>>, vector<1x5x32xbf16>,
    return
  }
  func.func @transform_0(%arg0: i32) -> (i32, i32, i32) {
    %c0_i32 = arith.constant 0 : i32
    %c0_i32_0 = arith.constant 0 : i32
    %c0_i32_1 = arith.constant 0 : i32
    return %arg0, %c0_i32, %c0_i32_0 : i32, i32, i32
  }
  func.func @transform_1(%arg0: i32) -> (i32, i32) {
    %c0_i32 = arith.constant 0 : i32
    %c0_i32_0 = arith.constant 0 : i32
    %c0_i32_1 = arith.constant 0 : i32
    return %c0_i32, %c0_i32_0 : i32, i32
  }
  func.func @transform_2(%arg0: i32) -> (i32, i32) {
    %c0_i32 = arith.constant 0 : i32
    %c0_i32_0 = arith.constant 0 : i32
    %c0_i32_1 = arith.constant 0 : i32
    return %c0_i32, %c0_i32_0 : i32, i32
  }
  func.func @transform_3(%arg0: i32) -> (i32, i32) {
    %c0_i32 = arith.constant 0 : i32
    %c0_i32_0 = arith.constant 0 : i32
    %c0_i32_1 = arith.constant 0 : i32
    return %c0_i32, %c0_i32_0 : i32, i32
  }
  func.func @transform_4(%arg0: i32) -> (i32, i32) {
    %c0_i32 = arith.constant 0 : i32
    %c0_i32_0 = arith.constant 0 : i32
    %c0_i32_1 = arith.constant 0 : i32
    return %c0_i32, %c0_i32_0 : i32, i32
  }
  func.func @transform_5(%arg0: i32) -> (i32, i32) {
    %c0_i32 = arith.constant 0 : i32
    %c0_i32_0 = arith.constant 0 : i32
    %c0_i32_1 = arith.constant 0 : i32
    return %c0_i32, %c0_i32_0 : i32, i32
  }
  func.func @transform_6(%arg0: i32) -> (i32, i32) {
    %c0_i32 = arith.constant 0 : i32
    %c0_i32_0 = arith.constant 0 : i32
    %c0_i32_1 = arith.constant 0 : i32
    return %c0_i32, %c0_i32_0 : i32, i32
  }
  func.func @transform_7(%arg0: i32) -> (i32, i32) {
    %c0_i32 = arith.constant 0 : i32
    %c0_i32_0 = arith.constant 0 : i32
    %c0_i32_1 = arith.constant 0 : i32
    return %c0_i32, %c0_i32_0 : i32, i32
  }
  func.func @transform_8(%arg0: i32) -> (i32, i32) {
    %c0_i32 = arith.constant 0 : i32
    %c0_i32_0 = arith.constant 0 : i32
    %c0_i32_1 = arith.constant 0 : i32
    return %c0_i32, %c0_i32_0 : i32, i32
  }
  func.func @transform_9(%arg0: i32) -> (i32, i32) {
    %c0_i32 = arith.constant 0 : i32
    %c0_i32_0 = arith.constant 0 : i32
    %c0_i32_1 = arith.constant 0 : i32
    return %c0_i32, %c0_i32_0 : i32, i32
  }
  func.func @transform_10(%arg0: i32) -> (i32, i32) {
    %c0_i32 = arith.constant 0 : i32
    %c0_i32_0 = arith.constant 0 : i32
    %c0_i32_1 = arith.constant 0 : i32
    return %c0_i32, %c0_i32_0 : i32, i32
  }
  func.func @transform_11(%arg0: i32) -> (i32, i32) {
    %c0_i32 = arith.constant 0 : i32
    %c0_i32_0 = arith.constant 0 : i32
    %c0_i32_1 = arith.constant 0 : i32
    return %c0_i32, %c0_i32_0 : i32, i32
  }
  func.func @transform_12(%arg0: i32) -> (i32, i32) {
    %c0_i32 = arith.constant 0 : i32
    %c0_i32_0 = arith.constant 0 : i32
    %c0_i32_1 = arith.constant 0 : i32
    return %c0_i32, %c0_i32_0 : i32, i32
  }
  func.func @transform_13(%arg0: i32) -> (i32, i32) {
    %c0_i32 = arith.constant 0 : i32
    %c0_i32_0 = arith.constant 0 : i32
    %c0_i32_1 = arith.constant 0 : i32
    return %c0_i32, %c0_i32_0 : i32, i32
  }
  func.func @transform_14(%arg0: i32) -> (i32, i32) {
    %c0_i32 = arith.constant 0 : i32
    %c0_i32_0 = arith.constant 0 : i32
    %c0_i32_1 = arith.constant 0 : i32
    return %c0_i32, %c0_i32_0 : i32, i32
  }
  func.func @transform_15(%arg0: i32) -> (i32, i32) {
    %c0_i32 = arith.constant 0 : i32
    %c0_i32_0 = arith.constant 0 : i32
    %c0_i32_1 = arith.constant 0 : i32
    return %c0_i32, %c0_i32_0 : i32, i32
  }
  func.func @transform_16(%arg0: i32) -> (i32, i32) {
    %c0_i32 = arith.constant 0 : i32
    %c0_i32_0 = arith.constant 0 : i32
    %c0_i32_1 = arith.constant 0 : i32
    return %c0_i32, %c0_i32_0 : i32, i32
  }
  func.func @transform_17(%arg0: i32) -> (i32, i32) {
    %c0_i32 = arith.constant 0 : i32
    %c0_i32_0 = arith.constant 0 : i32
    %c0_i32_1 = arith.constant 0 : i32
    return %c0_i32, %c0_i32_0 : i32, i32
  }
  func.func @transform_18(%arg0: i32) -> (i32, i32, i32) {
    %c0_i32 = arith.constant 0 : i32
    %c0_i32_0 = arith.constant 0 : i32
    %c0_i32_1 = arith.constant 0 : i32
    return %arg0, %c0_i32, %c0_i32_0 : i32, i32, i32
  }
}

module attributes {stable_mosaic.version = 11 : i64} {
  func.func @_encoder_layer_kernel(%arg0: i32, %arg1: memref<1x8x32xf32, #tpu.memory_space<vmem>>, %arg2: memref<1x1x8xf32, #tpu.memory_space<vmem>>, %arg3: memref<1x32xf32, #tpu.memory_space<vmem>>, %arg4: memref<1x32xf32, #tpu.memory_space<vmem>>, %arg5: memref<1x32xf32, #tpu.memory_space<vmem>>, %arg6: memref<1x32xf32, #tpu.memory_space<vmem>>, %arg7: memref<32x96xbf16, #tpu.memory_space<vmem>>, %arg8: memref<1x96xf32, #tpu.memory_space<vmem>>, %arg9: memref<32x32xbf16, #tpu.memory_space<vmem>>, %arg10: memref<1x32xf32, #tpu.memory_space<vmem>>, %arg11: memref<1x32xf32, #tpu.memory_space<vmem>>, %arg12: memref<1x32xf32, #tpu.memory_space<vmem>>, %arg13: memref<32x64xbf16, #tpu.memory_space<vmem>>, %arg14: memref<1x64xf32, #tpu.memory_space<vmem>>, %arg15: memref<64x32xbf16, #tpu.memory_space<vmem>>, %arg16: memref<1x32xf32, #tpu.memory_space<vmem>>, %arg17: memref<1x8x32xbf16, #tpu.memory_space<vmem>>) attributes {dimension_semantics = [#tpu.dimension_semantics<parallel>], iteration_bounds = array<i64: 2>, scalar_prefetch = 0 : i64, scratch_operands = 0 : i64, tpu.core_type = #tpu.core_type<tc>, window_params = [{transform_indices = @transform_0, window_bounds = array<i64: 1, 8, 32>}, {transform_indices = @transform_1, window_bounds = array<i64: 1, 1, 8>}, {pipeline_mode = #tpu.pipeline_mode<synchronous>, transform_indices = @transform_2, window_bounds = array<i64: 1, 32>}, {pipeline_mode = #tpu.pipeline_mode<synchronous>, transform_indices = @transform_3, window_bounds = array<i64: 1, 32>}, {pipeline_mode = #tpu.pipeline_mode<synchronous>, transform_indices = @transform_4, window_bounds = array<i64: 1, 32>}, {pipeline_mode = #tpu.pipeline_mode<synchronous>, transform_indices = @transform_5, window_bounds = array<i64: 1, 32>}, {pipeline_mode = #tpu.pipeline_mode<synchronous>, transform_indices = @transform_6, window_bounds = array<i64: 32, 96>}, {pipeline_mode = #tpu.pipeline_mode<synchronous>, transform_indices = @transform_7, window_bounds = array<i64: 1, 96>}, {pipeline_mode = #tpu.pipeline_mode<synchronous>, transform_indices = @transform_8, window_bounds = array<i64: 32, 32>}, {pipeline_mode = #tpu.pipeline_mode<synchronous>, transform_indices = @transform_9, window_bounds = array<i64: 1, 32>}, {pipeline_mode = #tpu.pipeline_mode<synchronous>, transform_indices = @transform_10, window_bounds = array<i64: 1, 32>}, {pipeline_mode = #tpu.pipeline_mode<synchronous>, transform_indices = @transform_11, window_bounds = array<i64: 1, 32>}, {pipeline_mode = #tpu.pipeline_mode<synchronous>, transform_indices = @transform_12, window_bounds = array<i64: 32, 64>}, {pipeline_mode = #tpu.pipeline_mode<synchronous>, transform_indices = @transform_13, window_bounds = array<i64: 1, 64>}, {pipeline_mode = #tpu.pipeline_mode<synchronous>, transform_indices = @transform_14, window_bounds = array<i64: 64, 32>}, {pipeline_mode = #tpu.pipeline_mode<synchronous>, transform_indices = @transform_15, window_bounds = array<i64: 1, 32>}, {transform_indices = @transform_16, window_bounds = array<i64: 1, 8, 32>}]} {
    %c0 = arith.constant 0 : index
    %c0_0 = arith.constant 0 : index
    %c0_1 = arith.constant 0 : index
    %0 = vector.load %arg1[%c0, %c0_0, %c0_1] : memref<1x8x32xf32, #tpu.memory_space<vmem>>, vector<1x8x32xf32>
    %1 = vector.shape_cast %0 : vector<1x8x32xf32> to vector<8x32xf32>
    %c0_2 = arith.constant 0 : index
    %c0_3 = arith.constant 0 : index
    %2 = vector.load %arg3[%c0_2, %c0_3] : memref<1x32xf32, #tpu.memory_space<vmem>>, vector<1x32xf32>
    %c0_4 = arith.constant 0 : index
    %c0_5 = arith.constant 0 : index
    %3 = vector.load %arg4[%c0_4, %c0_5] : memref<1x32xf32, #tpu.memory_space<vmem>>, vector<1x32xf32>
    %cst = arith.constant dense<0.000000e+00> : vector<8xf32>
    %4 = vector.multi_reduction <add>, %1, %cst [1] : vector<8x32xf32> to vector<8xf32>
    %5 = vector.shape_cast %4 : vector<8xf32> to vector<8x1xf32>
    %cst_6 = arith.constant 3.200000e+01 : f32
    %6 = vector.broadcast %cst_6 : f32 to vector<8x1xf32>
    %7 = arith.divf %5, %6 : vector<8x1xf32>
    %8 = vector.broadcast %7 : vector<8x1xf32> to vector<8x32xf32>
    %9 = arith.subf %1, %8 : vector<8x32xf32>
    %10 = arith.mulf %9, %9 : vector<8x32xf32>
    %cst_7 = arith.constant dense<0.000000e+00> : vector<8xf32>
    %11 = vector.multi_reduction <add>, %10, %cst_7 [1] : vector<8x32xf32> to vector<8xf32>
    %12 = vector.shape_cast %11 : vector<8xf32> to vector<8x1xf32>
    %cst_8 = arith.constant 3.200000e+01 : f32
    %13 = vector.broadcast %cst_8 : f32 to vector<8x1xf32>
    %14 = arith.divf %12, %13 : vector<8x1xf32>
    %15 = vector.broadcast %7 : vector<8x1xf32> to vector<8x32xf32>
    %16 = arith.subf %1, %15 : vector<8x32xf32>
    %cst_9 = arith.constant 9.99999996E-13 : f32
    %17 = vector.broadcast %cst_9 : f32 to vector<8x1xf32>
    %18 = arith.addf %14, %17 : vector<8x1xf32>
    %19 = math.rsqrt %18 : vector<8x1xf32>
    %20 = vector.broadcast %19 : vector<8x1xf32> to vector<8x32xf32>
    %21 = arith.mulf %16, %20 : vector<8x32xf32>
    %22 = vector.broadcast %2 : vector<1x32xf32> to vector<8x32xf32>
    %23 = arith.mulf %21, %22 : vector<8x32xf32>
    %24 = vector.broadcast %3 : vector<1x32xf32> to vector<8x32xf32>
    %25 = arith.addf %23, %24 : vector<8x32xf32>
    %26 = arith.truncf %25 : vector<8x32xf32> to vector<8x32xbf16>
    %c0_10 = arith.constant 0 : index
    %c0_11 = arith.constant 0 : index
    %27 = vector.load %arg7[%c0_10, %c0_11] : memref<32x96xbf16, #tpu.memory_space<vmem>>, vector<32x96xbf16>
    %cst_12 = arith.constant dense<0.000000e+00> : vector<8x96xf32>
    %28 = tpu.matmul %26, %27, %cst_12 {dimension_numbers = #tpu.dot_dimension_numbers<[1], [0], [0], [1], [0, 0, 1, 1], [], []>} : vector<8x32xbf16>, vector<32x96xbf16>, vector<8x96xf32> -> vector<8x96xf32>
    %c0_13 = arith.constant 0 : index
    %c0_14 = arith.constant 0 : index
    %29 = vector.load %arg8[%c0_13, %c0_14] : memref<1x96xf32, #tpu.memory_space<vmem>>, vector<1x96xf32>
    %30 = vector.broadcast %29 : vector<1x96xf32> to vector<8x96xf32>
    %31 = arith.addf %28, %30 : vector<8x96xf32>
    %32 = vector.extract_strided_slice %31 {offsets = [0, 0], sizes = [8, 32], strides = [1, 1]} : vector<8x96xf32> to vector<8x32xf32>
    %cst_15 = arith.constant 2.500000e-01 : f32
    %33 = vector.broadcast %cst_15 : f32 to vector<8x32xf32>
    %34 = arith.mulf %32, %33 : vector<8x32xf32>
    %35 = vector.shape_cast %34 : vector<8x32xf32> to vector<8x2x16xf32>
    %36 = vector.extract_strided_slice %31 {offsets = [0, 32], sizes = [8, 32], strides = [1, 1]} : vector<8x96xf32> to vector<8x32xf32>
    %37 = vector.shape_cast %36 : vector<8x32xf32> to vector<8x2x16xf32>
    %38 = vector.extract_strided_slice %31 {offsets = [0, 64], sizes = [8, 32], strides = [1, 1]} : vector<8x96xf32> to vector<8x32xf32>
    %39 = vector.shape_cast %38 : vector<8x32xf32> to vector<8x2x16xf32>
    %40 = arith.truncf %35 : vector<8x2x16xf32> to vector<8x2x16xbf16>
    %41 = arith.truncf %37 : vector<8x2x16xf32> to vector<8x2x16xbf16>
    "tpu.trace_start"() <{level = 10 : i32, message = "qhd,khd->hqk"}> : () -> ()
    %cst_16 = arith.constant dense<0.000000e+00> : vector<2x8x8xf32>
    %42 = tpu.matmul %40, %41, %cst_16 {dimension_numbers = #tpu.dot_dimension_numbers<[2], [2], [0], [0], [0, 1, 0, 0, 1, 0], [1], [1]>} : vector<8x2x16xbf16>, vector<8x2x16xbf16>, vector<2x8x8xf32> -> vector<2x8x8xf32>
    "tpu.trace_stop"() : () -> ()
    %c0_17 = arith.constant 0 : index
    %c0_18 = arith.constant 0 : index
    %c0_19 = arith.constant 0 : index
    %43 = vector.load %arg2[%c0_17, %c0_18, %c0_19] : memref<1x1x8xf32, #tpu.memory_space<vmem>>, vector<1x1x8xf32>
    %44 = vector.shape_cast %43 : vector<1x1x8xf32> to vector<1x8xf32>
    %cst_20 = arith.constant 1.000000e+00 : f32
    %45 = vector.broadcast %cst_20 : f32 to vector<1x8xf32>
    %46 = arith.subf %45, %44 : vector<1x8xf32>
    %cst_21 = arith.constant -1.000000e+09 : f32
    %47 = vector.broadcast %cst_21 : f32 to vector<1x8xf32>
    %48 = arith.mulf %46, %47 : vector<1x8xf32>
    %49 = vector.shape_cast %48 : vector<1x8xf32> to vector<1x1x8xf32>
    %50 = vector.broadcast %49 : vector<1x1x8xf32> to vector<2x8x8xf32>
    %51 = arith.addf %42, %50 : vector<2x8x8xf32>
    %cst_22 = arith.constant dense<0xFF800000> : vector<2x8xf32>
    %52 = vector.multi_reduction <maximumf>, %51, %cst_22 [2] : vector<2x8x8xf32> to vector<2x8xf32>
    %53 = vector.shape_cast %52 : vector<2x8xf32> to vector<2x8x1xf32>
    %54 = vector.broadcast %53 : vector<2x8x1xf32> to vector<2x8x8xf32>
    %55 = arith.subf %51, %54 : vector<2x8x8xf32>
    %56 = math.exp %55 : vector<2x8x8xf32>
    %cst_23 = arith.constant dense<0.000000e+00> : vector<2x8xf32>
    %57 = vector.multi_reduction <add>, %56, %cst_23 [2] : vector<2x8x8xf32> to vector<2x8xf32>
    %58 = vector.shape_cast %57 : vector<2x8xf32> to vector<2x8x1xf32>
    %59 = tpu.reciprocal %58 {approx = true} : vector<2x8x1xf32> -> vector<2x8x1xf32>
    %60 = vector.broadcast %59 : vector<2x8x1xf32> to vector<2x8x8xf32>
    %61 = arith.mulf %56, %60 : vector<2x8x8xf32>
    %62 = arith.truncf %61 : vector<2x8x8xf32> to vector<2x8x8xbf16>
    %63 = arith.truncf %39 : vector<8x2x16xf32> to vector<8x2x16xbf16>
    "tpu.trace_start"() <{level = 10 : i32, message = "hqk,khd->qhd"}> : () -> ()
    %cst_24 = arith.constant dense<0.000000e+00> : vector<2x16x8xf32>
    %64 = tpu.matmul %63, %62, %cst_24 {dimension_numbers = #tpu.dot_dimension_numbers<[0], [2], [2], [1], [0, 1, 0, 2, 1, 1], [1], [0]>} : vector<8x2x16xbf16>, vector<2x8x8xbf16>, vector<2x16x8xf32> -> vector<2x16x8xf32>
    %65 = tpu.transpose %64, [2, 0, 1] : vector<2x16x8xf32> -> vector<8x2x16xf32>
    "tpu.trace_stop"() : () -> ()
    %66 = vector.shape_cast %65 : vector<8x2x16xf32> to vector<8x32xf32>
    %67 = arith.truncf %66 : vector<8x32xf32> to vector<8x32xbf16>
    %c0_25 = arith.constant 0 : index
    %c0_26 = arith.constant 0 : index
    %68 = vector.load %arg9[%c0_25, %c0_26] : memref<32x32xbf16, #tpu.memory_space<vmem>>, vector<32x32xbf16>
    %cst_27 = arith.constant dense<0.000000e+00> : vector<8x32xf32>
    %69 = tpu.matmul %67, %68, %cst_27 {dimension_numbers = #tpu.dot_dimension_numbers<[1], [0], [0], [1], [0, 0, 1, 1], [], []>} : vector<8x32xbf16>, vector<32x32xbf16>, vector<8x32xf32> -> vector<8x32xf32>
    %c0_28 = arith.constant 0 : index
    %c0_29 = arith.constant 0 : index
    %70 = vector.load %arg10[%c0_28, %c0_29] : memref<1x32xf32, #tpu.memory_space<vmem>>, vector<1x32xf32>
    %71 = vector.broadcast %70 : vector<1x32xf32> to vector<8x32xf32>
    %72 = arith.addf %69, %71 : vector<8x32xf32>
    %73 = arith.addf %25, %72 : vector<8x32xf32>
    %c0_30 = arith.constant 0 : index
    %c0_31 = arith.constant 0 : index
    %74 = vector.load %arg5[%c0_30, %c0_31] : memref<1x32xf32, #tpu.memory_space<vmem>>, vector<1x32xf32>
    %c0_32 = arith.constant 0 : index
    %c0_33 = arith.constant 0 : index
    %75 = vector.load %arg6[%c0_32, %c0_33] : memref<1x32xf32, #tpu.memory_space<vmem>>, vector<1x32xf32>
    %cst_34 = arith.constant dense<0.000000e+00> : vector<8xf32>
    %76 = vector.multi_reduction <add>, %73, %cst_34 [1] : vector<8x32xf32> to vector<8xf32>
    %77 = vector.shape_cast %76 : vector<8xf32> to vector<8x1xf32>
    %cst_35 = arith.constant 3.200000e+01 : f32
    %78 = vector.broadcast %cst_35 : f32 to vector<8x1xf32>
    %79 = arith.divf %77, %78 : vector<8x1xf32>
    %80 = vector.broadcast %79 : vector<8x1xf32> to vector<8x32xf32>
    %81 = arith.subf %73, %80 : vector<8x32xf32>
    %82 = arith.mulf %81, %81 : vector<8x32xf32>
    %cst_36 = arith.constant dense<0.000000e+00> : vector<8xf32>
    %83 = vector.multi_reduction <add>, %82, %cst_36 [1] : vector<8x32xf32> to vector<8xf32>
    %84 = vector.shape_cast %83 : vector<8xf32> to vector<8x1xf32>
    %cst_37 = arith.constant 3.200000e+01 : f32
    %85 = vector.broadcast %cst_37 : f32 to vector<8x1xf32>
    %86 = arith.divf %84, %85 : vector<8x1xf32>
    %87 = vector.broadcast %79 : vector<8x1xf32> to vector<8x32xf32>
    %88 = arith.subf %73, %87 : vector<8x32xf32>
    %cst_38 = arith.constant 9.99999996E-13 : f32
    %89 = vector.broadcast %cst_38 : f32 to vector<8x1xf32>
    %90 = arith.addf %86, %89 : vector<8x1xf32>
    %91 = math.rsqrt %90 : vector<8x1xf32>
    %92 = vector.broadcast %91 : vector<8x1xf32> to vector<8x32xf32>
    %93 = arith.mulf %88, %92 : vector<8x32xf32>
    %94 = vector.broadcast %74 : vector<1x32xf32> to vector<8x32xf32>
    %95 = arith.mulf %93, %94 : vector<8x32xf32>
    %96 = vector.broadcast %75 : vector<1x32xf32> to vector<8x32xf32>
    %97 = arith.addf %95, %96 : vector<8x32xf32>
    %98 = arith.truncf %97 : vector<8x32xf32> to vector<8x32xbf16>
    %c0_39 = arith.constant 0 : index
    %c0_40 = arith.constant 0 : index
    %99 = vector.load %arg13[%c0_39, %c0_40] : memref<32x64xbf16, #tpu.memory_space<vmem>>, vector<32x64xbf16>
    %cst_41 = arith.constant dense<0.000000e+00> : vector<8x64xf32>
    %100 = tpu.matmul %98, %99, %cst_41 {dimension_numbers = #tpu.dot_dimension_numbers<[1], [0], [0], [1], [0, 0, 1, 1], [], []>} : vector<8x32xbf16>, vector<32x64xbf16>, vector<8x64xf32> -> vector<8x64xf32>
    %c0_42 = arith.constant 0 : index
    %c0_43 = arith.constant 0 : index
    %101 = vector.load %arg14[%c0_42, %c0_43] : memref<1x64xf32, #tpu.memory_space<vmem>>, vector<1x64xf32>
    %102 = vector.broadcast %101 : vector<1x64xf32> to vector<8x64xf32>
    %103 = arith.addf %100, %102 : vector<8x64xf32>
    %104 = arith.mulf %103, %103 : vector<8x64xf32>
    %105 = arith.mulf %103, %104 : vector<8x64xf32>
    %cst_44 = arith.constant 4.471500e-02 : f32
    %106 = vector.broadcast %cst_44 : f32 to vector<8x64xf32>
    %107 = arith.mulf %106, %105 : vector<8x64xf32>
    %108 = arith.addf %103, %107 : vector<8x64xf32>
    %cst_45 = arith.constant 0.797884583 : f32
    %109 = vector.broadcast %cst_45 : f32 to vector<8x64xf32>
    %110 = arith.mulf %109, %108 : vector<8x64xf32>
    %111 = math.tanh %110 : vector<8x64xf32>
    %cst_46 = arith.constant 1.000000e+00 : f32
    %112 = vector.broadcast %cst_46 : f32 to vector<8x64xf32>
    %113 = arith.addf %112, %111 : vector<8x64xf32>
    %cst_47 = arith.constant 5.000000e-01 : f32
    %114 = vector.broadcast %cst_47 : f32 to vector<8x64xf32>
    %115 = arith.mulf %114, %113 : vector<8x64xf32>
    %116 = arith.mulf %103, %115 : vector<8x64xf32>
    %117 = arith.truncf %116 : vector<8x64xf32> to vector<8x64xbf16>
    %c0_48 = arith.constant 0 : index
    %c0_49 = arith.constant 0 : index
    %118 = vector.load %arg15[%c0_48, %c0_49] : memref<64x32xbf16, #tpu.memory_space<vmem>>, vector<64x32xbf16>
    %cst_50 = arith.constant dense<0.000000e+00> : vector<8x32xf32>
    %119 = tpu.matmul %117, %118, %cst_50 {dimension_numbers = #tpu.dot_dimension_numbers<[1], [0], [0], [1], [0, 0, 1, 1], [], []>} : vector<8x64xbf16>, vector<64x32xbf16>, vector<8x32xf32> -> vector<8x32xf32>
    %c0_51 = arith.constant 0 : index
    %c0_52 = arith.constant 0 : index
    %120 = vector.load %arg16[%c0_51, %c0_52] : memref<1x32xf32, #tpu.memory_space<vmem>>, vector<1x32xf32>
    %121 = vector.broadcast %120 : vector<1x32xf32> to vector<8x32xf32>
    %122 = arith.addf %119, %121 : vector<8x32xf32>
    %123 = arith.addf %97, %122 : vector<8x32xf32>
    %c0_53 = arith.constant 0 : index
    %c0_54 = arith.constant 0 : index
    %124 = vector.load %arg11[%c0_53, %c0_54] : memref<1x32xf32, #tpu.memory_space<vmem>>, vector<1x32xf32>
    %c0_55 = arith.constant 0 : index
    %c0_56 = arith.constant 0 : index
    %125 = vector.load %arg12[%c0_55, %c0_56] : memref<1x32xf32, #tpu.memory_space<vmem>>, vector<1x32xf32>
    %cst_57 = arith.constant dense<0.000000e+00> : vector<8xf32>
    %126 = vector.multi_reduction <add>, %123, %cst_57 [1] : vector<8x32xf32> to vector<8xf32>
    %127 = vector.shape_cast %126 : vector<8xf32> to vector<8x1xf32>
    %cst_58 = arith.constant 3.200000e+01 : f32
    %128 = vector.broadcast %cst_58 : f32 to vector<8x1xf32>
    %129 = arith.divf %127, %128 : vector<8x1xf32>
    %130 = vector.broadcast %129 : vector<8x1xf32> to vector<8x32xf32>
    %131 = arith.subf %123, %130 : vector<8x32xf32>
    %132 = arith.mulf %131, %131 : vector<8x32xf32>
    %cst_59 = arith.constant dense<0.000000e+00> : vector<8xf32>
    %133 = vector.multi_reduction <add>, %132, %cst_59 [1] : vector<8x32xf32> to vector<8xf32>
    %134 = vector.shape_cast %133 : vector<8xf32> to vector<8x1xf32>
    %cst_60 = arith.constant 3.200000e+01 : f32
    %135 = vector.broadcast %cst_60 : f32 to vector<8x1xf32>
    %136 = arith.divf %134, %135 : vector<8x1xf32>
    %137 = vector.broadcast %129 : vector<8x1xf32> to vector<8x32xf32>
    %138 = arith.subf %123, %137 : vector<8x32xf32>
    %cst_61 = arith.constant 9.99999996E-13 : f32
    %139 = vector.broadcast %cst_61 : f32 to vector<8x1xf32>
    %140 = arith.addf %136, %139 : vector<8x1xf32>
    %141 = math.rsqrt %140 : vector<8x1xf32>
    %142 = vector.broadcast %141 : vector<8x1xf32> to vector<8x32xf32>
    %143 = arith.mulf %138, %142 : vector<8x32xf32>
    %144 = vector.broadcast %124 : vector<1x32xf32> to vector<8x32xf32>
    %145 = arith.mulf %143, %144 : vector<8x32xf32>
    %146 = vector.broadcast %125 : vector<1x32xf32> to vector<8x32xf32>
    %147 = arith.addf %145, %146 : vector<8x32xf32>
    %148 = arith.truncf %147 : vector<8x32xf32> to vector<8x32xbf16>
    %c0_62 = arith.constant 0 : index
    %c0_63 = arith.constant 0 : index
    %c0_64 = arith.constant 0 : index
    %149 = vector.load %arg17[%c0_62, %c0_63, %c0_64] : memref<1x8x32xbf16, #tpu.memory_space<vmem>>, vector<1x8x32xbf16>
    %150 = vector.shape_cast %149 : vector<1x8x32xbf16> to vector<8x32xbf16>
    %151 = vector.shape_cast %148 : vector<8x32xbf16> to vector<1x8x32xbf16>
    tpu.vector_store %arg17[%c0_62, %c0_63, %c0_64], %151 {strides = array<i32>} : memref<1x8x32xbf16, #tpu.memory_space<vmem>>, vector<1x8x32xbf16>,
    return
  }
  func.func @transform_0(%arg0: i32) -> (i32, i32, i32) {
    %c0_i32 = arith.constant 0 : i32
    %c0_i32_0 = arith.constant 0 : i32
    %c0_i32_1 = arith.constant 0 : i32
    return %arg0, %c0_i32, %c0_i32_0 : i32, i32, i32
  }
  func.func @transform_1(%arg0: i32) -> (i32, i32, i32) {
    %c0_i32 = arith.constant 0 : i32
    %c0_i32_0 = arith.constant 0 : i32
    %c0_i32_1 = arith.constant 0 : i32
    return %arg0, %c0_i32, %c0_i32_0 : i32, i32, i32
  }
  func.func @transform_2(%arg0: i32) -> (i32, i32) {
    %c0_i32 = arith.constant 0 : i32
    %c0_i32_0 = arith.constant 0 : i32
    %c0_i32_1 = arith.constant 0 : i32
    return %c0_i32, %c0_i32_0 : i32, i32
  }
  func.func @transform_3(%arg0: i32) -> (i32, i32) {
    %c0_i32 = arith.constant 0 : i32
    %c0_i32_0 = arith.constant 0 : i32
    %c0_i32_1 = arith.constant 0 : i32
    return %c0_i32, %c0_i32_0 : i32, i32
  }
  func.func @transform_4(%arg0: i32) -> (i32, i32) {
    %c0_i32 = arith.constant 0 : i32
    %c0_i32_0 = arith.constant 0 : i32
    %c0_i32_1 = arith.constant 0 : i32
    return %c0_i32, %c0_i32_0 : i32, i32
  }
  func.func @transform_5(%arg0: i32) -> (i32, i32) {
    %c0_i32 = arith.constant 0 : i32
    %c0_i32_0 = arith.constant 0 : i32
    %c0_i32_1 = arith.constant 0 : i32
    return %c0_i32, %c0_i32_0 : i32, i32
  }
  func.func @transform_6(%arg0: i32) -> (i32, i32) {
    %c0_i32 = arith.constant 0 : i32
    %c0_i32_0 = arith.constant 0 : i32
    %c0_i32_1 = arith.constant 0 : i32
    return %c0_i32, %c0_i32_0 : i32, i32
  }
  func.func @transform_7(%arg0: i32) -> (i32, i32) {
    %c0_i32 = arith.constant 0 : i32
    %c0_i32_0 = arith.constant 0 : i32
    %c0_i32_1 = arith.constant 0 : i32
    return %c0_i32, %c0_i32_0 : i32, i32
  }
  func.func @transform_8(%arg0: i32) -> (i32, i32) {
    %c0_i32 = arith.constant 0 : i32
    %c0_i32_0 = arith.constant 0 : i32
    %c0_i32_1 = arith.constant 0 : i32
    return %c0_i32, %c0_i32_0 : i32, i32
  }
  func.func @transform_9(%arg0: i32) -> (i32, i32) {
    %c0_i32 = arith.constant 0 : i32
    %c0_i32_0 = arith.constant 0 : i32
    %c0_i32_1 = arith.constant 0 : i32
    return %c0_i32, %c0_i32_0 : i32, i32
  }
  func.func @transform_10(%arg0: i32) -> (i32, i32) {
    %c0_i32 = arith.constant 0 : i32
    %c0_i32_0 = arith.constant 0 : i32
    %c0_i32_1 = arith.constant 0 : i32
    return %c0_i32, %c0_i32_0 : i32, i32
  }
  func.func @transform_11(%arg0: i32) -> (i32, i32) {
    %c0_i32 = arith.constant 0 : i32
    %c0_i32_0 = arith.constant 0 : i32
    %c0_i32_1 = arith.constant 0 : i32
    return %c0_i32, %c0_i32_0 : i32, i32
  }
  func.func @transform_12(%arg0: i32) -> (i32, i32) {
    %c0_i32 = arith.constant 0 : i32
    %c0_i32_0 = arith.constant 0 : i32
    %c0_i32_1 = arith.constant 0 : i32
    return %c0_i32, %c0_i32_0 : i32, i32
  }
  func.func @transform_13(%arg0: i32) -> (i32, i32) {
    %c0_i32 = arith.constant 0 : i32
    %c0_i32_0 = arith.constant 0 : i32
    %c0_i32_1 = arith.constant 0 : i32
    return %c0_i32, %c0_i32_0 : i32, i32
  }
  func.func @transform_14(%arg0: i32) -> (i32, i32) {
    %c0_i32 = arith.constant 0 : i32
    %c0_i32_0 = arith.constant 0 : i32
    %c0_i32_1 = arith.constant 0 : i32
    return %c0_i32, %c0_i32_0 : i32, i32
  }
  func.func @transform_15(%arg0: i32) -> (i32, i32) {
    %c0_i32 = arith.constant 0 : i32
    %c0_i32_0 = arith.constant 0 : i32
    %c0_i32_1 = arith.constant 0 : i32
    return %c0_i32, %c0_i32_0 : i32, i32
  }
  func.func @transform_16(%arg0: i32) -> (i32, i32, i32) {
    %c0_i32 = arith.constant 0 : i32
    %c0_i32_0 = arith.constant 0 : i32
    %c0_i32_1 = arith.constant 0 : i32
    return %arg0, %c0_i32, %c0_i32_0 : i32, i32, i32
  }
}

module attributes {stable_mosaic.version = 11 : i64} {
  func.func @_head_kernel(%arg0: memref<2x32xbf16, #tpu.memory_space<vmem>>, %arg1: memref<2x32xbf16, #tpu.memory_space<vmem>>, %arg2: memref<1x32xf32, #tpu.memory_space<vmem>>, %arg3: memref<1x32xf32, #tpu.memory_space<vmem>>, %arg4: memref<32x16xbf16, #tpu.memory_space<vmem>>, %arg5: memref<32x1xf32, #tpu.memory_space<vmem>>, %arg6: memref<16x1xf32, #tpu.memory_space<vmem>>, %arg7: memref<1x1xf32, #tpu.memory_space<vmem>>, %arg8: memref<2x1xf32, #tpu.memory_space<vmem>>) attributes {dimension_semantics = [], scalar_prefetch = 0 : i64, scratch_operands = 0 : i64, tpu.core_type = #tpu.core_type<tc>} {
    %c0 = arith.constant 0 : index
    %c0_0 = arith.constant 0 : index
    %0 = vector.load %arg1[%c0, %c0_0] : memref<2x32xbf16, #tpu.memory_space<vmem>>, vector<2x32xbf16>
    %1 = arith.extf %0 : vector<2x32xbf16> to vector<2x32xf32>
    %c0_1 = arith.constant 0 : index
    %c0_2 = arith.constant 0 : index
    %2 = vector.load %arg2[%c0_1, %c0_2] : memref<1x32xf32, #tpu.memory_space<vmem>>, vector<1x32xf32>
    %c0_3 = arith.constant 0 : index
    %c0_4 = arith.constant 0 : index
    %3 = vector.load %arg3[%c0_3, %c0_4] : memref<1x32xf32, #tpu.memory_space<vmem>>, vector<1x32xf32>
    %cst = arith.constant dense<0.000000e+00> : vector<2xf32>
    %4 = vector.multi_reduction <add>, %1, %cst [1] : vector<2x32xf32> to vector<2xf32>
    %5 = vector.shape_cast %4 : vector<2xf32> to vector<2x1xf32>
    %cst_5 = arith.constant 3.200000e+01 : f32
    %6 = vector.broadcast %cst_5 : f32 to vector<2x1xf32>
    %7 = arith.divf %5, %6 : vector<2x1xf32>
    %8 = vector.broadcast %7 : vector<2x1xf32> to vector<2x32xf32>
    %9 = arith.subf %1, %8 : vector<2x32xf32>
    %10 = arith.mulf %9, %9 : vector<2x32xf32>
    %cst_6 = arith.constant dense<0.000000e+00> : vector<2xf32>
    %11 = vector.multi_reduction <add>, %10, %cst_6 [1] : vector<2x32xf32> to vector<2xf32>
    %12 = vector.shape_cast %11 : vector<2xf32> to vector<2x1xf32>
    %cst_7 = arith.constant 3.200000e+01 : f32
    %13 = vector.broadcast %cst_7 : f32 to vector<2x1xf32>
    %14 = arith.divf %12, %13 : vector<2x1xf32>
    %15 = vector.broadcast %7 : vector<2x1xf32> to vector<2x32xf32>
    %16 = arith.subf %1, %15 : vector<2x32xf32>
    %cst_8 = arith.constant 9.99999974E-6 : f32
    %17 = vector.broadcast %cst_8 : f32 to vector<2x1xf32>
    %18 = arith.addf %14, %17 : vector<2x1xf32>
    %19 = math.rsqrt %18 : vector<2x1xf32>
    %20 = vector.broadcast %19 : vector<2x1xf32> to vector<2x32xf32>
    %21 = arith.mulf %16, %20 : vector<2x32xf32>
    %22 = vector.broadcast %2 : vector<1x32xf32> to vector<2x32xf32>
    %23 = arith.mulf %21, %22 : vector<2x32xf32>
    %24 = vector.broadcast %3 : vector<1x32xf32> to vector<2x32xf32>
    %25 = arith.addf %23, %24 : vector<2x32xf32>
    %26 = arith.truncf %25 : vector<2x32xf32> to vector<2x32xbf16>
    %c0_9 = arith.constant 0 : index
    %c0_10 = arith.constant 0 : index
    %27 = vector.load %arg4[%c0_9, %c0_10] : memref<32x16xbf16, #tpu.memory_space<vmem>>, vector<32x16xbf16>
    %cst_11 = arith.constant dense<0.000000e+00> : vector<2x16xf32>
    %28 = tpu.matmul %26, %27, %cst_11 {dimension_numbers = #tpu.dot_dimension_numbers<[1], [0], [0], [1], [0, 0, 1, 1], [], []>} : vector<2x32xbf16>, vector<32x16xbf16>, vector<2x16xf32> -> vector<2x16xf32>
    %c0_12 = arith.constant 0 : index
    %c0_13 = arith.constant 0 : index
    %29 = vector.load %arg0[%c0_12, %c0_13] : memref<2x32xbf16, #tpu.memory_space<vmem>>, vector<2x32xbf16>
    %30 = arith.extf %29 : vector<2x32xbf16> to vector<2x32xf32>
    %c0_14 = arith.constant 0 : index
    %c0_15 = arith.constant 0 : index
    %31 = vector.load %arg5[%c0_14, %c0_15] : memref<32x1xf32, #tpu.memory_space<vmem>>, vector<32x1xf32>
    %cst_16 = arith.constant dense<0.000000e+00> : vector<2x1xf32>
    %32 = tpu.matmul %30, %31, %cst_16 {dimension_numbers = #tpu.dot_dimension_numbers<[1], [0], [0], [1], [0, 0, 1, 1], [], []>} : vector<2x32xf32>, vector<32x1xf32>, vector<2x1xf32> -> vector<2x1xf32>
    %c0_17 = arith.constant 0 : index
    %c0_18 = arith.constant 0 : index
    %33 = vector.load %arg6[%c0_17, %c0_18] : memref<16x1xf32, #tpu.memory_space<vmem>>, vector<16x1xf32>
    %cst_19 = arith.constant dense<0.000000e+00> : vector<2x1xf32>
    %34 = tpu.matmul %28, %33, %cst_19 {dimension_numbers = #tpu.dot_dimension_numbers<[1], [0], [0], [1], [0, 0, 1, 1], [], []>} : vector<2x16xf32>, vector<16x1xf32>, vector<2x1xf32> -> vector<2x1xf32>
    %35 = arith.addf %32, %34 : vector<2x1xf32>
    %c0_20 = arith.constant 0 : index
    %c0_21 = arith.constant 0 : index
    %36 = vector.load %arg7[%c0_20, %c0_21] : memref<1x1xf32, #tpu.memory_space<vmem>>, vector<1x1xf32>
    %37 = vector.broadcast %36 : vector<1x1xf32> to vector<2x1xf32>
    %38 = arith.addf %35, %37 : vector<2x1xf32>
    %c0_22 = arith.constant 0 : index
    %c0_23 = arith.constant 0 : index
    %39 = vector.load %arg8[%c0_22, %c0_23] : memref<2x1xf32, #tpu.memory_space<vmem>>, vector<2x1xf32>
    tpu.vector_store %arg8[%c0_22, %c0_23], %38 {strides = array<i32>} : memref<2x1xf32, #tpu.memory_space<vmem>>, vector<2x1xf32>,
    return
  }
}

</mosaic_0001>

<llo_original>
// kernel: multimodal_classifier_forward.5
$region0: #{multimodal_classifier_forward.5}
  #allocation0 [shape = 'u32[]', space=smem, size = 0x4, offset = 0x4, fixed_abs, tag = 'smem constant byte address 0x4 - core index']
  #allocation1 [shape = 'u32[72,128]{1,0:T(1,128)}', space=vmem, size = 0x9000, scoped, tag = 'internal scratch']
  #allocation2 [shape = 'f32[1,1]{1,0:T(1,128)S(1)}', space=vmem, size = 0x200, scoped, tag = 'scoped memory for multimodal_classifier_forward.5']
  %s0 = inlined_call_operand.vmem [shape: bf16[2,32], index: 0, kind: input, shape index: {}]
  %s1 = inlined_call_operand.vmem [shape: bf16[2,32], index: 1, kind: input, shape index: {}]
  %s2 = inlined_call_operand.vmem [shape: f32[1,32], index: 2, kind: input, shape index: {}]
  %s3 = inlined_call_operand.vmem [shape: f32[1,32], index: 3, kind: input, shape index: {}]
  %s4 = inlined_call_operand.vmem [shape: bf16[32,16], index: 4, kind: input, shape index: {}]
  %s5 = inlined_call_operand.vmem [shape: f32[32,1], index: 5, kind: input, shape index: {}]
  %s6 = inlined_call_operand.vmem [shape: f32[16,1], index: 6, kind: input, shape index: {}]
  %s7 = inlined_call_operand.<no memory space> [shape: f32[1,1], index: 7, kind: input, shape index: {}]
  %s8 = inlined_call_operand.vmem [shape: f32[2,1], index: 8, kind: output, shape index: {}]
  %s9 = sld [smem:[#allocation0]]
  $region42: #{multimodal_classifier_forward.5} parent=0
    _
  %s11 = ssub.s32 1, %s9
  %s12 = scalar_select 0, %s11, %s9
  %v13 = vstv %s7
  %14 = vst [vmem:[#allocation2] sm:$0x1] %v13
  // Predicated region
  $region2: #{multimodal_classifier_forward.5} parent=0 // pred_check
    _
  $region3: #{multimodal_classifier_forward.5} parent=0 // pred_check_branch
    %16 = sbr.rel (0) target = $region5
  $region4: #{multimodal_classifier_forward.5} parent=0 // pred_region
    _
  $region5: #{multimodal_classifier_forward.5} parent=0 // pred_fallthru
    _
  // Predicated region
  $region6: #{multimodal_classifier_forward.5} parent=0 // pred_check
    _
  $region7: #{multimodal_classifier_forward.5} parent=0 // pred_check_branch
    %18 = sbr.rel (0) target = $region9
  $region8: #{multimodal_classifier_forward.5} parent=0 // pred_region
    _
  $region9: #{multimodal_classifier_forward.5} parent=0 // pred_fallthru
    _
  // Predicated region
  $region10: #{multimodal_classifier_forward.5} parent=0 // pred_check
    _
  $region11: #{multimodal_classifier_forward.5} parent=0 // pred_check_branch
    %20 = sbr.rel (0) target = $region13
  $region12: #{multimodal_classifier_forward.5} parent=0 // pred_region
    _
  $region13: #{multimodal_classifier_forward.5} parent=0 // pred_fallthru
    _
  // Predicated region
  $region14: #{multimodal_classifier_forward.5} parent=0 // pred_check
    _
  $region15: #{multimodal_classifier_forward.5} parent=0 // pred_check_branch
    %22 = sbr.rel (0) target = $region17
  $region16: #{multimodal_classifier_forward.5} parent=0 // pred_region
    _
  $region17: #{multimodal_classifier_forward.5} parent=0 // pred_fallthru
    _
  // Predicated region
  $region18: #{multimodal_classifier_forward.5} parent=0 // pred_check
    _
  $region19: #{multimodal_classifier_forward.5} parent=0 // pred_check_branch
    %24 = sbr.rel (0) target = $region21
  $region20: #{multimodal_classifier_forward.5} parent=0 // pred_region
    _
  $region21: #{multimodal_classifier_forward.5} parent=0 // pred_fallthru
    _
  // Predicated region
  $region22: #{multimodal_classifier_forward.5} parent=0 // pred_check
    _
  $region23: #{multimodal_classifier_forward.5} parent=0 // pred_check_branch
    %26 = sbr.rel (0) target = $region25
  $region24: #{multimodal_classifier_forward.5} parent=0 // pred_region
    _
  $region25: #{multimodal_classifier_forward.5} parent=0 // pred_fallthru
    _
  // Predicated region
  $region26: #{multimodal_classifier_forward.5} parent=0 // pred_check
    _
  $region27: #{multimodal_classifier_forward.5} parent=0 // pred_check_branch
    %28 = sbr.rel (0) target = $region29
  $region28: #{multimodal_classifier_forward.5} parent=0 // pred_region
    _
  $region29: #{multimodal_classifier_forward.5} parent=0 // pred_fallthru
    _
  // Predicated region
  $region30: #{multimodal_classifier_forward.5} parent=0 // pred_check
    _
  $region31: #{multimodal_classifier_forward.5} parent=0 // pred_check_branch
    %30 = sbr.rel (0) target = $region33
  $region32: #{multimodal_classifier_forward.5} parent=0 // pred_region
    _
  $region33: #{multimodal_classifier_forward.5} parent=0 // pred_fallthru
    _
  %v32 = vld [vmem:[%s1] sm:$0x1]
  %v33 = vunpack.c.l.bf16 %v32
  %v34 = vld [vmem:[%s2] sm:$0x1]
  %v35 = vld [vmem:[%s3] sm:$0x1]
  %vm36 = vcmask 254976
  %v37 = vsel %vm36, %v33, 0.0
  %38 = vadd.xlane.f32.xlu0 %v37
  %v39 = vpop.xlane.xlu0 %38
  %v40 = vrcp.pop 32.0
  %v41 = vmul.f32 32.0, %v40
  %v42 = vsub.f32 1.0, %v41
  %v43 = vmul.f32 %v40, %v42
  %v44 = vadd.f32 %v40, %v43
  %vm45 = vweird.f32 %v40
  %v46 = vsel %vm45, %v40, %v44
  %v47 = vmul.f32 %v39, %v46
  %v48 = vsub.f32 %v33, %v47
  %v49 = vmul.f32 %v48, %v48
  %v50 = vsel %vm36, %v49, 0.0
  %51 = vadd.xlane.f32.xlu0 %v50
  %v52 = vpop.xlane.xlu0 %51
  %v53 = vmul.f32 %v52, %v46
  %v54 = vadd.f32 %v53, 1e-05
  %v55 = vrsqrt.pop %v54
  %v56 = vmul.f32 %v55, %v54
  %v57 = vmul.f32 %v56, %v55
  %v58 = vmul.f32 0.5, %v57
  %v59 = vsub.f32 1.5, %v58
  %v60 = vmul.f32 %v55, %v59
  %vm61 = vweird.f32 %v54
  %vm62 = vweird.f32 %v55
  %vm63 = vmor %vm61, %vm62
  %v64 = vsel %vm63, %v55, %v60
  %v65 = vmul.f32 %v48, %v64
  %v67 = vperm.slane %v34, 0
  %v69 = vmul.f32 %v65, %v67
  %v71 = vperm.slane %v35, 0
  %v73 = vadd.f32 %v69, %v71
  %v74 = vpack.c.bf16 %v73, %v73
  %v75 = vld [vmem:[%s4] sm:$0xf]
  %v76 = vld [vmem:[%s4 + $0x4] sm:$0xf]
  %v77 = vld [vmem:[%s4 + $0x8] sm:$0xf]
  %v78 = vld [vmem:[%s4 + $0xc] sm:$0xf]
  %v83 = vunpack.c.l.b16 %v75
  %v84 = vunpack.c.l.b16 %v76
  %v85 = vunpack.c.l.b16 %v77
  %v86 = vunpack.c.l.b16 %v78
  %v87 = vpack.c.b16 %v84, %v83
  %v88 = vpack.c.b16 %v86, %v85
  %vm91 = vcmask 261120
  %v93 = vsel %vm91, %v74, 0
  %95 = vmatpush.bf16.msra.mxu0 0
  %96 = vmatpush.bf16.msra.mxu0 0
  %97 = vmatpush.bf16.msra.mxu0 0
  %98 = vmatpush.bf16.msra.mxu0 0
  %99 = vmatpush.bf16.msra.mxu0 0
  %100 = vmatpush.bf16.msra.mxu0 0
  %101 = vmatpush.bf16.msra.mxu0 %v88
  %102 = vmatpush.bf16.msra.mxu0 %v87
  %103 = vmatmul.bf16.gmra.mxu0 %v93
  %v104 = vpop.f32.mrf.mxu0
  %v105 = vadd.f32 0.0, %v104
  %v106 = vpop.f32.mrf.mxu0
  %107 = vdwg.mxu0
  %v108 = vld [vmem:[%s0] sm:$0x1]
  %v109 = vunpack.c.l.bf16 %v108
  %v110 = vld [vmem:[%s5] sm:$0xff]
  %v111 = vld [vmem:[%s5 + $0x8] sm:$0xff]
  %v112 = vld [vmem:[%s5 + $0x10] sm:$0xff]
  %v113 = vld [vmem:[%s5 + $0x18] sm:$0xff]
  %v114 = vld [vmem:[%s6] sm:$0xff]
  %v115 = vld [vmem:[%s6 + $0x8] sm:$0xff]
  %vm116 = vcmask 130048
  %v118 = vsel %vm116, %v105, 0
  %120 = vmatpush.msra.mxu0 0.0
  %121 = vmatpush.msra.mxu0 0.0
  %122 = vmatpush.msra.mxu0 0.0
  %123 = vmatpush.msra.mxu0 0.0
  %124 = vmatpush.msra.mxu0 0.0
  %125 = vmatpush.msra.mxu0 0.0
  %126 = vmatpush.msra.mxu0 0.0
  %127 = vmatpush.msra.mxu0 0.0
  %128 = vmatpush.msra.mxu0 0.0
  %129 = vmatpush.msra.mxu0 0.0
  %130 = vmatpush.msra.mxu0 0.0
  %131 = vmatpush.msra.mxu0 0.0
  %132 = vmatpush.msra.mxu0 0.0
  %133 = vmatpush.msra.mxu0 0.0
  %134 = vmatpush.msra.mxu0 %v115
  %135 = vmatpush.msra.mxu0 %v114
  %136 = vmatmul.f32.gmra.mxu0 %v118
  %v137 = vpop.f32.mrf.mxu0
  %v138 = vadd.f32 0.0, %v137
  %139 = vdwg.mxu0
  %v141 = vsel %vm91, %v109, 0
  %143 = vmatpush.msra.mxu0 0.0
  %144 = vmatpush.msra.mxu0 0.0
  %145 = vmatpush.msra.mxu0 0.0
  %146 = vmatpush.msra.mxu0 0.0
  %147 = vmatpush.msra.mxu0 0.0
  %148 = vmatpush.msra.mxu0 0.0
  %149 = vmatpush.msra.mxu0 0.0
  %150 = vmatpush.msra.mxu0 0.0
  %151 = vmatpush.msra.mxu0 0.0
  %152 = vmatpush.msra.mxu0 0.0
  %153 = vmatpush.msra.mxu0 0.0
  %154 = vmatpush.msra.mxu0 0.0
  %155 = vmatpush.msra.mxu0 %v113
  %156 = vmatpush.msra.mxu0 %v112
  %157 = vmatpush.msra.mxu0 %v111
  %158 = vmatpush.msra.mxu0 %v110
  %159 = vmatmul.f32.gmra.mxu0 %v141
  %v160 = vpop.f32.mrf.mxu0
  %v161 = vadd.f32 %v138, %v160
  %162 = vdwg.mxu0
  %v163 = vld [vmem:[#allocation2] sm:$0x1]
  %v165 = vperm.slane %v163, 0
  %v167 = vadd.f32 %v161, %v165
  %vm168 = vcmask 1024
  %169 = vst.msk [vmem:[%s8] sm:$0x3] %vm168, %v167
  // Predicated region
  $region34: #{multimodal_classifier_forward.5} parent=0 // pred_check
    _
  $region35: #{multimodal_classifier_forward.5} parent=0 // pred_check_branch
    %171 = sbr.rel (0) target = $region37
  $region36: #{multimodal_classifier_forward.5} parent=0 // pred_region
    _
  $region37: #{multimodal_classifier_forward.5} parent=0 // pred_fallthru
    _
  // Predicated region
  $region38: #{multimodal_classifier_forward.5} parent=0 // pred_check
    _
  $region39: #{multimodal_classifier_forward.5} parent=0 // pred_check_branch
    %173 = sbr.rel (0) target = $region41
  $region40: #{multimodal_classifier_forward.5} parent=0 // pred_region
    _
  $region41: #{multimodal_classifier_forward.5} parent=0 // pred_fallthru
    _

// kernel: multimodal_classifier_forward.3
$region0: #{multimodal_classifier_forward.3}
  #allocation0 [shape = 'u32[]', space=smem, size = 0x4, offset = 0x4, fixed_abs, tag = 'smem constant byte address 0x4 - core index']
  #allocation1 [shape = 'u32[72,128]{1,0:T(1,128)}', space=vmem, size = 0x9000, scoped, tag = 'internal scratch']
  %s0 = inlined_call_operand.vmem [shape: f32[2,8,32], index: 0, kind: input, shape index: {}]
  %s1 = inlined_call_operand.vmem [shape: f32[2,1,8], index: 1, kind: input, shape index: {}]
  %s2 = inlined_call_operand.vmem [shape: f32[1,32], index: 2, kind: input, shape index: {}]
  %s3 = inlined_call_operand.vmem [shape: f32[1,32], index: 3, kind: input, shape index: {}]
  %s4 = inlined_call_operand.vmem [shape: f32[1,32], index: 4, kind: input, shape index: {}]
  %s5 = inlined_call_operand.vmem [shape: f32[1,32], index: 5, kind: input, shape index: {}]
  %s6 = inlined_call_operand.vmem [shape: bf16[32,96], index: 6, kind: input, shape index: {}]
  %s7 = inlined_call_operand.vmem [shape: f32[1,96], index: 7, kind: input, shape index: {}]
  %s8 = inlined_call_operand.vmem [shape: bf16[32,32], index: 8, kind: input, shape index: {}]
  %s9 = inlined_call_operand.vmem [shape: f32[1,32], index: 9, kind: input, shape index: {}]
  %s10 = inlined_call_operand.vmem [shape: f32[1,32], index: 10, kind: input, shape index: {}]
  %s11 = inlined_call_operand.vmem [shape: f32[1,32], index: 11, kind: input, shape index: {}]
  %s12 = inlined_call_operand.vmem [shape: bf16[32,64], index: 12, kind: input, shape index: {}]
  %s13 = inlined_call_operand.vmem [shape: f32[1,64], index: 13, kind: input, shape index: {}]
  %s14 = inlined_call_operand.vmem [shape: bf16[64,32], index: 14, kind: input, shape index: {}]
  %s15 = inlined_call_operand.vmem [shape: f32[1,32], index: 15, kind: input, shape index: {}]
  %s16 = inlined_call_operand.vmem [shape: bf16[2,8,32], index: 16, kind: output, shape index: {}]
  %s17 = sld [smem:[#allocation0]]
  $region97: #{multimodal_classifier_forward.3} parent=0
    _
  %s19 = ssub.s32 1, %s17
  %s20 = scalar_select 0, %s19, %s17
  loop: start=0, step=1, limit=4
  $region2: #{multimodal_classifier_forward.3} parent=0 // loop_pre_header
    _
  $region3: #{multimodal_classifier_forward.3} parent=0 // loop_header
    %s22 = sphi 0, %s26
    %p23 = scmp.ge.s32.totalorder %s22, 4
    %s32 = sphi 0, %s34
    %s35 = sphi 0, %s32
    %s36 = sphi 0, %s35
    %s52 = sphi 0, %s36
    %s58 = sphi 0, %s60
    %s61 = sphi 0, %s58
    %s62 = sphi 0, %s61
    %s78 = sphi 0, %s62
    %s82 = sphi 0, %s82
    %s84 = sphi 0, %s82
    %s85 = sphi 0, %s84
    %s99 = sphi 0, %s85
    %s103 = sphi 0, %s103
    %s105 = sphi 0, %s103
    %s106 = sphi 0, %s105
    %s120 = sphi 0, %s106
    %s124 = sphi 0, %s124
    %s126 = sphi 0, %s124
    %s127 = sphi 0, %s126
    %s141 = sphi 0, %s127
    %s145 = sphi 0, %s145
    %s147 = sphi 0, %s145
    %s148 = sphi 0, %s147
    %s162 = sphi 0, %s148
    %s166 = sphi 0, %s166
    %s168 = sphi 0, %s166
    %s169 = sphi 0, %s168
    %s183 = sphi 0, %s169
    %s187 = sphi 0, %s187
    %s189 = sphi 0, %s187
    %s190 = sphi 0, %s189
    %s204 = sphi 0, %s190
    %s208 = sphi 0, %s208
    %s210 = sphi 0, %s208
    %s211 = sphi 0, %s210
    %s225 = sphi 0, %s211
    %s229 = sphi 0, %s229
    %s231 = sphi 0, %s229
    %s232 = sphi 0, %s231
    %s246 = sphi 0, %s232
    %s250 = sphi 0, %s250
    %s252 = sphi 0, %s250
    %s253 = sphi 0, %s252
    %s267 = sphi 0, %s253
    %s271 = sphi 0, %s271
    %s273 = sphi 0, %s271
    %s274 = sphi 0, %s273
    %s288 = sphi 0, %s274
    %s292 = sphi 0, %s292
    %s294 = sphi 0, %s292
    %s295 = sphi 0, %s294
    %s309 = sphi 0, %s295
    %s313 = sphi 0, %s313
    %s315 = sphi 0, %s313
    %s316 = sphi 0, %s315
    %s330 = sphi 0, %s316
    %s334 = sphi 0, %s334
    %s336 = sphi 0, %s334
    %s337 = sphi 0, %s336
    %s351 = sphi 0, %s337
    %s355 = sphi 0, %s355
    %s357 = sphi 0, %s355
    %s358 = sphi 0, %s357
    %s372 = sphi 0, %s358
    %s378 = sphi 0, %s380
    %s381 = sphi 0, %s378
    %s382 = sphi 0, %s381
    %s398 = sphi 0, %s382
  $region4: #{multimodal_classifier_forward.3} parent=0 // loop_header_branch
    %25 = sbr.rel (%p23) target = $region8
  $region5: #{multimodal_classifier_forward.3} parent=0 // loop_body
    %s27 = ssub.s32 %s22, 1
    %s28 = ssub.s32 %s22, 2
    %s29 = sadd.s32 %s22, 1
    %s30 = ssub.s32 %s22, %s29
    %p31 = scmp.eq.s32.totalorder %s30, 0
    %s33 = sadd.s32 %s32, 1
    %s34 = scalar_select %p31, %s32, %s33
    %p37 = pneg %p31
    %p38 = scmp.eq.s32.totalorder %s22, 1
    %p39 = por %p37, %p38
    %p40 = scmp.ne.s32.totalorder %s32, %s35
    %p41 = scmp.eq.s32.totalorder %s22, 0
    %p42 = por %p40, %p41
    %p43 = scmp.ne.s32.totalorder %s32, %s35
    %p44 = scmp.eq.s32.totalorder %s27, 1
    %p45 = por %p43, %p44
    %p46 = scmp.ne.s32.totalorder %s35, %s36
    %p47 = scmp.eq.s32.totalorder %s27, 0
    %p48 = por %p46, %p47
    %p49 = scmp.ne.s32.totalorder %s35, %s36
    %p50 = scmp.eq.s32.totalorder %s28, 1
    %p51 = por %p49, %p50
    %p53 = scmp.ne.s32.totalorder %s36, %s52
    %p54 = scmp.eq.s32.totalorder %s28, 0
    %p55 = por %p53, %p54
    %s56 = ssub.s32 %s22, %s29
    %p57 = scmp.eq.s32.totalorder %s56, 0
    %s59 = sadd.s32 %s58, 1
    %s60 = scalar_select %p57, %s58, %s59
    %p63 = pneg %p57
    %p64 = scmp.eq.s32.totalorder %s22, 1
    %p65 = por %p63, %p64
    %p66 = scmp.ne.s32.totalorder %s58, %s61
    %p67 = scmp.eq.s32.totalorder %s22, 0
    %p68 = por %p66, %p67
    %p69 = scmp.ne.s32.totalorder %s58, %s61
    %p70 = scmp.eq.s32.totalorder %s27, 1
    %p71 = por %p69, %p70
    %p72 = scmp.ne.s32.totalorder %s61, %s62
    %p73 = scmp.eq.s32.totalorder %s27, 0
    %p74 = por %p72, %p73
    %p75 = scmp.ne.s32.totalorder %s61, %s62
    %p76 = scmp.eq.s32.totalorder %s28, 1
    %p77 = por %p75, %p76
    %p79 = scmp.ne.s32.totalorder %s62, %s78
    %p80 = scmp.eq.s32.totalorder %s28, 0
    %p81 = por %p79, %p80
    %s83 = sadd.s32 %s82, 1
    %p86 = scmp.eq.s32.totalorder %s22, 1
    %p87 = scmp.ne.s32.totalorder %s82, %s84
    %p88 = scmp.eq.s32.totalorder %s22, 0
    %p89 = por %p87, %p88
    %p90 = scmp.ne.s32.totalorder %s82, %s84
    %p91 = scmp.eq.s32.totalorder %s27, 1
    %p92 = por %p90, %p91
    %p93 = scmp.ne.s32.totalorder %s84, %s85
    %p94 = scmp.eq.s32.totalorder %s27, 0
    %p95 = por %p93, %p94
    %p96 = scmp.ne.s32.totalorder %s84, %s85
    %p97 = scmp.eq.s32.totalorder %s28, 1
    %p98 = por %p96, %p97
    %p100 = scmp.ne.s32.totalorder %s85, %s99
    %p101 = scmp.eq.s32.totalorder %s28, 0
    %p102 = por %p100, %p101
    %s104 = sadd.s32 %s103, 1
    %p107 = scmp.eq.s32.totalorder %s22, 1
    %p108 = scmp.ne.s32.totalorder %s103, %s105
    %p109 = scmp.eq.s32.totalorder %s22, 0
    %p110 = por %p108, %p109
    %p111 = scmp.ne.s32.totalorder %s103, %s105
    %p112 = scmp.eq.s32.totalorder %s27, 1
    %p113 = por %p111, %p112
    %p114 = scmp.ne.s32.totalorder %s105, %s106
    %p115 = scmp.eq.s32.totalorder %s27, 0
    %p116 = por %p114, %p115
    %p117 = scmp.ne.s32.totalorder %s105, %s106
    %p118 = scmp.eq.s32.totalorder %s28, 1
    %p119 = por %p117, %p118
    %p121 = scmp.ne.s32.totalorder %s106, %s120
    %p122 = scmp.eq.s32.totalorder %s28, 0
    %p123 = por %p121, %p122
    %s125 = sadd.s32 %s124, 1
    %p128 = scmp.eq.s32.totalorder %s22, 1
    %p129 = scmp.ne.s32.totalorder %s124, %s126
    %p130 = scmp.eq.s32.totalorder %s22, 0
    %p131 = por %p129, %p130
    %p132 = scmp.ne.s32.totalorder %s124, %s126
    %p133 = scmp.eq.s32.totalorder %s27, 1
    %p134 = por %p132, %p133
    %p135 = scmp.ne.s32.totalorder %s126, %s127
    %p136 = scmp.eq.s32.totalorder %s27, 0
    %p137 = por %p135, %p136
    %p138 = scmp.ne.s32.totalorder %s126, %s127
    %p139 = scmp.eq.s32.totalorder %s28, 1
    %p140 = por %p138, %p139
    %p142 = scmp.ne.s32.totalorder %s127, %s141
    %p143 = scmp.eq.s32.totalorder %s28, 0
    %p144 = por %p142, %p143
    %s146 = sadd.s32 %s145, 1
    %p149 = scmp.eq.s32.totalorder %s22, 1
    %p150 = scmp.ne.s32.totalorder %s145, %s147
    %p151 = scmp.eq.s32.totalorder %s22, 0
    %p152 = por %p150, %p151
    %p153 = scmp.ne.s32.totalorder %s145, %s147
    %p154 = scmp.eq.s32.totalorder %s27, 1
    %p155 = por %p153, %p154
    %p156 = scmp.ne.s32.totalorder %s147, %s148
    %p157 = scmp.eq.s32.totalorder %s27, 0
    %p158 = por %p156, %p157
    %p159 = scmp.ne.s32.totalorder %s147, %s148
    %p160 = scmp.eq.s32.totalorder %s28, 1
    %p161 = por %p159, %p160
    %p163 = scmp.ne.s32.totalorder %s148, %s162
    %p164 = scmp.eq.s32.totalorder %s28, 0
    %p165 = por %p163, %p164
    %s167 = sadd.s32 %s166, 1
    %p170 = scmp.eq.s32.totalorder %s22, 1
    %p171 = scmp.ne.s32.totalorder %s166, %s168
    %p172 = scmp.eq.s32.totalorder %s22, 0
    %p173 = por %p171, %p172
    %p174 = scmp.ne.s32.totalorder %s166, %s168
    %p175 = scmp.eq.s32.totalorder %s27, 1
    %p176 = por %p174, %p175
    %p177 = scmp.ne.s32.totalorder %s168, %s169
    %p178 = scmp.eq.s32.totalorder %s27, 0
    %p179 = por %p177, %p178
    %p180 = scmp.ne.s32.totalorder %s168, %s169
    %p181 = scmp.eq.s32.totalorder %s28, 1
    %p182 = por %p180, %p181
    %p184 = scmp.ne.s32.totalorder %s169, %s183
    %p185 = scmp.eq.s32.totalorder %s28, 0
    %p186 = por %p184, %p185
    %s188 = sadd.s32 %s187, 1
    %p191 = scmp.eq.s32.totalorder %s22, 1
    %p192 = scmp.ne.s32.totalorder %s187, %s189
    %p193 = scmp.eq.s32.totalorder %s22, 0
    %p194 = por %p192, %p193
    %p195 = scmp.ne.s32.totalorder %s187, %s189
    %p196 = scmp.eq.s32.totalorder %s27, 1
    %p197 = por %p195, %p196
    %p198 = scmp.ne.s32.totalorder %s189, %s190
    %p199 = scmp.eq.s32.totalorder %s27, 0
    %p200 = por %p198, %p199
    %p201 = scmp.ne.s32.totalorder %s189, %s190
    %p202 = scmp.eq.s32.totalorder %s28, 1
    %p203 = por %p201, %p202
    %p205 = scmp.ne.s32.totalorder %s190, %s204
    %p206 = scmp.eq.s32.totalorder %s28, 0
    %p207 = por %p205, %p206
    %s209 = sadd.s32 %s208, 1
    %p212 = scmp.eq.s32.totalorder %s22, 1
    %p213 = scmp.ne.s32.totalorder %s208, %s210
    %p214 = scmp.eq.s32.totalorder %s22, 0
    %p215 = por %p213, %p214
    %p216 = scmp.ne.s32.totalorder %s208, %s210
    %p217 = scmp.eq.s32.totalorder %s27, 1
    %p218 = por %p216, %p217
    %p219 = scmp.ne.s32.totalorder %s210, %s211
    %p220 = scmp.eq.s32.totalorder %s27, 0
    %p221 = por %p219, %p220
    %p222 = scmp.ne.s32.totalorder %s210, %s211
    %p223 = scmp.eq.s32.totalorder %s28, 1
    %p224 = por %p222, %p223
    %p226 = scmp.ne.s32.totalorder %s211, %s225
    %p227 = scmp.eq.s32.totalorder %s28, 0
    %p228 = por %p226, %p227
    %s230 = sadd.s32 %s229, 1
    %p233 = scmp.eq.s32.totalorder %s22, 1
    %p234 = scmp.ne.s32.totalorder %s229, %s231
    %p235 = scmp.eq.s32.totalorder %s22, 0
    %p236 = por %p234, %p235
    %p237 = scmp.ne.s32.totalorder %s229, %s231
    %p238 = scmp.eq.s32.totalorder %s27, 1
    %p239 = por %p237, %p238
    %p240 = scmp.ne.s32.totalorder %s231, %s232
    %p241 = scmp.eq.s32.totalorder %s27, 0
    %p242 = por %p240, %p241
    %p243 = scmp.ne.s32.totalorder %s231, %s232
    %p244 = scmp.eq.s32.totalorder %s28, 1
    %p245 = por %p243, %p244
    %p247 = scmp.ne.s32.totalorder %s232, %s246
    %p248 = scmp.eq.s32.totalorder %s28, 0
    %p249 = por %p247, %p248
    %s251 = sadd.s32 %s250, 1
    %p254 = scmp.eq.s32.totalorder %s22, 1
    %p255 = scmp.ne.s32.totalorder %s250, %s252
    %p256 = scmp.eq.s32.totalorder %s22, 0
    %p257 = por %p255, %p256
    %p258 = scmp.ne.s32.totalorder %s250, %s252
    %p259 = scmp.eq.s32.totalorder %s27, 1
    %p260 = por %p258, %p259
    %p261 = scmp.ne.s32.totalorder %s252, %s253
    %p262 = scmp.eq.s32.totalorder %s27, 0
    %p263 = por %p261, %p262
    %p264 = scmp.ne.s32.totalorder %s252, %s253
    %p265 = scmp.eq.s32.totalorder %s28, 1
    %p266 = por %p264, %p265
    %p268 = scmp.ne.s32.totalorder %s253, %s267
    %p269 = scmp.eq.s32.totalorder %s28, 0
    %p270 = por %p268, %p269
    %s272 = sadd.s32 %s271, 1
    %p275 = scmp.eq.s32.totalorder %s22, 1
    %p276 = scmp.ne.s32.totalorder %s271, %s273
    %p277 = scmp.eq.s32.totalorder %s22, 0
    %p278 = por %p276, %p277
    %p279 = scmp.ne.s32.totalorder %s271, %s273
    %p280 = scmp.eq.s32.totalorder %s27, 1
    %p281 = por %p279, %p280
    %p282 = scmp.ne.s32.totalorder %s273, %s274
    %p283 = scmp.eq.s32.totalorder %s27, 0
    %p284 = por %p282, %p283
    %p285 = scmp.ne.s32.totalorder %s273, %s274
    %p286 = scmp.eq.s32.totalorder %s28, 1
    %p287 = por %p285, %p286
    %p289 = scmp.ne.s32.totalorder %s274, %s288
    %p290 = scmp.eq.s32.totalorder %s28, 0
    %p291 = por %p289, %p290
    %s293 = sadd.s32 %s292, 1
    %p296 = scmp.eq.s32.totalorder %s22, 1
    %p297 = scmp.ne.s32.totalorder %s292, %s294
    %p298 = scmp.eq.s32.totalorder %s22, 0
    %p299 = por %p297, %p298
    %p300 = scmp.ne.s32.totalorder %s292, %s294
    %p301 = scmp.eq.s32.totalorder %s27, 1
    %p302 = por %p300, %p301
    %p303 = scmp.ne.s32.totalorder %s294, %s295
    %p304 = scmp.eq.s32.totalorder %s27, 0
    %p305 = por %p303, %p304
    %p306 = scmp.ne.s32.totalorder %s294, %s295
    %p307 = scmp.eq.s32.totalorder %s28, 1
    %p308 = por %p306, %p307
    %p310 = scmp.ne.s32.totalorder %s295, %s309
    %p311 = scmp.eq.s32.totalorder %s28, 0
    %p312 = por %p310, %p311
    %s314 = sadd.s32 %s313, 1
    %p317 = scmp.eq.s32.totalorder %s22, 1
    %p318 = scmp.ne.s32.totalorder %s313, %s315
    %p319 = scmp.eq.s32.totalorder %s22, 0
    %p320 = por %p318, %p319
    %p321 = scmp.ne.s32.totalorder %s313, %s315
    %p322 = scmp.eq.s32.totalorder %s27, 1
    %p323 = por %p321, %p322
    %p324 = scmp.ne.s32.totalorder %s315, %s316
    %p325 = scmp.eq.s32.totalorder %s27, 0
    %p326 = por %p324, %p325
    %p327 = scmp.ne.s32.totalorder %s315, %s316
    %p328 = scmp.eq.s32.totalorder %s28, 1
    %p329 = por %p327, %p328
    %p331 = scmp.ne.s32.totalorder %s316, %s330
    %p332 = scmp.eq.s32.totalorder %s28, 0
    %p333 = por %p331, %p332
    %s335 = sadd.s32 %s334, 1
    %p338 = scmp.eq.s32.totalorder %s22, 1
    %p339 = scmp.ne.s32.totalorder %s334, %s336
    %p340 = scmp.eq.s32.totalorder %s22, 0
    %p341 = por %p339, %p340
    %p342 = scmp.ne.s32.totalorder %s334, %s336
    %p343 = scmp.eq.s32.totalorder %s27, 1
    %p344 = por %p342, %p343
    %p345 = scmp.ne.s32.totalorder %s336, %s337
    %p346 = scmp.eq.s32.totalorder %s27, 0
    %p347 = por %p345, %p346
    %p348 = scmp.ne.s32.totalorder %s336, %s337
    %p349 = scmp.eq.s32.totalorder %s28, 1
    %p350 = por %p348, %p349
    %p352 = scmp.ne.s32.totalorder %s337, %s351
    %p353 = scmp.eq.s32.totalorder %s28, 0
    %p354 = por %p352, %p353
    %s356 = sadd.s32 %s355, 1
    %p359 = scmp.eq.s32.totalorder %s22, 1
    %p360 = scmp.ne.s32.totalorder %s355, %s357
    %p361 = scmp.eq.s32.totalorder %s22, 0
    %p362 = por %p360, %p361
    %p363 = scmp.ne.s32.totalorder %s355, %s357
    %p364 = scmp.eq.s32.totalorder %s27, 1
    %p365 = por %p363, %p364
    %p366 = scmp.ne.s32.totalorder %s357, %s358
    %p367 = scmp.eq.s32.totalorder %s27, 0
    %p368 = por %p366, %p367
    %p369 = scmp.ne.s32.totalorder %s357, %s358
    %p370 = scmp.eq.s32.totalorder %s28, 1
    %p371 = por %p369, %p370
    %p373 = scmp.ne.s32.totalorder %s358, %s372
    %p374 = scmp.eq.s32.totalorder %s28, 0
    %p375 = por %p373, %p374
    %s376 = ssub.s32 %s22, %s29
    %p377 = scmp.eq.s32.totalorder %s376, 0
    %s379 = sadd.s32 %s378, 1
    %s380 = scalar_select %p377, %s378, %s379
    %p383 = pneg %p377
    %p384 = scmp.eq.s32.totalorder %s22, 1
    %p385 = por %p383, %p384
    %p386 = scmp.ne.s32.totalorder %s378, %s381
    %p387 = scmp.eq.s32.totalorder %s22, 0
    %p388 = por %p386, %p387
    %p389 = scmp.ne.s32.totalorder %s378, %s381
    %p390 = scmp.eq.s32.totalorder %s27, 1
    %p391 = por %p389, %p390
    %p392 = scmp.ne.s32.totalorder %s381, %s382
    %p393 = scmp.eq.s32.totalorder %s27, 0
    %p394 = por %p392, %p393
    %p395 = scmp.ne.s32.totalorder %s381, %s382
    %p396 = scmp.eq.s32.totalorder %s28, 1
    %p397 = por %p395, %p396
    %p399 = scmp.ne.s32.totalorder %s382, %s398
    %p400 = scmp.eq.s32.totalorder %s28, 0
    %p401 = por %p399, %p400
    %p402 = scmp.le.s32.totalorder 1, %s22
    %p403 = scmp.lt.s32.totalorder %s22, 3
    %p404 = pnand %p402, %p403
    %p405 = pneg %p404
    // Predicated region
    $region9: #{multimodal_classifier_forward.3} parent=5 // pred_check
      _
    $region10: #{multimodal_classifier_forward.3} parent=5 // pred_check_branch
      %407 = sbr.rel (%p404) target = $region12
    $region11: #{multimodal_classifier_forward.3} parent=5 // pred_region
      %s408 = ssub.s32 %s22, 1
      // Predicated region
      $region13: #{multimodal_classifier_forward.3} parent=11 // pred_check
        %p409 = pneg %p95
      $region14: #{multimodal_classifier_forward.3} parent=11 // pred_check_branch
        %411 = sbr.rel (%p409) target = $region16
      $region15: #{multimodal_classifier_forward.3} parent=11 // pred_region
        _
      $region16: #{multimodal_classifier_forward.3} parent=11 // pred_fallthru
        _
      // Predicated region
      $region17: #{multimodal_classifier_forward.3} parent=11 // pred_check
        %p412 = pneg %p116
      $region18: #{multimodal_classifier_forward.3} parent=11 // pred_check_branch
        %414 = sbr.rel (%p412) target = $region20
      $region19: #{multimodal_classifier_forward.3} parent=11 // pred_region
        _
      $region20: #{multimodal_classifier_forward.3} parent=11 // pred_fallthru
        _
      // Predicated region
      $region21: #{multimodal_classifier_forward.3} parent=11 // pred_check
        %p415 = pneg %p137
      $region22: #{multimodal_classifier_forward.3} parent=11 // pred_check_branch
        %417 = sbr.rel (%p415) target = $region24
      $region23: #{multimodal_classifier_forward.3} parent=11 // pred_region
        _
      $region24: #{multimodal_classifier_forward.3} parent=11 // pred_fallthru
        _
      // Predicated region
      $region25: #{multimodal_classifier_forward.3} parent=11 // pred_check
        %p418 = pneg %p158
      $region26: #{multimodal_classifier_forward.3} parent=11 // pred_check_branch
        %420 = sbr.rel (%p418) target = $region28
      $region27: #{multimodal_classifier_forward.3} parent=11 // pred_region
        _
      $region28: #{multimodal_classifier_forward.3} parent=11 // pred_fallthru
        _
      // Predicated region
      $region29: #{multimodal_classifier_forward.3} parent=11 // pred_check
        %p421 = pneg %p179
      $region30: #{multimodal_classifier_forward.3} parent=11 // pred_check_branch
        %423 = sbr.rel (%p421) target = $region32
      $region31: #{multimodal_classifier_forward.3} parent=11 // pred_region
        _
      $region32: #{multimodal_classifier_forward.3} parent=11 // pred_fallthru
        _
      // Predicated region
      $region33: #{multimodal_classifier_forward.3} parent=11 // pred_check
        %p424 = pneg %p200
      $region34: #{multimodal_classifier_forward.3} parent=11 // pred_check_branch
        %426 = sbr.rel (%p424) target = $region36
      $region35: #{multimodal_classifier_forward.3} parent=11 // pred_region
        _
      $region36: #{multimodal_classifier_forward.3} parent=11 // pred_fallthru
        _
      // Predicated region
      $region37: #{multimodal_classifier_forward.3} parent=11 // pred_check
        %p427 = pneg %p221
      $region38: #{multimodal_classifier_forward.3} parent=11 // pred_check_branch
        %429 = sbr.rel (%p427) target = $region40
      $region39: #{multimodal_classifier_forward.3} parent=11 // pred_region
        _
      $region40: #{multimodal_classifier_forward.3} parent=11 // pred_fallthru
        _
      // Predicated region
      $region41: #{multimodal_classifier_forward.3} parent=11 // pred_check
        %p430 = pneg %p242
      $region42: #{multimodal_classifier_forward.3} parent=11 // pred_check_branch
        %432 = sbr.rel (%p430) target = $region44
      $region43: #{multimodal_classifier_forward.3} parent=11 // pred_region
        _
      $region44: #{multimodal_classifier_forward.3} parent=11 // pred_fallthru
        _
      // Predicated region
      $region45: #{multimodal_classifier_forward.3} parent=11 // pred_check
        %p433 = pneg %p263
      $region46: #{multimodal_classifier_forward.3} parent=11 // pred_check_branch
        %435 = sbr.rel (%p433) target = $region48
      $region47: #{multimodal_classifier_forward.3} parent=11 // pred_region
        _
      $region48: #{multimodal_classifier_forward.3} parent=11 // pred_fallthru
        _
      // Predicated region
      $region49: #{multimodal_classifier_forward.3} parent=11 // pred_check
        %p436 = pneg %p284
      $region50: #{multimodal_classifier_forward.3} parent=11 // pred_check_branch
        %438 = sbr.rel (%p436) target = $region52
      $region51: #{multimodal_classifier_forward.3} parent=11 // pred_region
        _
      $region52: #{multimodal_classifier_forward.3} parent=11 // pred_fallthru
        _
      // Predicated region
      $region53: #{multimodal_classifier_forward.3} parent=11 // pred_check
        %p439 = pneg %p305
      $region54: #{multimodal_classifier_forward.3} parent=11 // pred_check_branch
        %441 = sbr.rel (%p439) target = $region56
      $region55: #{multimodal_classifier_forward.3} parent=11 // pred_region
        _
      $region56: #{multimodal_classifier_forward.3} parent=11 // pred_fallthru
        _
      // Predicated region
      $region57: #{multimodal_classifier_forward.3} parent=11 // pred_check
        %p442 = pneg %p326
      $region58: #{multimodal_classifier_forward.3} parent=11 // pred_check_branch
        %444 = sbr.rel (%p442) target = $region60
      $region59: #{multimodal_classifier_forward.3} parent=11 // pred_region
        _
      $region60: #{multimodal_classifier_forward.3} parent=11 // pred_fallthru
        _
      // Predicated region
      $region61: #{multimodal_classifier_forward.3} parent=11 // pred_check
        %p445 = pneg %p347
      $region62: #{multimodal_classifier_forward.3} parent=11 // pred_check_branch
        %447 = sbr.rel (%p445) target = $region64
      $region63: #{multimodal_classifier_forward.3} parent=11 // pred_region
        _
      $region64: #{multimodal_classifier_forward.3} parent=11 // pred_fallthru
        _
      // Predicated region
      $region65: #{multimodal_classifier_forward.3} parent=11 // pred_check
        %p448 = pneg %p368
      $region66: #{multimodal_classifier_forward.3} parent=11 // pred_check_branch
        %450 = sbr.rel (%p448) target = $region68
      $region67: #{multimodal_classifier_forward.3} parent=11 // pred_region
        _
      $region68: #{multimodal_classifier_forward.3} parent=11 // pred_fallthru
        _
    $region12: #{multimodal_classifier_forward.3} parent=5 // pred_fallthru
      _
    %p451 = scmp.lt.s32.totalorder %s22, 2
    // Predicated region
    $region69: #{multimodal_classifier_forward.3} parent=5 // pred_check
      %p452 = pneg %p451
    $region70: #{multimodal_classifier_forward.3} parent=5 // pred_check_branch
      %454 = sbr.rel (%p452) target = $region72
    $region71: #{multimodal_classifier_forward.3} parent=5 // pred_region
      // Predicated region
      $region73: #{multimodal_classifier_forward.3} parent=71 // pred_check
        %p455 = pneg %p42
      $region74: #{multimodal_classifier_forward.3} parent=71 // pred_check_branch
        %457 = sbr.rel (%p455) target = $region76
      $region75: #{multimodal_classifier_forward.3} parent=71 // pred_region
        %p458 = scmp.lt.s32.totalorder %s22, 1
        %s459 = scalar_select %p458, %s22, 1
        %s460 = smul.addr %s459, 8
        %s461 = scalar_lea.vmem %s0, %s460
      $region76: #{multimodal_classifier_forward.3} parent=71 // pred_fallthru
        _
      // Predicated region
      $region77: #{multimodal_classifier_forward.3} parent=71 // pred_check
        %p462 = pneg %p68
      $region78: #{multimodal_classifier_forward.3} parent=71 // pred_check_branch
        %464 = sbr.rel (%p462) target = $region80
      $region79: #{multimodal_classifier_forward.3} parent=71 // pred_region
        %p465 = scmp.lt.s32.totalorder %s22, 1
        %s466 = scalar_select %p465, %s22, 1
        %s467 = scalar_lea.vmem %s1, %s466
      $region80: #{multimodal_classifier_forward.3} parent=71 // pred_fallthru
        _
    $region72: #{multimodal_classifier_forward.3} parent=5 // pred_fallthru
      _
    %p468 = scmp.le.s32.totalorder 1, %s22
    %p469 = scmp.lt.s32.totalorder %s22, 3
    %p470 = pnand %p468, %p469
    %p471 = pneg %p470
    // Predicated region
    $region81: #{multimodal_classifier_forward.3} parent=5 // pred_check
      _
    $region82: #{multimodal_classifier_forward.3} parent=5 // pred_check_branch
      %473 = sbr.rel (%p470) target = $region84
    $region83: #{multimodal_classifier_forward.3} parent=5 // pred_region
      %s474 = ssub.s32 %s22, 1
      %p475 = scmp.lt.s32.totalorder %s27, 1
      %s476 = scalar_select %p475, %s27, 1
      %s477 = smul.addr %s476, 8
      %s478 = scalar_lea.vmem %s0, %s477
      %p479 = pneg %p48
      %p480 = pneg %p45
      %p481 = scmp.lt.s32.totalorder %s27, 1
      %s482 = scalar_select %p481, %s27, 1
      %s483 = scalar_lea.vmem %s1, %s482
      %p484 = pneg %p74
      %p485 = pneg %p71
      %p486 = pneg %p95
      %p487 = pneg %p92
      %p488 = pneg %p116
      %p489 = pneg %p113
      %p490 = pneg %p137
      %p491 = pneg %p134
      %p492 = pneg %p158
      %p493 = pneg %p155
      %p494 = pneg %p179
      %p495 = pneg %p176
      %p496 = pneg %p200
      %p497 = pneg %p197
      %p498 = pneg %p221
      %p499 = pneg %p218
      %p500 = pneg %p242
      %p501 = pneg %p239
      %p502 = pneg %p263
      %p503 = pneg %p260
      %p504 = pneg %p284
      %p505 = pneg %p281
      %p506 = pneg %p305
      %p507 = pneg %p302
      %p508 = pneg %p326
      %p509 = pneg %p323
      %p510 = pneg %p347
      %p511 = pneg %p344
      %p512 = pneg %p368
      %p513 = pneg %p365
      %p514 = pneg %p394
      %p515 = pneg %p391
      %p516 = scmp.lt.s32.totalorder %s27, 1
      %s517 = scalar_select %p516, %s27, 1
      %s518 = smul.addr %s517, 4
      %s519 = scalar_lea.vmem %s16, %s518
      %p520 = scmp.lt.s32.totalorder %s27, 1
      %s521 = scalar_select %p520, %s27, 1
      %s522 = smul.addr %s521, 8
      %s523 = scalar_lea.vmem %s0, %s522
      %p524 = scmp.lt.s32.totalorder %s27, 1
      %s525 = scalar_select %p524, %s27, 1
      %s526 = scalar_lea.vmem %s1, %s525
      %p527 = scmp.lt.s32.totalorder %s27, 1
      %s528 = scalar_select %p527, %s27, 1
      %s529 = smul.addr %s528, 4
      %s530 = scalar_lea.vmem %s16, %s529
      %v532 = vld [vmem:[%s523] sm:$0xff]
      %v533 = vld [vmem:[%s2] sm:$0x1]
      %v534 = vld [vmem:[%s3] sm:$0x1]
      %vm535 = vcmask 261120
      %v536 = vsel %vm535, %v532, 0.0
      %537 = vadd.xlane.f32.xlu0 %v536
      %v538 = vpop.xlane.xlu0 %537
      %v539 = vrcp.pop 32.0
      %v540 = vmul.f32 32.0, %v539
      %v541 = vsub.f32 1.0, %v540
      %v542 = vmul.f32 %v539, %v541
      %v543 = vadd.f32 %v539, %v542
      %vm544 = vweird.f32 %v539
      %v545 = vsel %vm544, %v539, %v543
      %v546 = vmul.f32 %v538, %v545
      %v547 = vsub.f32 %v532, %v546
      %v548 = vmul.f32 %v547, %v547
      %v549 = vsel %vm535, %v548, 0.0
      %550 = vadd.xlane.f32.xlu0 %v549
      %v551 = vpop.xlane.xlu0 %550
      %v552 = vmul.f32 %v551, %v545
      %v553 = vadd.f32 %v552, 1e-12
      %v554 = vrsqrt.pop %v553
      %v555 = vmul.f32 %v554, %v553
      %v556 = vmul.f32 %v555, %v554
      %v557 = vmul.f32 0.5, %v556
      %v558 = vsub.f32 1.5, %v557
      %v559 = vmul.f32 %v554, %v558
      %vm560 = vweird.f32 %v553
      %vm561 = vweird.f32 %v554
      %vm562 = vmor %vm560, %vm561
      %v563 = vsel %vm562, %v554, %v559
      %v564 = vmul.f32 %v547, %v563
      %v566 = vperm.slane %v533, 0
      %v568 = vmul.f32 %v564, %v566
      %v570 = vperm.slane %v534, 0
      %v572 = vadd.f32 %v568, %v570
      %v573 = vpack.c.bf16 %v572, %v572
      %v574 = vld [vmem:[%s6] sm:$0xf]
      %v575 = vld [vmem:[%s6 + $0x4] sm:$0xf]
      %v576 = vld [vmem:[%s6 + $0x8] sm:$0xf]
      %v577 = vld [vmem:[%s6 + $0xc] sm:$0xf]
      %v578 = vld [vmem:[%s7] sm:$0x1]
      %v580 = vperm.slane %v578, 0
      %v586 = vunpack.c.l.b16 %v574
      %v587 = vunpack.c.l.b16 %v575
      %v588 = vunpack.c.l.b16 %v576
      %v589 = vunpack.c.l.b16 %v577
      %v590 = vpack.c.b16 %v587, %v586
      %v591 = vpack.c.b16 %v589, %v588
      %v595 = vsel %vm535, %v573, 0
      %597 = vmatpush.bf16.msra.mxu0 0
      %598 = vmatpush.bf16.msra.mxu0 0
      %599 = vmatpush.bf16.msra.mxu0 0
      %600 = vmatpush.bf16.msra.mxu0 0
      %601 = vmatpush.bf16.msra.mxu0 0
      %602 = vmatpush.bf16.msra.mxu0 0
      %603 = vmatpush.bf16.msra.mxu0 %v591
      %604 = vmatpush.bf16.msra.mxu0 %v590
      %605 = vmatmul.bf16.gmra.mxu0 %v595
      %v606 = vpop.f32.mrf.mxu0
      %v607 = vadd.f32 %v580, %v606
      %v608 = vpop.f32.mrf.mxu0
      %609 = vdwg.mxu0
      %v610 = vmul.f32 %v607, 0.25
      %612 = vrot.lane.b32.xlu0 %v610, 112
      %v613 = vpop.permute.xlu0 %612
      %v615 = vrot.slane %v610, 4
      %vm616 = vcmask 1047556
      %v617 = vsel %vm616, 0.0, %v615
      %v619 = vunpack.c.l.s4 1983009808
      %v620 = vunpack.c.0.s8 %v619
      %v621 = vperm.slane %v610, %v620
      %v623 = vunpack.c.l.s4 1983009808
      %v624 = vunpack.c.0.s8 %v623
      %v625 = vperm.slane %v617, %v624
      %v626 = vrot.slane %v613, 4
      %v627 = vsel %vm616, 0.0, %v626
      %v629 = vunpack.c.l.s4 1983009808
      %v630 = vunpack.c.0.s8 %v629
      %v631 = vperm.slane %v613, %v630
      %v633 = vunpack.c.l.s4 1983009808
      %v634 = vunpack.c.0.s8 %v633
      %v635 = vperm.slane %v627, %v634
      %v636 = vrot.slane %v631, 4
      %v637 = vsel %vm616, %v636, %v621
      %v638 = vrot.slane %v621, 4
      %v639 = vsel %vm616, %v631, %v638
      %v641 = vunpack.c.l.s4 1934713408
      %v642 = vunpack.c.0.s8 %v641
      %v643 = vperm.slane %v637, %v642
      %v645 = vunpack.c.l.s4 1934713408
      %v646 = vunpack.c.0.s8 %v645
      %v647 = vperm.slane %v639, %v646
      %v648 = vrot.slane %v635, 4
      %v649 = vsel %vm616, %v648, %v625
      %v650 = vrot.slane %v625, 4
      %v651 = vsel %vm616, %v635, %v650
      %v653 = vunpack.c.l.s4 1934713408
      %v654 = vunpack.c.0.s8 %v653
      %v655 = vperm.slane %v649, %v654
      %v657 = vunpack.c.l.s4 1934713408
      %v658 = vunpack.c.0.s8 %v657
      %v659 = vperm.slane %v651, %v658
      %v660 = vrot.slane %v643, 4
      %v661 = vsel %vm616, 0.0, %v660
      %v662 = vrot.slane %v647, 4
      %v663 = vsel %vm616, 0.0, %v662
      %v664 = vrot.slane %v655, 4
      %v665 = vsel %vm616, 0.0, %v664
      %v666 = vrot.slane %v659, 4
      %v667 = vsel %vm616, 0.0, %v666
      %669 = vrot.lane.b32.xlu0 %v607, 112
      %v670 = vpop.permute.xlu0 %669
      %671 = vrot.lane.b32.xlu0 %v607, 96
      %v672 = vpop.permute.xlu0 %671
      %673 = vrot.lane.b32.xlu0 %v670, 96
      %v674 = vpop.permute.xlu0 %673
      %v677 = vrot.slane %v672, 4
      %v678 = vsel %vm616, 0.0, %v677
      %v680 = vunpack.c.l.s4 1983009808
      %v681 = vunpack.c.0.s8 %v680
      %v682 = vperm.slane %v672, %v681
      %v684 = vunpack.c.l.s4 1983009808
      %v685 = vunpack.c.0.s8 %v684
      %v686 = vperm.slane %v678, %v685
      %v687 = vrot.slane %v674, 4
      %v688 = vsel %vm616, 0.0, %v687
      %v690 = vunpack.c.l.s4 1983009808
      %v691 = vunpack.c.0.s8 %v690
      %v692 = vperm.slane %v674, %v691
      %v694 = vunpack.c.l.s4 1983009808
      %v695 = vunpack.c.0.s8 %v694
      %v696 = vperm.slane %v688, %v695
      %v697 = vrot.slane %v692, 4
      %v698 = vsel %vm616, %v697, %v682
      %v699 = vrot.slane %v682, 4
      %v700 = vsel %vm616, %v692, %v699
      %v702 = vunpack.c.l.s4 1934713408
      %v703 = vunpack.c.0.s8 %v702
      %v704 = vperm.slane %v698, %v703
      %v706 = vunpack.c.l.s4 1934713408
      %v707 = vunpack.c.0.s8 %v706
      %v708 = vperm.slane %v700, %v707
      %v709 = vrot.slane %v696, 4
      %v710 = vsel %vm616, %v709, %v686
      %v711 = vrot.slane %v686, 4
      %v712 = vsel %vm616, %v696, %v711
      %v714 = vunpack.c.l.s4 1934713408
      %v715 = vunpack.c.0.s8 %v714
      %v716 = vperm.slane %v710, %v715
      %v718 = vunpack.c.l.s4 1934713408
      %v719 = vunpack.c.0.s8 %v718
      %v720 = vperm.slane %v712, %v719
      %v721 = vrot.slane %v704, 4
      %v722 = vsel %vm616, 0.0, %v721
      %v723 = vrot.slane %v708, 4
      %v724 = vsel %vm616, 0.0, %v723
      %v725 = vrot.slane %v716, 4
      %v726 = vsel %vm616, 0.0, %v725
      %v727 = vrot.slane %v720, 4
      %v728 = vsel %vm616, 0.0, %v727
      %729 = vrot.lane.b32.xlu0 %v607, 64
      %v730 = vpop.permute.xlu0 %729
      %731 = vrot.lane.b32.xlu0 %v670, 64
      %v732 = vpop.permute.xlu0 %731
      %v735 = vrot.slane %v730, 4
      %v736 = vsel %vm616, 0.0, %v735
      %v738 = vunpack.c.l.s4 1983009808
      %v739 = vunpack.c.0.s8 %v738
      %v740 = vperm.slane %v730, %v739
      %v742 = vunpack.c.l.s4 1983009808
      %v743 = vunpack.c.0.s8 %v742
      %v744 = vperm.slane %v736, %v743
      %v745 = vrot.slane %v732, 4
      %v746 = vsel %vm616, 0.0, %v745
      %v748 = vunpack.c.l.s4 1983009808
      %v749 = vunpack.c.0.s8 %v748
      %v750 = vperm.slane %v732, %v749
      %v752 = vunpack.c.l.s4 1983009808
      %v753 = vunpack.c.0.s8 %v752
      %v754 = vperm.slane %v746, %v753
      %v755 = vrot.slane %v750, 4
      %v756 = vsel %vm616, %v755, %v740
      %v757 = vrot.slane %v740, 4
      %v758 = vsel %vm616, %v750, %v757
      %v760 = vunpack.c.l.s4 1934713408
      %v761 = vunpack.c.0.s8 %v760
      %v762 = vperm.slane %v756, %v761
      %v764 = vunpack.c.l.s4 1934713408
      %v765 = vunpack.c.0.s8 %v764
      %v766 = vperm.slane %v758, %v765
      %v767 = vrot.slane %v754, 4
      %v768 = vsel %vm616, %v767, %v744
      %v769 = vrot.slane %v744, 4
      %v770 = vsel %vm616, %v754, %v769
      %v772 = vunpack.c.l.s4 1934713408
      %v773 = vunpack.c.0.s8 %v772
      %v774 = vperm.slane %v768, %v773
      %v776 = vunpack.c.l.s4 1934713408
      %v777 = vunpack.c.0.s8 %v776
      %v778 = vperm.slane %v770, %v777
      %v779 = vrot.slane %v762, 4
      %v780 = vsel %vm616, 0.0, %v779
      %v781 = vrot.slane %v766, 4
      %v782 = vsel %vm616, 0.0, %v781
      %v783 = vrot.slane %v774, 4
      %v784 = vsel %vm616, 0.0, %v783
      %v785 = vrot.slane %v778, 4
      %v786 = vsel %vm616, 0.0, %v785
      %v787 = vpack.c.bf16 %v643, %v643
      %v788 = vpack.c.bf16 %v661, %v661
      %v789 = vpack.c.bf16 %v647, %v647
      %v790 = vpack.c.bf16 %v663, %v663
      %v791 = vpack.c.bf16 %v655, %v655
      %v792 = vpack.c.bf16 %v665, %v665
      %v793 = vpack.c.bf16 %v659, %v659
      %v794 = vpack.c.bf16 %v667, %v667
      %v795 = vpack.c.bf16 %v704, %v704
      %v796 = vpack.c.bf16 %v722, %v722
      %v797 = vpack.c.bf16 %v708, %v708
      %v798 = vpack.c.bf16 %v724, %v724
      %v799 = vpack.c.bf16 %v716, %v716
      %v800 = vpack.c.bf16 %v726, %v726
      %v801 = vpack.c.bf16 %v720, %v720
      %v802 = vpack.c.bf16 %v728, %v728
      %v803 = vld [vmem:[%s526] sm:$0x1]
      %v804 = vsub.f32 1.0, %v803
      %v805 = vmul.f32 %v804, -1e+09
      %v807 = vperm.slane %v805, 0
      %v809 = vrot.slane %v791, 4
      %vm810 = vcmask 1047556
      %v811 = vsel %vm810, %v809, %v787
      %v813 = vunpack.c.l.s4 1983009808
      %v814 = vunpack.c.0.s8 %v813
      %v815 = vperm.slane %v811, %v814
      %v816 = vrot.slane %v793, 4
      %v817 = vsel %vm810, %v816, %v789
      %v819 = vunpack.c.l.s4 1983009808
      %v820 = vunpack.c.0.s8 %v819
      %v821 = vperm.slane %v817, %v820
      %v822 = vrot.slane %v821, 4
      %v823 = vsel %vm810, %v822, %v815
      %v825 = vunpack.c.l.s4 1934713408
      %v826 = vunpack.c.0.s8 %v825
      %v827 = vperm.slane %v823, %v826
      %v828 = vrot.slane %v792, 4
      %v829 = vsel %vm810, %v828, %v788
      %v831 = vunpack.c.l.s4 1983009808
      %v832 = vunpack.c.0.s8 %v831
      %v833 = vperm.slane %v829, %v832
      %v834 = vrot.slane %v794, 4
      %v835 = vsel %vm810, %v834, %v790
      %v837 = vunpack.c.l.s4 1983009808
      %v838 = vunpack.c.0.s8 %v837
      %v839 = vperm.slane %v835, %v838
      %v840 = vrot.slane %v839, 4
      %v841 = vsel %vm810, %v840, %v833
      %v843 = vunpack.c.l.s4 1934713408
      %v844 = vunpack.c.0.s8 %v843
      %v845 = vperm.slane %v841, %v844
      %v848 = vpack.i.b16 %v845, %v827
      %v849 = vshrl.u32 %v827, 16
      %v850 = vshrl.u32 %v845, 16
      %v851 = vpack.i.b16 %v850, %v849
      %852 = vxpose.xlu0.c.b16.start [1/8] %v795, 128
      %853 = vxpose.xlu0.c.b16.cont [2/8] 0, 128
      %854 = vxpose.xlu0.c.b16.cont [3/8] 0, 128
      %855 = vxpose.xlu0.c.b16.cont [4/8] 0, 128
      %856 = vxpose.xlu0.c.b16.cont [5/8] 0, 128
      %857 = vxpose.xlu0.c.b16.cont [6/8] 0, 128
      %858 = vxpose.xlu0.c.b16.cont [7/8] 0, 128
      %859 = vxpose.xlu0.c.b16.end [8/8] 0, 128
      %v860 = vpop.trf.xlu0
      %v861 = vpop.trf.xlu0
      %v862 = vpop.trf.xlu0
      %v863 = vpop.trf.xlu0
      %v864 = vpop.trf.xlu0
      %v865 = vpop.trf.xlu0
      %v866 = vpop.trf.xlu0
      %v867 = vpop.trf.xlu0
      %868 = vxpose.xlu0.c.b16.start [1/8] %v796, 128
      %869 = vxpose.xlu0.c.b16.cont [2/8] 0, 128
      %870 = vxpose.xlu0.c.b16.cont [3/8] 0, 128
      %871 = vxpose.xlu0.c.b16.cont [4/8] 0, 128
      %872 = vxpose.xlu0.c.b16.cont [5/8] 0, 128
      %873 = vxpose.xlu0.c.b16.cont [6/8] 0, 128
      %874 = vxpose.xlu0.c.b16.cont [7/8] 0, 128
      %875 = vxpose.xlu0.c.b16.end [8/8] 0, 128
      %v876 = vpop.trf.xlu0
      %v877 = vpop.trf.xlu0
      %v878 = vpop.trf.xlu0
      %v879 = vpop.trf.xlu0
      %v880 = vpop.trf.xlu0
      %v881 = vpop.trf.xlu0
      %v882 = vpop.trf.xlu0
      %v883 = vpop.trf.xlu0
      %884 = vxpose.xlu0.c.b16.start [1/8] %v797, 128
      %885 = vxpose.xlu0.c.b16.cont [2/8] 0, 128
      %886 = vxpose.xlu0.c.b16.cont [3/8] 0, 128
      %887 = vxpose.xlu0.c.b16.cont [4/8] 0, 128
      %888 = vxpose.xlu0.c.b16.cont [5/8] 0, 128
      %889 = vxpose.xlu0.c.b16.cont [6/8] 0, 128
      %890 = vxpose.xlu0.c.b16.cont [7/8] 0, 128
      %891 = vxpose.xlu0.c.b16.end [8/8] 0, 128
      %v892 = vpop.trf.xlu0
      %v893 = vpop.trf.xlu0
      %v894 = vpop.trf.xlu0
      %v895 = vpop.trf.xlu0
      %v896 = vpop.trf.xlu0
      %v897 = vpop.trf.xlu0
      %v898 = vpop.trf.xlu0
      %v899 = vpop.trf.xlu0
      %900 = vxpose.xlu0.c.b16.start [1/8] %v798, 128
      %901 = vxpose.xlu0.c.b16.cont [2/8] 0, 128
      %902 = vxpose.xlu0.c.b16.cont [3/8] 0, 128
      %903 = vxpose.xlu0.c.b16.cont [4/8] 0, 128
      %904 = vxpose.xlu0.c.b16.cont [5/8] 0, 128
      %905 = vxpose.xlu0.c.b16.cont [6/8] 0, 128
      %906 = vxpose.xlu0.c.b16.cont [7/8] 0, 128
      %907 = vxpose.xlu0.c.b16.end [8/8] 0, 128
      %v908 = vpop.trf.xlu0
      %v909 = vpop.trf.xlu0
      %v910 = vpop.trf.xlu0
      %v911 = vpop.trf.xlu0
      %v912 = vpop.trf.xlu0
      %v913 = vpop.trf.xlu0
      %v914 = vpop.trf.xlu0
      %v915 = vpop.trf.xlu0
      %916 = vxpose.xlu0.c.b16.start [1/8] %v799, 128
      %917 = vxpose.xlu0.c.b16.cont [2/8] 0, 128
      %918 = vxpose.xlu0.c.b16.cont [3/8] 0, 128
      %919 = vxpose.xlu0.c.b16.cont [4/8] 0, 128
      %920 = vxpose.xlu0.c.b16.cont [5/8] 0, 128
      %921 = vxpose.xlu0.c.b16.cont [6/8] 0, 128
      %922 = vxpose.xlu0.c.b16.cont [7/8] 0, 128
      %923 = vxpose.xlu0.c.b16.end [8/8] 0, 128
      %v924 = vpop.trf.xlu0
      %v925 = vpop.trf.xlu0
      %v926 = vpop.trf.xlu0
      %v927 = vpop.trf.xlu0
      %v928 = vpop.trf.xlu0
      %v929 = vpop.trf.xlu0
      %v930 = vpop.trf.xlu0
      %v931 = vpop.trf.xlu0
      %932 = vxpose.xlu0.c.b16.start [1/8] %v800, 128
      %933 = vxpose.xlu0.c.b16.cont [2/8] 0, 128
      %934 = vxpose.xlu0.c.b16.cont [3/8] 0, 128
      %935 = vxpose.xlu0.c.b16.cont [4/8] 0, 128
      %936 = vxpose.xlu0.c.b16.cont [5/8] 0, 128
      %937 = vxpose.xlu0.c.b16.cont [6/8] 0, 128
      %938 = vxpose.xlu0.c.b16.cont [7/8] 0, 128
      %939 = vxpose.xlu0.c.b16.end [8/8] 0, 128
      %v940 = vpop.trf.xlu0
      %v941 = vpop.trf.xlu0
      %v942 = vpop.trf.xlu0
      %v943 = vpop.trf.xlu0
      %v944 = vpop.trf.xlu0
      %v945 = vpop.trf.xlu0
      %v946 = vpop.trf.xlu0
      %v947 = vpop.trf.xlu0
      %948 = vxpose.xlu0.c.b16.start [1/8] %v801, 128
      %949 = vxpose.xlu0.c.b16.cont [2/8] 0, 128
      %950 = vxpose.xlu0.c.b16.cont [3/8] 0, 128
      %951 = vxpose.xlu0.c.b16.cont [4/8] 0, 128
      %952 = vxpose.xlu0.c.b16.cont [5/8] 0, 128
      %953 = vxpose.xlu0.c.b16.cont [6/8] 0, 128
      %954 = vxpose.xlu0.c.b16.cont [7/8] 0, 128
      %955 = vxpose.xlu0.c.b16.end [8/8] 0, 128
      %v956 = vpop.trf.xlu0
      %v957 = vpop.trf.xlu0
      %v958 = vpop.trf.xlu0
      %v959 = vpop.trf.xlu0
      %v960 = vpop.trf.xlu0
      %v961 = vpop.trf.xlu0
      %v962 = vpop.trf.xlu0
      %v963 = vpop.trf.xlu0
      %964 = vxpose.xlu0.c.b16.start [1/8] %v802, 128
      %965 = vxpose.xlu0.c.b16.cont [2/8] 0, 128
      %966 = vxpose.xlu0.c.b16.cont [3/8] 0, 128
      %967 = vxpose.xlu0.c.b16.cont [4/8] 0, 128
      %968 = vxpose.xlu0.c.b16.cont [5/8] 0, 128
      %969 = vxpose.xlu0.c.b16.cont [6/8] 0, 128
      %970 = vxpose.xlu0.c.b16.cont [7/8] 0, 128
      %971 = vxpose.xlu0.c.b16.end [8/8] 0, 128
      %v972 = vpop.trf.xlu0
      %v973 = vpop.trf.xlu0
      %v974 = vpop.trf.xlu0
      %v975 = vpop.trf.xlu0
      %v976 = vpop.trf.xlu0
      %v977 = vpop.trf.xlu0
      %v978 = vpop.trf.xlu0
      %v979 = vpop.trf.xlu0
      %v982 = vpack.i.b16 %v876, %v860
      %v984 = vshrl.u32 %v860, 16
      %v985 = vshrl.u32 %v876, 16
      %v986 = vpack.i.b16 %v985, %v984
      %v990 = vpack.i.b16 %v908, %v892
      %v992 = vshrl.u32 %v892, 16
      %v993 = vshrl.u32 %v908, 16
      %v994 = vpack.i.b16 %v993, %v992
      %v998 = vpack.i.b16 %v940, %v924
      %v1000 = vshrl.u32 %v924, 16
      %v1001 = vshrl.u32 %v940, 16
      %v1002 = vpack.i.b16 %v1001, %v1000
      %v1006 = vpack.i.b16 %v972, %v956
      %v1008 = vshrl.u32 %v956, 16
      %v1009 = vshrl.u32 %v972, 16
      %v1010 = vpack.i.b16 %v1009, %v1008
      %v1012 = vrot.slane %v998, 4
      %v1013 = vsel %vm810, %v1012, %v982
      %v1014 = vrot.slane %v982, 4
      %v1015 = vsel %vm810, %v998, %v1014
      %v1017 = vunpack.c.l.s4 1983009808
      %v1018 = vunpack.c.0.s8 %v1017
      %v1019 = vperm.slane %v1013, %v1018
      %v1021 = vunpack.c.l.s4 1983009808
      %v1022 = vunpack.c.0.s8 %v1021
      %v1023 = vperm.slane %v1015, %v1022
      %v1024 = vrot.slane %v1006, 4
      %v1025 = vsel %vm810, %v1024, %v990
      %v1026 = vrot.slane %v990, 4
      %v1027 = vsel %vm810, %v1006, %v1026
      %v1029 = vunpack.c.l.s4 1983009808
      %v1030 = vunpack.c.0.s8 %v1029
      %v1031 = vperm.slane %v1025, %v1030
      %v1033 = vunpack.c.l.s4 1983009808
      %v1034 = vunpack.c.0.s8 %v1033
      %v1035 = vperm.slane %v1027, %v1034
      %v1036 = vrot.slane %v1031, 4
      %v1037 = vsel %vm810, %v1036, %v1019
      %v1038 = vrot.slane %v1019, 4
      %v1039 = vsel %vm810, %v1031, %v1038
      %v1041 = vunpack.c.l.s4 1934713408
      %v1042 = vunpack.c.0.s8 %v1041
      %v1043 = vperm.slane %v1037, %v1042
      %v1045 = vunpack.c.l.s4 1934713408
      %v1046 = vunpack.c.0.s8 %v1045
      %v1047 = vperm.slane %v1039, %v1046
      %v1048 = vrot.slane %v1035, 4
      %v1049 = vsel %vm810, %v1048, %v1023
      %v1050 = vrot.slane %v1023, 4
      %v1051 = vsel %vm810, %v1035, %v1050
      %v1053 = vunpack.c.l.s4 1934713408
      %v1054 = vunpack.c.0.s8 %v1053
      %v1055 = vperm.slane %v1049, %v1054
      %v1057 = vunpack.c.l.s4 1934713408
      %v1058 = vunpack.c.0.s8 %v1057
      %v1059 = vperm.slane %v1051, %v1058
      %v1060 = vrot.slane %v1043, 4
      %v1061 = vsel %vm810, 0, %v1060
      %v1062 = vrot.slane %v1047, 4
      %v1063 = vsel %vm810, 0, %v1062
      %v1064 = vrot.slane %v1055, 4
      %v1065 = vsel %vm810, 0, %v1064
      %v1066 = vrot.slane %v1059, 4
      %v1067 = vsel %vm810, 0, %v1066
      %v1068 = vrot.slane %v1002, 4
      %v1069 = vsel %vm810, %v1068, %v986
      %v1070 = vrot.slane %v986, 4
      %v1071 = vsel %vm810, %v1002, %v1070
      %v1073 = vunpack.c.l.s4 1983009808
      %v1074 = vunpack.c.0.s8 %v1073
      %v1075 = vperm.slane %v1069, %v1074
      %v1077 = vunpack.c.l.s4 1983009808
      %v1078 = vunpack.c.0.s8 %v1077
      %v1079 = vperm.slane %v1071, %v1078
      %v1080 = vrot.slane %v1010, 4
      %v1081 = vsel %vm810, %v1080, %v994
      %v1082 = vrot.slane %v994, 4
      %v1083 = vsel %vm810, %v1010, %v1082
      %v1085 = vunpack.c.l.s4 1983009808
      %v1086 = vunpack.c.0.s8 %v1085
      %v1087 = vperm.slane %v1081, %v1086
      %v1089 = vunpack.c.l.s4 1983009808
      %v1090 = vunpack.c.0.s8 %v1089
      %v1091 = vperm.slane %v1083, %v1090
      %v1092 = vrot.slane %v1087, 4
      %v1093 = vsel %vm810, %v1092, %v1075
      %v1094 = vrot.slane %v1075, 4
      %v1095 = vsel %vm810, %v1087, %v1094
      %v1097 = vunpack.c.l.s4 1934713408
      %v1098 = vunpack.c.0.s8 %v1097
      %v1099 = vperm.slane %v1093, %v1098
      %v1101 = vunpack.c.l.s4 1934713408
      %v1102 = vunpack.c.0.s8 %v1101
      %v1103 = vperm.slane %v1095, %v1102
      %v1104 = vrot.slane %v1091, 4
      %v1105 = vsel %vm810, %v1104, %v1079
      %v1106 = vrot.slane %v1079, 4
      %v1107 = vsel %vm810, %v1091, %v1106
      %v1109 = vunpack.c.l.s4 1934713408
      %v1110 = vunpack.c.0.s8 %v1109
      %v1111 = vperm.slane %v1105, %v1110
      %v1113 = vunpack.c.l.s4 1934713408
      %v1114 = vunpack.c.0.s8 %v1113
      %v1115 = vperm.slane %v1107, %v1114
      %v1116 = vrot.slane %v1099, 4
      %v1117 = vsel %vm810, 0, %v1116
      %v1118 = vrot.slane %v1103, 4
      %v1119 = vsel %vm810, 0, %v1118
      %v1120 = vrot.slane %v1111, 4
      %v1121 = vsel %vm810, 0, %v1120
      %v1122 = vrot.slane %v1115, 4
      %v1123 = vsel %vm810, 0, %v1122
      %1124 = vxpose.xlu0.c.b16.start [1/8] %v1043, 128
      %1125 = vxpose.xlu0.c.b16.cont [2/8] 0, 128
      %1126 = vxpose.xlu0.c.b16.cont [3/8] 0, 128
      %1127 = vxpose.xlu0.c.b16.cont [4/8] 0, 128
      %1128 = vxpose.xlu0.c.b16.cont [5/8] 0, 128
      %1129 = vxpose.xlu0.c.b16.cont [6/8] 0, 128
      %1130 = vxpose.xlu0.c.b16.cont [7/8] 0, 128
      %1131 = vxpose.xlu0.c.b16.end [8/8] 0, 128
      %v1132 = vpop.trf.xlu0
      %v1133 = vpop.trf.xlu0
      %v1134 = vpop.trf.xlu0
      %v1135 = vpop.trf.xlu0
      %v1136 = vpop.trf.xlu0
      %v1137 = vpop.trf.xlu0
      %v1138 = vpop.trf.xlu0
      %v1139 = vpop.trf.xlu0
      %1140 = vxpose.xlu0.c.b16.start [1/8] %v1099, 128
      %1141 = vxpose.xlu0.c.b16.cont [2/8] 0, 128
      %1142 = vxpose.xlu0.c.b16.cont [3/8] 0, 128
      %1143 = vxpose.xlu0.c.b16.cont [4/8] 0, 128
      %1144 = vxpose.xlu0.c.b16.cont [5/8] 0, 128
      %1145 = vxpose.xlu0.c.b16.cont [6/8] 0, 128
      %1146 = vxpose.xlu0.c.b16.cont [7/8] 0, 128
      %1147 = vxpose.xlu0.c.b16.end [8/8] 0, 128
      %v1148 = vpop.trf.xlu0
      %v1149 = vpop.trf.xlu0
      %v1150 = vpop.trf.xlu0
      %v1151 = vpop.trf.xlu0
      %v1152 = vpop.trf.xlu0
      %v1153 = vpop.trf.xlu0
      %v1154 = vpop.trf.xlu0
      %v1155 = vpop.trf.xlu0
      %1156 = vxpose.xlu0.c.b16.start [1/8] %v1061, 128
      %1157 = vxpose.xlu0.c.b16.cont [2/8] 0, 128
      %1158 = vxpose.xlu0.c.b16.cont [3/8] 0, 128
      %1159 = vxpose.xlu0.c.b16.cont [4/8] 0, 128
      %1160 = vxpose.xlu0.c.b16.cont [5/8] 0, 128
      %1161 = vxpose.xlu0.c.b16.cont [6/8] 0, 128
      %1162 = vxpose.xlu0.c.b16.cont [7/8] 0, 128
      %1163 = vxpose.xlu0.c.b16.end [8/8] 0, 128
      %v1164 = vpop.trf.xlu0
      %v1165 = vpop.trf.xlu0
      %v1166 = vpop.trf.xlu0
      %v1167 = vpop.trf.xlu0
      %v1168 = vpop.trf.xlu0
      %v1169 = vpop.trf.xlu0
      %v1170 = vpop.trf.xlu0
      %v1171 = vpop.trf.xlu0
      %1172 = vxpose.xlu0.c.b16.start [1/8] %v1117, 128
      %1173 = vxpose.xlu0.c.b16.cont [2/8] 0, 128
      %1174 = vxpose.xlu0.c.b16.cont [3/8] 0, 128
      %1175 = vxpose.xlu0.c.b16.cont [4/8] 0, 128
      %1176 = vxpose.xlu0.c.b16.cont [5/8] 0, 128
      %1177 = vxpose.xlu0.c.b16.cont [6/8] 0, 128
      %1178 = vxpose.xlu0.c.b16.cont [7/8] 0, 128
      %1179 = vxpose.xlu0.c.b16.end [8/8] 0, 128
      %v1180 = vpop.trf.xlu0
      %v1181 = vpop.trf.xlu0
      %v1182 = vpop.trf.xlu0
      %v1183 = vpop.trf.xlu0
      %v1184 = vpop.trf.xlu0
      %v1185 = vpop.trf.xlu0
      %v1186 = vpop.trf.xlu0
      %v1187 = vpop.trf.xlu0
      %1188 = vxpose.xlu0.c.b16.start [1/8] %v1047, 128
      %1189 = vxpose.xlu0.c.b16.cont [2/8] 0, 128
      %1190 = vxpose.xlu0.c.b16.cont [3/8] 0, 128
      %1191 = vxpose.xlu0.c.b16.cont [4/8] 0, 128
      %1192 = vxpose.xlu0.c.b16.cont [5/8] 0, 128
      %1193 = vxpose.xlu0.c.b16.cont [6/8] 0, 128
      %1194 = vxpose.xlu0.c.b16.cont [7/8] 0, 128
      %1195 = vxpose.xlu0.c.b16.end [8/8] 0, 128
      %v1196 = vpop.trf.xlu0
      %v1197 = vpop.trf.xlu0
      %v1198 = vpop.trf.xlu0
      %v1199 = vpop.trf.xlu0
      %v1200 = vpop.trf.xlu0
      %v1201 = vpop.trf.xlu0
      %v1202 = vpop.trf.xlu0
      %v1203 = vpop.trf.xlu0
      %1204 = vxpose.xlu0.c.b16.start [1/8] %v1103, 128
      %1205 = vxpose.xlu0.c.b16.cont [2/8] 0, 128
      %1206 = vxpose.xlu0.c.b16.cont [3/8] 0, 128
      %1207 = vxpose.xlu0.c.b16.cont [4/8] 0, 128
      %1208 = vxpose.xlu0.c.b16.cont [5/8] 0, 128
      %1209 = vxpose.xlu0.c.b16.cont [6/8] 0, 128
      %1210 = vxpose.xlu0.c.b16.cont [7/8] 0, 128
      %1211 = vxpose.xlu0.c.b16.end [8/8] 0, 128
      %v1212 = vpop.trf.xlu0
      %v1213 = vpop.trf.xlu0
      %v1214 = vpop.trf.xlu0
      %v1215 = vpop.trf.xlu0
      %v1216 = vpop.trf.xlu0
      %v1217 = vpop.trf.xlu0
      %v1218 = vpop.trf.xlu0
      %v1219 = vpop.trf.xlu0
      %1220 = vxpose.xlu0.c.b16.start [1/8] %v1063, 128
      %1221 = vxpose.xlu0.c.b16.cont [2/8] 0, 128
      %1222 = vxpose.xlu0.c.b16.cont [3/8] 0, 128
      %1223 = vxpose.xlu0.c.b16.cont [4/8] 0, 128
      %1224 = vxpose.xlu0.c.b16.cont [5/8] 0, 128
      %1225 = vxpose.xlu0.c.b16.cont [6/8] 0, 128
      %1226 = vxpose.xlu0.c.b16.cont [7/8] 0, 128
      %1227 = vxpose.xlu0.c.b16.end [8/8] 0, 128
      %v1228 = vpop.trf.xlu0
      %v1229 = vpop.trf.xlu0
      %v1230 = vpop.trf.xlu0
      %v1231 = vpop.trf.xlu0
      %v1232 = vpop.trf.xlu0
      %v1233 = vpop.trf.xlu0
      %v1234 = vpop.trf.xlu0
      %v1235 = vpop.trf.xlu0
      %1236 = vxpose.xlu0.c.b16.start [1/8] %v1119, 128
      %1237 = vxpose.xlu0.c.b16.cont [2/8] 0, 128
      %1238 = vxpose.xlu0.c.b16.cont [3/8] 0, 128
      %1239 = vxpose.xlu0.c.b16.cont [4/8] 0, 128
      %1240 = vxpose.xlu0.c.b16.cont [5/8] 0, 128
      %1241 = vxpose.xlu0.c.b16.cont [6/8] 0, 128
      %1242 = vxpose.xlu0.c.b16.cont [7/8] 0, 128
      %1243 = vxpose.xlu0.c.b16.end [8/8] 0, 128
      %v1244 = vpop.trf.xlu0
      %v1245 = vpop.trf.xlu0
      %v1246 = vpop.trf.xlu0
      %v1247 = vpop.trf.xlu0
      %v1248 = vpop.trf.xlu0
      %v1249 = vpop.trf.xlu0
      %v1250 = vpop.trf.xlu0
      %v1251 = vpop.trf.xlu0
      %1252 = vxpose.xlu0.c.b16.start [1/8] %v1055, 128
      %1253 = vxpose.xlu0.c.b16.cont [2/8] 0, 128
      %1254 = vxpose.xlu0.c.b16.cont [3/8] 0, 128
      %1255 = vxpose.xlu0.c.b16.cont [4/8] 0, 128
      %1256 = vxpose.xlu0.c.b16.cont [5/8] 0, 128
      %1257 = vxpose.xlu0.c.b16.cont [6/8] 0, 128
      %1258 = vxpose.xlu0.c.b16.cont [7/8] 0, 128
      %1259 = vxpose.xlu0.c.b16.end [8/8] 0, 128
      %v1260 = vpop.trf.xlu0
      %v1261 = vpop.trf.xlu0
      %v1262 = vpop.trf.xlu0
      %v1263 = vpop.trf.xlu0
      %v1264 = vpop.trf.xlu0
      %v1265 = vpop.trf.xlu0
      %v1266 = vpop.trf.xlu0
      %v1267 = vpop.trf.xlu0
      %1268 = vxpose.xlu0.c.b16.start [1/8] %v1111, 128
      %1269 = vxpose.xlu0.c.b16.cont [2/8] 0, 128
      %1270 = vxpose.xlu0.c.b16.cont [3/8] 0, 128
      %1271 = vxpose.xlu0.c.b16.cont [4/8] 0, 128
      %1272 = vxpose.xlu0.c.b16.cont [5/8] 0, 128
      %1273 = vxpose.xlu0.c.b16.cont [6/8] 0, 128
      %1274 = vxpose.xlu0.c.b16.cont [7/8] 0, 128
      %1275 = vxpose.xlu0.c.b16.end [8/8] 0, 128
      %v1276 = vpop.trf.xlu0
      %v1277 = vpop.trf.xlu0
      %v1278 = vpop.trf.xlu0
      %v1279 = vpop.trf.xlu0
      %v1280 = vpop.trf.xlu0
      %v1281 = vpop.trf.xlu0
      %v1282 = vpop.trf.xlu0
      %v1283 = vpop.trf.xlu0
      %1284 = vxpose.xlu0.c.b16.start [1/8] %v1065, 128
      %1285 = vxpose.xlu0.c.b16.cont [2/8] 0, 128
      %1286 = vxpose.xlu0.c.b16.cont [3/8] 0, 128
      %1287 = vxpose.xlu0.c.b16.cont [4/8] 0, 128
      %1288 = vxpose.xlu0.c.b16.cont [5/8] 0, 128
      %1289 = vxpose.xlu0.c.b16.cont [6/8] 0, 128
      %1290 = vxpose.xlu0.c.b16.cont [7/8] 0, 128
      %1291 = vxpose.xlu0.c.b16.end [8/8] 0, 128
      %v1292 = vpop.trf.xlu0
      %v1293 = vpop.trf.xlu0
      %v1294 = vpop.trf.xlu0
      %v1295 = vpop.trf.xlu0
      %v1296 = vpop.trf.xlu0
      %v1297 = vpop.trf.xlu0
      %v1298 = vpop.trf.xlu0
      %v1299 = vpop.trf.xlu0
      %1300 = vxpose.xlu0.c.b16.start [1/8] %v1121, 128
      %1301 = vxpose.xlu0.c.b16.cont [2/8] 0, 128
      %1302 = vxpose.xlu0.c.b16.cont [3/8] 0, 128
      %1303 = vxpose.xlu0.c.b16.cont [4/8] 0, 128
      %1304 = vxpose.xlu0.c.b16.cont [5/8] 0, 128
      %1305 = vxpose.xlu0.c.b16.cont [6/8] 0, 128
      %1306 = vxpose.xlu0.c.b16.cont [7/8] 0, 128
      %1307 = vxpose.xlu0.c.b16.end [8/8] 0, 128
      %v1308 = vpop.trf.xlu0
      %v1309 = vpop.trf.xlu0
      %v1310 = vpop.trf.xlu0
      %v1311 = vpop.trf.xlu0
      %v1312 = vpop.trf.xlu0
      %v1313 = vpop.trf.xlu0
      %v1314 = vpop.trf.xlu0
      %v1315 = vpop.trf.xlu0
      %1316 = vxpose.xlu0.c.b16.start [1/8] %v1059, 128
      %1317 = vxpose.xlu0.c.b16.cont [2/8] 0, 128
      %1318 = vxpose.xlu0.c.b16.cont [3/8] 0, 128
      %1319 = vxpose.xlu0.c.b16.cont [4/8] 0, 128
      %1320 = vxpose.xlu0.c.b16.cont [5/8] 0, 128
      %1321 = vxpose.xlu0.c.b16.cont [6/8] 0, 128
      %1322 = vxpose.xlu0.c.b16.cont [7/8] 0, 128
      %1323 = vxpose.xlu0.c.b16.end [8/8] 0, 128
      %v1324 = vpop.trf.xlu0
      %v1325 = vpop.trf.xlu0
      %v1326 = vpop.trf.xlu0
      %v1327 = vpop.trf.xlu0
      %v1328 = vpop.trf.xlu0
      %v1329 = vpop.trf.xlu0
      %v1330 = vpop.trf.xlu0
      %v1331 = vpop.trf.xlu0
      %1332 = vxpose.xlu0.c.b16.start [1/8] %v1115, 128
      %1333 = vxpose.xlu0.c.b16.cont [2/8] 0, 128
      %1334 = vxpose.xlu0.c.b16.cont [3/8] 0, 128
      %1335 = vxpose.xlu0.c.b16.cont [4/8] 0, 128
      %1336 = vxpose.xlu0.c.b16.cont [5/8] 0, 128
      %1337 = vxpose.xlu0.c.b16.cont [6/8] 0, 128
      %1338 = vxpose.xlu0.c.b16.cont [7/8] 0, 128
      %1339 = vxpose.xlu0.c.b16.end [8/8] 0, 128
      %v1340 = vpop.trf.xlu0
      %v1341 = vpop.trf.xlu0
      %v1342 = vpop.trf.xlu0
      %v1343 = vpop.trf.xlu0
      %v1344 = vpop.trf.xlu0
      %v1345 = vpop.trf.xlu0
      %v1346 = vpop.trf.xlu0
      %v1347 = vpop.trf.xlu0
      %1348 = vxpose.xlu0.c.b16.start [1/8] %v1067, 128
      %1349 = vxpose.xlu0.c.b16.cont [2/8] 0, 128
      %1350 = vxpose.xlu0.c.b16.cont [3/8] 0, 128
      %1351 = vxpose.xlu0.c.b16.cont [4/8] 0, 128
      %1352 = vxpose.xlu0.c.b16.cont [5/8] 0, 128
      %1353 = vxpose.xlu0.c.b16.cont [6/8] 0, 128
      %1354 = vxpose.xlu0.c.b16.cont [7/8] 0, 128
      %1355 = vxpose.xlu0.c.b16.end [8/8] 0, 128
      %v1356 = vpop.trf.xlu0
      %v1357 = vpop.trf.xlu0
      %v1358 = vpop.trf.xlu0
      %v1359 = vpop.trf.xlu0
      %v1360 = vpop.trf.xlu0
      %v1361 = vpop.trf.xlu0
      %v1362 = vpop.trf.xlu0
      %v1363 = vpop.trf.xlu0
      %1364 = vxpose.xlu0.c.b16.start [1/8] %v1123, 128
      %1365 = vxpose.xlu0.c.b16.cont [2/8] 0, 128
      %1366 = vxpose.xlu0.c.b16.cont [3/8] 0, 128
      %1367 = vxpose.xlu0.c.b16.cont [4/8] 0, 128
      %1368 = vxpose.xlu0.c.b16.cont [5/8] 0, 128
      %1369 = vxpose.xlu0.c.b16.cont [6/8] 0, 128
      %1370 = vxpose.xlu0.c.b16.cont [7/8] 0, 128
      %1371 = vxpose.xlu0.c.b16.end [8/8] 0, 128
      %v1372 = vpop.trf.xlu0
      %v1373 = vpop.trf.xlu0
      %v1374 = vpop.trf.xlu0
      %v1375 = vpop.trf.xlu0
      %v1376 = vpop.trf.xlu0
      %v1377 = vpop.trf.xlu0
      %v1378 = vpop.trf.xlu0
      %v1379 = vpop.trf.xlu0
      %v1380 = vrot.slane %v1196, 4
      %v1381 = vsel %vm810, %v1380, %v1132
      %v1383 = vunpack.c.l.s4 1983009808
      %v1384 = vunpack.c.0.s8 %v1383
      %v1385 = vperm.slane %v1381, %v1384
      %v1386 = vrot.slane %v1228, 4
      %v1387 = vsel %vm810, %v1386, %v1164
      %v1389 = vunpack.c.l.s4 1983009808
      %v1390 = vunpack.c.0.s8 %v1389
      %v1391 = vperm.slane %v1387, %v1390
      %v1392 = vrot.slane %v1324, 4
      %v1393 = vsel %vm810, %v1392, %v1260
      %v1395 = vunpack.c.l.s4 1983009808
      %v1396 = vunpack.c.0.s8 %v1395
      %v1397 = vperm.slane %v1393, %v1396
      %v1398 = vrot.slane %v1356, 4
      %v1399 = vsel %vm810, %v1398, %v1292
      %v1401 = vunpack.c.l.s4 1983009808
      %v1402 = vunpack.c.0.s8 %v1401
      %v1403 = vperm.slane %v1399, %v1402
      %v1404 = vrot.slane %v1391, 4
      %v1405 = vsel %vm810, %v1404, %v1385
      %v1407 = vunpack.c.l.s4 1934713408
      %v1408 = vunpack.c.0.s8 %v1407
      %v1409 = vperm.slane %v1405, %v1408
      %v1410 = vrot.slane %v1403, 4
      %v1411 = vsel %vm810, %v1410, %v1397
      %v1413 = vunpack.c.l.s4 1934713408
      %v1414 = vunpack.c.0.s8 %v1413
      %v1415 = vperm.slane %v1411, %v1414
      %v1416 = vrot.slane %v1415, 4
      %v1417 = vsel %vm810, %v1416, %v1409
      %v1418 = vrot.slane %v1212, 4
      %v1419 = vsel %vm810, %v1418, %v1148
      %v1421 = vunpack.c.l.s4 1983009808
      %v1422 = vunpack.c.0.s8 %v1421
      %v1423 = vperm.slane %v1419, %v1422
      %v1424 = vrot.slane %v1244, 4
      %v1425 = vsel %vm810, %v1424, %v1180
      %v1427 = vunpack.c.l.s4 1983009808
      %v1428 = vunpack.c.0.s8 %v1427
      %v1429 = vperm.slane %v1425, %v1428
      %v1430 = vrot.slane %v1340, 4
      %v1431 = vsel %vm810, %v1430, %v1276
      %v1433 = vunpack.c.l.s4 1983009808
      %v1434 = vunpack.c.0.s8 %v1433
      %v1435 = vperm.slane %v1431, %v1434
      %v1436 = vrot.slane %v1372, 4
      %v1437 = vsel %vm810, %v1436, %v1308
      %v1439 = vunpack.c.l.s4 1983009808
      %v1440 = vunpack.c.0.s8 %v1439
      %v1441 = vperm.slane %v1437, %v1440
      %v1442 = vrot.slane %v1429, 4
      %v1443 = vsel %vm810, %v1442, %v1423
      %v1445 = vunpack.c.l.s4 1934713408
      %v1446 = vunpack.c.0.s8 %v1445
      %v1447 = vperm.slane %v1443, %v1446
      %v1448 = vrot.slane %v1441, 4
      %v1449 = vsel %vm810, %v1448, %v1435
      %v1451 = vunpack.c.l.s4 1934713408
      %v1452 = vunpack.c.0.s8 %v1451
      %v1453 = vperm.slane %v1449, %v1452
      %v1454 = vrot.slane %v1453, 4
      %v1455 = vsel %vm810, %v1454, %v1447
      %v1458 = vpack.i.b16 %v1455, %v1417
      %v1460 = vshrl.u32 %v1417, 16
      %v1461 = vshrl.u32 %v1455, 16
      %v1462 = vpack.i.b16 %v1461, %v1460
      %vm1464 = vcmask 130048
      %v1466 = vsel %vm1464, %v848, 0
      %1468 = vmatpush.bf16.msra.mxu0 0
      %1469 = vmatpush.bf16.msra.mxu0 0
      %1470 = vmatpush.bf16.msra.mxu0 0
      %1471 = vmatpush.bf16.msra.mxu0 0
      %1472 = vmatpush.bf16.msra.mxu0 0
      %1473 = vmatpush.bf16.msra.mxu0 0
      %1474 = vmatpush.bf16.msra.mxu0 0
      %1475 = vmatpush.bf16.msra.mxu0 %v1458
      %1476 = vmatmul.bf16.gmra.mxu0 %v1466
      %v1477 = vpop.f32.mrf.mxu0
      %v1478 = vadd.f32 %v807, %v1477
      %v1479 = vpop.f32.mrf.mxu0
      %1480 = vdwg.mxu0
      %v1482 = vsel %vm1464, %v851, 0
      %1484 = vmatpush.bf16.msra.mxu0 0
      %1485 = vmatpush.bf16.msra.mxu0 0
      %1486 = vmatpush.bf16.msra.mxu0 0
      %1487 = vmatpush.bf16.msra.mxu0 0
      %1488 = vmatpush.bf16.msra.mxu0 0
      %1489 = vmatpush.bf16.msra.mxu0 0
      %1490 = vmatpush.bf16.msra.mxu0 0
      %1491 = vmatpush.bf16.msra.mxu0 %v1462
      %1492 = vmatmul.bf16.gmra.mxu0 %v1482
      %v1493 = vpop.f32.mrf.mxu0
      %v1494 = vadd.f32 %v807, %v1493
      %v1495 = vpop.f32.mrf.mxu0
      %1496 = vdwg.mxu0
      %vm1497 = vcmask 64512
      %v1498 = vsel %vm1497, %v1478, -inf
      %1499 = vmax.xlane.f32.xlu0 %v1498
      %v1500 = vpop.xlane.xlu0 %1499
      %v1501 = vsel %vm1497, %v1494, -inf
      %1502 = vmax.xlane.f32.xlu0 %v1501
      %v1503 = vpop.xlane.xlu0 %1502
      %v1504 = vsub.f32 %v1478, %v1500
      %v1505 = vsub.f32 %v1494, %v1503
      %v1506 = vmul.f32 %v1504, 1.442695
      %v1507 = vpow.pop %v1506
      %v1508 = vmul.f32 %v1505, 1.442695
      %v1509 = vpow.pop %v1508
      %v1510 = vsel %vm1497, %v1507, 0.0
      %1511 = vadd.xlane.f32.xlu0 %v1510
      %v1512 = vpop.xlane.xlu0 %1511
      %v1513 = vsel %vm1497, %v1509, 0.0
      %1514 = vadd.xlane.f32.xlu0 %v1513
      %v1515 = vpop.xlane.xlu0 %1514
      %v1516 = vrcp.pop %v1512
      %v1517 = vrcp.pop %v1515
      %v1518 = vmul.f32 %v1507, %v1516
      %v1519 = vmul.f32 %v1509, %v1517
      %v1520 = vpack.c.bf16 %v1518, %v1518
      %v1521 = vpack.c.bf16 %v1519, %v1519
      %v1522 = vpack.c.bf16 %v762, %v762
      %v1523 = vpack.c.bf16 %v780, %v780
      %v1524 = vpack.c.bf16 %v766, %v766
      %v1525 = vpack.c.bf16 %v782, %v782
      %v1526 = vpack.c.bf16 %v774, %v774
      %v1527 = vpack.c.bf16 %v784, %v784
      %v1528 = vpack.c.bf16 %v778, %v778
      %v1529 = vpack.c.bf16 %v786, %v786
      %1530 = vxpose.xlu0.c.b16.start [1/8] %v1522, 128
      %1531 = vxpose.xlu0.c.b16.cont [2/8] 0, 128
      %1532 = vxpose.xlu0.c.b16.cont [3/8] 0, 128
      %1533 = vxpose.xlu0.c.b16.cont [4/8] 0, 128
      %1534 = vxpose.xlu0.c.b16.cont [5/8] 0, 128
      %1535 = vxpose.xlu0.c.b16.cont [6/8] 0, 128
      %1536 = vxpose.xlu0.c.b16.cont [7/8] 0, 128
      %1537 = vxpose.xlu0.c.b16.end [8/8] 0, 128
      %v1538 = vpop.trf.xlu0
      %v1539 = vpop.trf.xlu0
      %v1540 = vpop.trf.xlu0
      %v1541 = vpop.trf.xlu0
      %v1542 = vpop.trf.xlu0
      %v1543 = vpop.trf.xlu0
      %v1544 = vpop.trf.xlu0
      %v1545 = vpop.trf.xlu0
      %1546 = vxpose.xlu0.c.b16.start [1/8] %v1523, 128
      %1547 = vxpose.xlu0.c.b16.cont [2/8] 0, 128
      %1548 = vxpose.xlu0.c.b16.cont [3/8] 0, 128
      %1549 = vxpose.xlu0.c.b16.cont [4/8] 0, 128
      %1550 = vxpose.xlu0.c.b16.cont [5/8] 0, 128
      %1551 = vxpose.xlu0.c.b16.cont [6/8] 0, 128
      %1552 = vxpose.xlu0.c.b16.cont [7/8] 0, 128
      %1553 = vxpose.xlu0.c.b16.end [8/8] 0, 128
      %v1554 = vpop.trf.xlu0
      %v1555 = vpop.trf.xlu0
      %v1556 = vpop.trf.xlu0
      %v1557 = vpop.trf.xlu0
      %v1558 = vpop.trf.xlu0
      %v1559 = vpop.trf.xlu0
      %v1560 = vpop.trf.xlu0
      %v1561 = vpop.trf.xlu0
      %1562 = vxpose.xlu0.c.b16.start [1/8] %v1524, 128
      %1563 = vxpose.xlu0.c.b16.cont [2/8] 0, 128
      %1564 = vxpose.xlu0.c.b16.cont [3/8] 0, 128
      %1565 = vxpose.xlu0.c.b16.cont [4/8] 0, 128
      %1566 = vxpose.xlu0.c.b16.cont [5/8] 0, 128
      %1567 = vxpose.xlu0.c.b16.cont [6/8] 0, 128
      %1568 = vxpose.xlu0.c.b16.cont [7/8] 0, 128
      %1569 = vxpose.xlu0.c.b16.end [8/8] 0, 128
      %v1570 = vpop.trf.xlu0
      %v1571 = vpop.trf.xlu0
      %v1572 = vpop.trf.xlu0
      %v1573 = vpop.trf.xlu0
      %v1574 = vpop.trf.xlu0
      %v1575 = vpop.trf.xlu0
      %v1576 = vpop.trf.xlu0
      %v1577 = vpop.trf.xlu0
      %1578 = vxpose.xlu0.c.b16.start [1/8] %v1525, 128
      %1579 = vxpose.xlu0.c.b16.cont [2/8] 0, 128
      %1580 = vxpose.xlu0.c.b16.cont [3/8] 0, 128
      %1581 = vxpose.xlu0.c.b16.cont [4/8] 0, 128
      %1582 = vxpose.xlu0.c.b16.cont [5/8] 0, 128
      %1583 = vxpose.xlu0.c.b16.cont [6/8] 0, 128
      %1584 = vxpose.xlu0.c.b16.cont [7/8] 0, 128
      %1585 = vxpose.xlu0.c.b16.end [8/8] 0, 128
      %v1586 = vpop.trf.xlu0
      %v1587 = vpop.trf.xlu0
      %v1588 = vpop.trf.xlu0
      %v1589 = vpop.trf.xlu0
      %v1590 = vpop.trf.xlu0
      %v1591 = vpop.trf.xlu0
      %v1592 = vpop.trf.xlu0
      %v1593 = vpop.trf.xlu0
      %1594 = vxpose.xlu0.c.b16.start [1/8] %v1526, 128
      %1595 = vxpose.xlu0.c.b16.cont [2/8] 0, 128
      %1596 = vxpose.xlu0.c.b16.cont [3/8] 0, 128
      %1597 = vxpose.xlu0.c.b16.cont [4/8] 0, 128
      %1598 = vxpose.xlu0.c.b16.cont [5/8] 0, 128
      %1599 = vxpose.xlu0.c.b16.cont [6/8] 0, 128
      %1600 = vxpose.xlu0.c.b16.cont [7/8] 0, 128
      %1601 = vxpose.xlu0.c.b16.end [8/8] 0, 128
      %v1602 = vpop.trf.xlu0
      %v1603 = vpop.trf.xlu0
      %v1604 = vpop.trf.xlu0
      %v1605 = vpop.trf.xlu0
      %v1606 = vpop.trf.xlu0
      %v1607 = vpop.trf.xlu0
      %v1608 = vpop.trf.xlu0
      %v1609 = vpop.trf.xlu0
      %1610 = vxpose.xlu0.c.b16.start [1/8] %v1527, 128
      %1611 = vxpose.xlu0.c.b16.cont [2/8] 0, 128
      %1612 = vxpose.xlu0.c.b16.cont [3/8] 0, 128
      %1613 = vxpose.xlu0.c.b16.cont [4/8] 0, 128
      %1614 = vxpose.xlu0.c.b16.cont [5/8] 0, 128
      %1615 = vxpose.xlu0.c.b16.cont [6/8] 0, 128
      %1616 = vxpose.xlu0.c.b16.cont [7/8] 0, 128
      %1617 = vxpose.xlu0.c.b16.end [8/8] 0, 128
      %v1618 = vpop.trf.xlu0
      %v1619 = vpop.trf.xlu0
      %v1620 = vpop.trf.xlu0
      %v1621 = vpop.trf.xlu0
      %v1622 = vpop.trf.xlu0
      %v1623 = vpop.trf.xlu0
      %v1624 = vpop.trf.xlu0
      %v1625 = vpop.trf.xlu0
      %1626 = vxpose.xlu0.c.b16.start [1/8] %v1528, 128
      %1627 = vxpose.xlu0.c.b16.cont [2/8] 0, 128
      %1628 = vxpose.xlu0.c.b16.cont [3/8] 0, 128
      %1629 = vxpose.xlu0.c.b16.cont [4/8] 0, 128
      %1630 = vxpose.xlu0.c.b16.cont [5/8] 0, 128
      %1631 = vxpose.xlu0.c.b16.cont [6/8] 0, 128
      %1632 = vxpose.xlu0.c.b16.cont [7/8] 0, 128
      %1633 = vxpose.xlu0.c.b16.end [8/8] 0, 128
      %v1634 = vpop.trf.xlu0
      %v1635 = vpop.trf.xlu0
      %v1636 = vpop.trf.xlu0
      %v1637 = vpop.trf.xlu0
      %v1638 = vpop.trf.xlu0
      %v1639 = vpop.trf.xlu0
      %v1640 = vpop.trf.xlu0
      %v1641 = vpop.trf.xlu0
      %1642 = vxpose.xlu0.c.b16.start [1/8] %v1529, 128
      %1643 = vxpose.xlu0.c.b16.cont [2/8] 0, 128
      %1644 = vxpose.xlu0.c.b16.cont [3/8] 0, 128
      %1645 = vxpose.xlu0.c.b16.cont [4/8] 0, 128
      %1646 = vxpose.xlu0.c.b16.cont [5/8] 0, 128
      %1647 = vxpose.xlu0.c.b16.cont [6/8] 0, 128
      %1648 = vxpose.xlu0.c.b16.cont [7/8] 0, 128
      %1649 = vxpose.xlu0.c.b16.end [8/8] 0, 128
      %v1650 = vpop.trf.xlu0
      %v1651 = vpop.trf.xlu0
      %v1652 = vpop.trf.xlu0
      %v1653 = vpop.trf.xlu0
      %v1654 = vpop.trf.xlu0
      %v1655 = vpop.trf.xlu0
      %v1656 = vpop.trf.xlu0
      %v1657 = vpop.trf.xlu0
      %v1660 = vpack.i.b16 %v1554, %v1538
      %v1662 = vshrl.u32 %v1538, 16
      %v1663 = vshrl.u32 %v1554, 16
      %v1664 = vpack.i.b16 %v1663, %v1662
      %v1668 = vpack.i.b16 %v1586, %v1570
      %v1670 = vshrl.u32 %v1570, 16
      %v1671 = vshrl.u32 %v1586, 16
      %v1672 = vpack.i.b16 %v1671, %v1670
      %v1676 = vpack.i.b16 %v1618, %v1602
      %v1678 = vshrl.u32 %v1602, 16
      %v1679 = vshrl.u32 %v1618, 16
      %v1680 = vpack.i.b16 %v1679, %v1678
      %v1684 = vpack.i.b16 %v1650, %v1634
      %v1686 = vshrl.u32 %v1634, 16
      %v1687 = vshrl.u32 %v1650, 16
      %v1688 = vpack.i.b16 %v1687, %v1686
      %v1690 = vrot.slane %v1676, 4
      %v1691 = vsel %vm810, %v1690, %v1660
      %v1692 = vrot.slane %v1660, 4
      %v1693 = vsel %vm810, %v1676, %v1692
      %v1695 = vunpack.c.l.s4 1983009808
      %v1696 = vunpack.c.0.s8 %v1695
      %v1697 = vperm.slane %v1691, %v1696
      %v1699 = vunpack.c.l.s4 1983009808
      %v1700 = vunpack.c.0.s8 %v1699
      %v1701 = vperm.slane %v1693, %v1700
      %v1702 = vrot.slane %v1684, 4
      %v1703 = vsel %vm810, %v1702, %v1668
      %v1704 = vrot.slane %v1668, 4
      %v1705 = vsel %vm810, %v1684, %v1704
      %v1707 = vunpack.c.l.s4 1983009808
      %v1708 = vunpack.c.0.s8 %v1707
      %v1709 = vperm.slane %v1703, %v1708
      %v1711 = vunpack.c.l.s4 1983009808
      %v1712 = vunpack.c.0.s8 %v1711
      %v1713 = vperm.slane %v1705, %v1712
      %v1714 = vrot.slane %v1709, 4
      %v1715 = vsel %vm810, %v1714, %v1697
      %v1716 = vrot.slane %v1697, 4
      %v1717 = vsel %vm810, %v1709, %v1716
      %v1719 = vunpack.c.l.s4 1934713408
      %v1720 = vunpack.c.0.s8 %v1719
      %v1721 = vperm.slane %v1715, %v1720
      %v1723 = vunpack.c.l.s4 1934713408
      %v1724 = vunpack.c.0.s8 %v1723
      %v1725 = vperm.slane %v1717, %v1724
      %v1726 = vrot.slane %v1713, 4
      %v1727 = vsel %vm810, %v1726, %v1701
      %v1728 = vrot.slane %v1701, 4
      %v1729 = vsel %vm810, %v1713, %v1728
      %v1731 = vunpack.c.l.s4 1934713408
      %v1732 = vunpack.c.0.s8 %v1731
      %v1733 = vperm.slane %v1727, %v1732
      %v1735 = vunpack.c.l.s4 1934713408
      %v1736 = vunpack.c.0.s8 %v1735
      %v1737 = vperm.slane %v1729, %v1736
      %v1738 = vrot.slane %v1721, 4
      %v1739 = vsel %vm810, 0, %v1738
      %v1740 = vrot.slane %v1725, 4
      %v1741 = vsel %vm810, 0, %v1740
      %v1742 = vrot.slane %v1733, 4
      %v1743 = vsel %vm810, 0, %v1742
      %v1744 = vrot.slane %v1737, 4
      %v1745 = vsel %vm810, 0, %v1744
      %v1746 = vrot.slane %v1680, 4
      %v1747 = vsel %vm810, %v1746, %v1664
      %v1748 = vrot.slane %v1664, 4
      %v1749 = vsel %vm810, %v1680, %v1748
      %v1751 = vunpack.c.l.s4 1983009808
      %v1752 = vunpack.c.0.s8 %v1751
      %v1753 = vperm.slane %v1747, %v1752
      %v1755 = vunpack.c.l.s4 1983009808
      %v1756 = vunpack.c.0.s8 %v1755
      %v1757 = vperm.slane %v1749, %v1756
      %v1758 = vrot.slane %v1688, 4
      %v1759 = vsel %vm810, %v1758, %v1672
      %v1760 = vrot.slane %v1672, 4
      %v1761 = vsel %vm810, %v1688, %v1760
      %v1763 = vunpack.c.l.s4 1983009808
      %v1764 = vunpack.c.0.s8 %v1763
      %v1765 = vperm.slane %v1759, %v1764
      %v1767 = vunpack.c.l.s4 1983009808
      %v1768 = vunpack.c.0.s8 %v1767
      %v1769 = vperm.slane %v1761, %v1768
      %v1770 = vrot.slane %v1765, 4
      %v1771 = vsel %vm810, %v1770, %v1753
      %v1772 = vrot.slane %v1753, 4
      %v1773 = vsel %vm810, %v1765, %v1772
      %v1775 = vunpack.c.l.s4 1934713408
      %v1776 = vunpack.c.0.s8 %v1775
      %v1777 = vperm.slane %v1771, %v1776
      %v1779 = vunpack.c.l.s4 1934713408
      %v1780 = vunpack.c.0.s8 %v1779
      %v1781 = vperm.slane %v1773, %v1780
      %v1782 = vrot.slane %v1769, 4
      %v1783 = vsel %vm810, %v1782, %v1757
      %v1784 = vrot.slane %v1757, 4
      %v1785 = vsel %vm810, %v1769, %v1784
      %v1787 = vunpack.c.l.s4 1934713408
      %v1788 = vunpack.c.0.s8 %v1787
      %v1789 = vperm.slane %v1783, %v1788
      %v1791 = vunpack.c.l.s4 1934713408
      %v1792 = vunpack.c.0.s8 %v1791
      %v1793 = vperm.slane %v1785, %v1792
      %v1794 = vrot.slane %v1777, 4
      %v1795 = vsel %vm810, 0, %v1794
      %v1796 = vrot.slane %v1781, 4
      %v1797 = vsel %vm810, 0, %v1796
      %v1798 = vrot.slane %v1789, 4
      %v1799 = vsel %vm810, 0, %v1798
      %v1800 = vrot.slane %v1793, 4
      %v1801 = vsel %vm810, 0, %v1800
      %1802 = vxpose.xlu0.c.b16.start [1/8] %v1721, 128
      %1803 = vxpose.xlu0.c.b16.cont [2/8] 0, 128
      %1804 = vxpose.xlu0.c.b16.cont [3/8] 0, 128
      %1805 = vxpose.xlu0.c.b16.cont [4/8] 0, 128
      %1806 = vxpose.xlu0.c.b16.cont [5/8] 0, 128
      %1807 = vxpose.xlu0.c.b16.cont [6/8] 0, 128
      %1808 = vxpose.xlu0.c.b16.cont [7/8] 0, 128
      %1809 = vxpose.xlu0.c.b16.end [8/8] 0, 128
      %v1810 = vpop.trf.xlu0
      %v1811 = vpop.trf.xlu0
      %v1812 = vpop.trf.xlu0
      %v1813 = vpop.trf.xlu0
      %v1814 = vpop.trf.xlu0
      %v1815 = vpop.trf.xlu0
      %v1816 = vpop.trf.xlu0
      %v1817 = vpop.trf.xlu0
      %1818 = vxpose.xlu0.c.b16.start [1/8] %v1777, 128
      %1819 = vxpose.xlu0.c.b16.cont [2/8] 0, 128
      %1820 = vxpose.xlu0.c.b16.cont [3/8] 0, 128
      %1821 = vxpose.xlu0.c.b16.cont [4/8] 0, 128
      %1822 = vxpose.xlu0.c.b16.cont [5/8] 0, 128
      %1823 = vxpose.xlu0.c.b16.cont [6/8] 0, 128
      %1824 = vxpose.xlu0.c.b16.cont [7/8] 0, 128
      %1825 = vxpose.xlu0.c.b16.end [8/8] 0, 128
      %v1826 = vpop.trf.xlu0
      %v1827 = vpop.trf.xlu0
      %v1828 = vpop.trf.xlu0
      %v1829 = vpop.trf.xlu0
      %v1830 = vpop.trf.xlu0
      %v1831 = vpop.trf.xlu0
      %v1832 = vpop.trf.xlu0
      %v1833 = vpop.trf.xlu0
      %1834 = vxpose.xlu0.c.b16.start [1/8] %v1739, 128
      %1835 = vxpose.xlu0.c.b16.cont [2/8] 0, 128
      %1836 = vxpose.xlu0.c.b16.cont [3/8] 0, 128
      %1837 = vxpose.xlu0.c.b16.cont [4/8] 0, 128
      %1838 = vxpose.xlu0.c.b16.cont [5/8] 0, 128
      %1839 = vxpose.xlu0.c.b16.cont [6/8] 0, 128
      %1840 = vxpose.xlu0.c.b16.cont [7/8] 0, 128
      %1841 = vxpose.xlu0.c.b16.end [8/8] 0, 128
      %v1842 = vpop.trf.xlu0
      %v1843 = vpop.trf.xlu0
      %v1844 = vpop.trf.xlu0
      %v1845 = vpop.trf.xlu0
      %v1846 = vpop.trf.xlu0
      %v1847 = vpop.trf.xlu0
      %v1848 = vpop.trf.xlu0
      %v1849 = vpop.trf.xlu0
      %1850 = vxpose.xlu0.c.b16.start [1/8] %v1795, 128
      %1851 = vxpose.xlu0.c.b16.cont [2/8] 0, 128
      %1852 = vxpose.xlu0.c.b16.cont [3/8] 0, 128
      %1853 = vxpose.xlu0.c.b16.cont [4/8] 0, 128
      %1854 = vxpose.xlu0.c.b16.cont [5/8] 0, 128
      %1855 = vxpose.xlu0.c.b16.cont [6/8] 0, 128
      %1856 = vxpose.xlu0.c.b16.cont [7/8] 0, 128
      %1857 = vxpose.xlu0.c.b16.end [8/8] 0, 128
      %v1858 = vpop.trf.xlu0
      %v1859 = vpop.trf.xlu0
      %v1860 = vpop.trf.xlu0
      %v1861 = vpop.trf.xlu0
      %v1862 = vpop.trf.xlu0
      %v1863 = vpop.trf.xlu0
      %v1864 = vpop.trf.xlu0
      %v1865 = vpop.trf.xlu0
      %1866 = vxpose.xlu0.c.b16.start [1/8] %v1725, 128
      %1867 = vxpose.xlu0.c.b16.cont [2/8] 0, 128
      %1868 = vxpose.xlu0.c.b16.cont [3/8] 0, 128
      %1869 = vxpose.xlu0.c.b16.cont [4/8] 0, 128
      %1870 = vxpose.xlu0.c.b16.cont [5/8] 0, 128
      %1871 = vxpose.xlu0.c.b16.cont [6/8] 0, 128
      %1872 = vxpose.xlu0.c.b16.cont [7/8] 0, 128
      %1873 = vxpose.xlu0.c.b16.end [8/8] 0, 128
      %v1874 = vpop.trf.xlu0
      %v1875 = vpop.trf.xlu0
      %v1876 = vpop.trf.xlu0
      %v1877 = vpop.trf.xlu0
      %v1878 = vpop.trf.xlu0
      %v1879 = vpop.trf.xlu0
      %v1880 = vpop.trf.xlu0
      %v1881 = vpop.trf.xlu0
      %1882 = vxpose.xlu0.c.b16.start [1/8] %v1781, 128
      %1883 = vxpose.xlu0.c.b16.cont [2/8] 0, 128
      %1884 = vxpose.xlu0.c.b16.cont [3/8] 0, 128
      %1885 = vxpose.xlu0.c.b16.cont [4/8] 0, 128
      %1886 = vxpose.xlu0.c.b16.cont [5/8] 0, 128
      %1887 = vxpose.xlu0.c.b16.cont [6/8] 0, 128
      %1888 = vxpose.xlu0.c.b16.cont [7/8] 0, 128
      %1889 = vxpose.xlu0.c.b16.end [8/8] 0, 128
      %v1890 = vpop.trf.xlu0
      %v1891 = vpop.trf.xlu0
      %v1892 = vpop.trf.xlu0
      %v1893 = vpop.trf.xlu0
      %v1894 = vpop.trf.xlu0
      %v1895 = vpop.trf.xlu0
      %v1896 = vpop.trf.xlu0
      %v1897 = vpop.trf.xlu0
      %1898 = vxpose.xlu0.c.b16.start [1/8] %v1741, 128
      %1899 = vxpose.xlu0.c.b16.cont [2/8] 0, 128
      %1900 = vxpose.xlu0.c.b16.cont [3/8] 0, 128
      %1901 = vxpose.xlu0.c.b16.cont [4/8] 0, 128
      %1902 = vxpose.xlu0.c.b16.cont [5/8] 0, 128
      %1903 = vxpose.xlu0.c.b16.cont [6/8] 0, 128
      %1904 = vxpose.xlu0.c.b16.cont [7/8] 0, 128
      %1905 = vxpose.xlu0.c.b16.end [8/8] 0, 128
      %v1906 = vpop.trf.xlu0
      %v1907 = vpop.trf.xlu0
      %v1908 = vpop.trf.xlu0
      %v1909 = vpop.trf.xlu0
      %v1910 = vpop.trf.xlu0
      %v1911 = vpop.trf.xlu0
      %v1912 = vpop.trf.xlu0
      %v1913 = vpop.trf.xlu0
      %1914 = vxpose.xlu0.c.b16.start [1/8] %v1797, 128
      %1915 = vxpose.xlu0.c.b16.cont [2/8] 0, 128
      %1916 = vxpose.xlu0.c.b16.cont [3/8] 0, 128
      %1917 = vxpose.xlu0.c.b16.cont [4/8] 0, 128
      %1918 = vxpose.xlu0.c.b16.cont [5/8] 0, 128
      %1919 = vxpose.xlu0.c.b16.cont [6/8] 0, 128
      %1920 = vxpose.xlu0.c.b16.cont [7/8] 0, 128
      %1921 = vxpose.xlu0.c.b16.end [8/8] 0, 128
      %v1922 = vpop.trf.xlu0
      %v1923 = vpop.trf.xlu0
      %v1924 = vpop.trf.xlu0
      %v1925 = vpop.trf.xlu0
      %v1926 = vpop.trf.xlu0
      %v1927 = vpop.trf.xlu0
      %v1928 = vpop.trf.xlu0
      %v1929 = vpop.trf.xlu0
      %1930 = vxpose.xlu0.c.b16.start [1/8] %v1733, 128
      %1931 = vxpose.xlu0.c.b16.cont [2/8] 0, 128
      %1932 = vxpose.xlu0.c.b16.cont [3/8] 0, 128
      %1933 = vxpose.xlu0.c.b16.cont [4/8] 0, 128
      %1934 = vxpose.xlu0.c.b16.cont [5/8] 0, 128
      %1935 = vxpose.xlu0.c.b16.cont [6/8] 0, 128
      %1936 = vxpose.xlu0.c.b16.cont [7/8] 0, 128
      %1937 = vxpose.xlu0.c.b16.end [8/8] 0, 128
      %v1938 = vpop.trf.xlu0
      %v1939 = vpop.trf.xlu0
      %v1940 = vpop.trf.xlu0
      %v1941 = vpop.trf.xlu0
      %v1942 = vpop.trf.xlu0
      %v1943 = vpop.trf.xlu0
      %v1944 = vpop.trf.xlu0
      %v1945 = vpop.trf.xlu0
      %1946 = vxpose.xlu0.c.b16.start [1/8] %v1789, 128
      %1947 = vxpose.xlu0.c.b16.cont [2/8] 0, 128
      %1948 = vxpose.xlu0.c.b16.cont [3/8] 0, 128
      %1949 = vxpose.xlu0.c.b16.cont [4/8] 0, 128
      %1950 = vxpose.xlu0.c.b16.cont [5/8] 0, 128
      %1951 = vxpose.xlu0.c.b16.cont [6/8] 0, 128
      %1952 = vxpose.xlu0.c.b16.cont [7/8] 0, 128
      %1953 = vxpose.xlu0.c.b16.end [8/8] 0, 128
      %v1954 = vpop.trf.xlu0
      %v1955 = vpop.trf.xlu0
      %v1956 = vpop.trf.xlu0
      %v1957 = vpop.trf.xlu0
      %v1958 = vpop.trf.xlu0
      %v1959 = vpop.trf.xlu0
      %v1960 = vpop.trf.xlu0
      %v1961 = vpop.trf.xlu0
      %1962 = vxpose.xlu0.c.b16.start [1/8] %v1743, 128
      %1963 = vxpose.xlu0.c.b16.cont [2/8] 0, 128
      %1964 = vxpose.xlu0.c.b16.cont [3/8] 0, 128
      %1965 = vxpose.xlu0.c.b16.cont [4/8] 0, 128
      %1966 = vxpose.xlu0.c.b16.cont [5/8] 0, 128
      %1967 = vxpose.xlu0.c.b16.cont [6/8] 0, 128
      %1968 = vxpose.xlu0.c.b16.cont [7/8] 0, 128
      %1969 = vxpose.xlu0.c.b16.end [8/8] 0, 128
      %v1970 = vpop.trf.xlu0
      %v1971 = vpop.trf.xlu0
      %v1972 = vpop.trf.xlu0
      %v1973 = vpop.trf.xlu0
      %v1974 = vpop.trf.xlu0
      %v1975 = vpop.trf.xlu0
      %v1976 = vpop.trf.xlu0
      %v1977 = vpop.trf.xlu0
      %1978 = vxpose.xlu0.c.b16.start [1/8] %v1799, 128
      %1979 = vxpose.xlu0.c.b16.cont [2/8] 0, 128
      %1980 = vxpose.xlu0.c.b16.cont [3/8] 0, 128
      %1981 = vxpose.xlu0.c.b16.cont [4/8] 0, 128
      %1982 = vxpose.xlu0.c.b16.cont [5/8] 0, 128
      %1983 = vxpose.xlu0.c.b16.cont [6/8] 0, 128
      %1984 = vxpose.xlu0.c.b16.cont [7/8] 0, 128
      %1985 = vxpose.xlu0.c.b16.end [8/8] 0, 128
      %v1986 = vpop.trf.xlu0
      %v1987 = vpop.trf.xlu0
      %v1988 = vpop.trf.xlu0
      %v1989 = vpop.trf.xlu0
      %v1990 = vpop.trf.xlu0
      %v1991 = vpop.trf.xlu0
      %v1992 = vpop.trf.xlu0
      %v1993 = vpop.trf.xlu0
      %1994 = vxpose.xlu0.c.b16.start [1/8] %v1737, 128
      %1995 = vxpose.xlu0.c.b16.cont [2/8] 0, 128
      %1996 = vxpose.xlu0.c.b16.cont [3/8] 0, 128
      %1997 = vxpose.xlu0.c.b16.cont [4/8] 0, 128
      %1998 = vxpose.xlu0.c.b16.cont [5/8] 0, 128
      %1999 = vxpose.xlu0.c.b16.cont [6/8] 0, 128
      %2000 = vxpose.xlu0.c.b16.cont [7/8] 0, 128
      %2001 = vxpose.xlu0.c.b16.end [8/8] 0, 128
      %v2002 = vpop.trf.xlu0
      %v2003 = vpop.trf.xlu0
      %v2004 = vpop.trf.xlu0
      %v2005 = vpop.trf.xlu0
      %v2006 = vpop.trf.xlu0
      %v2007 = vpop.trf.xlu0
      %v2008 = vpop.trf.xlu0
      %v2009 = vpop.trf.xlu0
      %2010 = vxpose.xlu0.c.b16.start [1/8] %v1793, 128
      %2011 = vxpose.xlu0.c.b16.cont [2/8] 0, 128
      %2012 = vxpose.xlu0.c.b16.cont [3/8] 0, 128
      %2013 = vxpose.xlu0.c.b16.cont [4/8] 0, 128
      %2014 = vxpose.xlu0.c.b16.cont [5/8] 0, 128
      %2015 = vxpose.xlu0.c.b16.cont [6/8] 0, 128
      %2016 = vxpose.xlu0.c.b16.cont [7/8] 0, 128
      %2017 = vxpose.xlu0.c.b16.end [8/8] 0, 128
      %v2018 = vpop.trf.xlu0
      %v2019 = vpop.trf.xlu0
      %v2020 = vpop.trf.xlu0
      %v2021 = vpop.trf.xlu0
      %v2022 = vpop.trf.xlu0
      %v2023 = vpop.trf.xlu0
      %v2024 = vpop.trf.xlu0
      %v2025 = vpop.trf.xlu0
      %2026 = vxpose.xlu0.c.b16.start [1/8] %v1745, 128
      %2027 = vxpose.xlu0.c.b16.cont [2/8] 0, 128
      %2028 = vxpose.xlu0.c.b16.cont [3/8] 0, 128
      %2029 = vxpose.xlu0.c.b16.cont [4/8] 0, 128
      %2030 = vxpose.xlu0.c.b16.cont [5/8] 0, 128
      %2031 = vxpose.xlu0.c.b16.cont [6/8] 0, 128
      %2032 = vxpose.xlu0.c.b16.cont [7/8] 0, 128
      %2033 = vxpose.xlu0.c.b16.end [8/8] 0, 128
      %v2034 = vpop.trf.xlu0
      %v2035 = vpop.trf.xlu0
      %v2036 = vpop.trf.xlu0
      %v2037 = vpop.trf.xlu0
      %v2038 = vpop.trf.xlu0
      %v2039 = vpop.trf.xlu0
      %v2040 = vpop.trf.xlu0
      %v2041 = vpop.trf.xlu0
      %2042 = vxpose.xlu0.c.b16.start [1/8] %v1801, 128
      %2043 = vxpose.xlu0.c.b16.cont [2/8] 0, 128
      %2044 = vxpose.xlu0.c.b16.cont [3/8] 0, 128
      %2045 = vxpose.xlu0.c.b16.cont [4/8] 0, 128
      %2046 = vxpose.xlu0.c.b16.cont [5/8] 0, 128
      %2047 = vxpose.xlu0.c.b16.cont [6/8] 0, 128
      %2048 = vxpose.xlu0.c.b16.cont [7/8] 0, 128
      %2049 = vxpose.xlu0.c.b16.end [8/8] 0, 128
      %v2050 = vpop.trf.xlu0
      %v2051 = vpop.trf.xlu0
      %v2052 = vpop.trf.xlu0
      %v2053 = vpop.trf.xlu0
      %v2054 = vpop.trf.xlu0
      %v2055 = vpop.trf.xlu0
      %v2056 = vpop.trf.xlu0
      %v2057 = vpop.trf.xlu0
      %v2058 = vrot.slane %v1874, 4
      %v2059 = vsel %vm810, %v2058, %v1810
      %v2061 = vunpack.c.l.s4 1983009808
      %v2062 = vunpack.c.0.s8 %v2061
      %v2063 = vperm.slane %v2059, %v2062
      %v2064 = vrot.slane %v1906, 4
      %v2065 = vsel %vm810, %v2064, %v1842
      %v2067 = vunpack.c.l.s4 1983009808
      %v2068 = vunpack.c.0.s8 %v2067
      %v2069 = vperm.slane %v2065, %v2068
      %v2070 = vrot.slane %v2002, 4
      %v2071 = vsel %vm810, %v2070, %v1938
      %v2073 = vunpack.c.l.s4 1983009808
      %v2074 = vunpack.c.0.s8 %v2073
      %v2075 = vperm.slane %v2071, %v2074
      %v2076 = vrot.slane %v2034, 4
      %v2077 = vsel %vm810, %v2076, %v1970
      %v2079 = vunpack.c.l.s4 1983009808
      %v2080 = vunpack.c.0.s8 %v2079
      %v2081 = vperm.slane %v2077, %v2080
      %v2082 = vrot.slane %v2069, 4
      %v2083 = vsel %vm810, %v2082, %v2063
      %v2085 = vunpack.c.l.s4 1934713408
      %v2086 = vunpack.c.0.s8 %v2085
      %v2087 = vperm.slane %v2083, %v2086
      %v2088 = vrot.slane %v2081, 4
      %v2089 = vsel %vm810, %v2088, %v2075
      %v2091 = vunpack.c.l.s4 1934713408
      %v2092 = vunpack.c.0.s8 %v2091
      %v2093 = vperm.slane %v2089, %v2092
      %v2094 = vrot.slane %v2093, 4
      %v2095 = vsel %vm810, %v2094, %v2087
      %v2096 = vrot.slane %v1890, 4
      %v2097 = vsel %vm810, %v2096, %v1826
      %v2099 = vunpack.c.l.s4 1983009808
      %v2100 = vunpack.c.0.s8 %v2099
      %v2101 = vperm.slane %v2097, %v2100
      %v2102 = vrot.slane %v1922, 4
      %v2103 = vsel %vm810, %v2102, %v1858
      %v2105 = vunpack.c.l.s4 1983009808
      %v2106 = vunpack.c.0.s8 %v2105
      %v2107 = vperm.slane %v2103, %v2106
      %v2108 = vrot.slane %v2018, 4
      %v2109 = vsel %vm810, %v2108, %v1954
      %v2111 = vunpack.c.l.s4 1983009808
      %v2112 = vunpack.c.0.s8 %v2111
      %v2113 = vperm.slane %v2109, %v2112
      %v2114 = vrot.slane %v2050, 4
      %v2115 = vsel %vm810, %v2114, %v1986
      %v2117 = vunpack.c.l.s4 1983009808
      %v2118 = vunpack.c.0.s8 %v2117
      %v2119 = vperm.slane %v2115, %v2118
      %v2120 = vrot.slane %v2107, 4
      %v2121 = vsel %vm810, %v2120, %v2101
      %v2123 = vunpack.c.l.s4 1934713408
      %v2124 = vunpack.c.0.s8 %v2123
      %v2125 = vperm.slane %v2121, %v2124
      %v2126 = vrot.slane %v2119, 4
      %v2127 = vsel %vm810, %v2126, %v2113
      %v2129 = vunpack.c.l.s4 1934713408
      %v2130 = vunpack.c.0.s8 %v2129
      %v2131 = vperm.slane %v2127, %v2130
      %v2132 = vrot.slane %v2131, 4
      %v2133 = vsel %vm810, %v2132, %v2125
      %v2136 = vpack.i.b16 %v2133, %v2095
      %v2137 = vshrl.u32 %v2095, 16
      %v2138 = vshrl.u32 %v2133, 16
      %v2139 = vpack.i.b16 %v2138, %v2137
      %v2141 = vsel %vm1497, %v2136, 0
      %v2144 = vsel %vm1497, %v1520, 0
      %2146 = vmatpush.bf16.xpose.msra.mxu0 0
      %2147 = vmatpush.bf16.xpose.msra.mxu0 0
      %2148 = vmatpush.bf16.xpose.msra.mxu0 0
      %2149 = vmatpush.bf16.xpose.msra.mxu0 0
      %2150 = vmatpush.bf16.xpose.msra.mxu0 0
      %2151 = vmatpush.bf16.xpose.msra.mxu0 0
      %2152 = vmatpush.bf16.xpose.msra.mxu0 0
      %2153 = vmatpush.bf16.xpose.msra.mxu0 %v2144
      %2154 = vmatmul.bf16.gmra.mxu0 %v2141
      %v2155 = vpop.f32.mrf.mxu0
      %v2156 = vadd.f32 0.0, %v2155
      %v2157 = vpop.f32.mrf.mxu0
      %v2158 = vadd.f32 0.0, %v2157
      %2159 = vdwg.mxu0
      %v2161 = vsel %vm1497, %v2139, 0
      %v2164 = vsel %vm1497, %v1521, 0
      %2166 = vmatpush.bf16.xpose.msra.mxu0 0
      %2167 = vmatpush.bf16.xpose.msra.mxu0 0
      %2168 = vmatpush.bf16.xpose.msra.mxu0 0
      %2169 = vmatpush.bf16.xpose.msra.mxu0 0
      %2170 = vmatpush.bf16.xpose.msra.mxu0 0
      %2171 = vmatpush.bf16.xpose.msra.mxu0 0
      %2172 = vmatpush.bf16.xpose.msra.mxu0 0
      %2173 = vmatpush.bf16.xpose.msra.mxu0 %v2164
      %2174 = vmatmul.bf16.gmra.mxu0 %v2161
      %v2175 = vpop.f32.mrf.mxu0
      %v2176 = vadd.f32 0.0, %v2175
      %v2177 = vpop.f32.mrf.mxu0
      %v2178 = vadd.f32 0.0, %v2177
      %2179 = vdwg.mxu0
      %2180 = vxpose.xlu0.b32.start [1/16] %v2156, 128
      %2181 = vxpose.xlu0.b32.cont [2/16] %v2158, 128
      %2182 = vxpose.xlu0.b32.cont [3/16] 0.0, 128
      %2183 = vxpose.xlu0.b32.cont [4/16] 0.0, 128
      %2184 = vxpose.xlu0.b32.cont [5/16] 0.0, 128
      %2185 = vxpose.xlu0.b32.cont [6/16] 0.0, 128
      %2186 = vxpose.xlu0.b32.cont [7/16] 0.0, 128
      %2187 = vxpose.xlu0.b32.cont [8/16] 0.0, 128
      %2188 = vxpose.xlu0.b32.cont [9/16] 0.0, 128
      %2189 = vxpose.xlu0.b32.cont [10/16] 0.0, 128
      %2190 = vxpose.xlu0.b32.cont [11/16] 0.0, 128
      %2191 = vxpose.xlu0.b32.cont [12/16] 0.0, 128
      %2192 = vxpose.xlu0.b32.cont [13/16] 0.0, 128
      %2193 = vxpose.xlu0.b32.cont [14/16] 0.0, 128
      %2194 = vxpose.xlu0.b32.cont [15/16] 0.0, 128
      %2195 = vxpose.xlu0.b32.end [16/16] 0.0, 128
      %v2196 = vpop.trf.xlu0
      %v2197 = vpop.trf.xlu0
      %v2198 = vpop.trf.xlu0
      %v2199 = vpop.trf.xlu0
      %v2200 = vpop.trf.xlu0
      %v2201 = vpop.trf.xlu0
      %v2202 = vpop.trf.xlu0
      %v2203 = vpop.trf.xlu0
      %v2204 = vpop.trf.xlu0
      %v2205 = vpop.trf.xlu0
      %v2206 = vpop.trf.xlu0
      %v2207 = vpop.trf.xlu0
      %v2208 = vpop.trf.xlu0
      %v2209 = vpop.trf.xlu0
      %v2210 = vpop.trf.xlu0
      %v2211 = vpop.trf.xlu0
      %2212 = vxpose.xlu0.b32.start [1/16] %v2176, 128
      %2213 = vxpose.xlu0.b32.cont [2/16] %v2178, 128
      %2214 = vxpose.xlu0.b32.cont [3/16] 0.0, 128
      %2215 = vxpose.xlu0.b32.cont [4/16] 0.0, 128
      %2216 = vxpose.xlu0.b32.cont [5/16] 0.0, 128
      %2217 = vxpose.xlu0.b32.cont [6/16] 0.0, 128
      %2218 = vxpose.xlu0.b32.cont [7/16] 0.0, 128
      %2219 = vxpose.xlu0.b32.cont [8/16] 0.0, 128
      %2220 = vxpose.xlu0.b32.cont [9/16] 0.0, 128
      %2221 = vxpose.xlu0.b32.cont [10/16] 0.0, 128
      %2222 = vxpose.xlu0.b32.cont [11/16] 0.0, 128
      %2223 = vxpose.xlu0.b32.cont [12/16] 0.0, 128
      %2224 = vxpose.xlu0.b32.cont [13/16] 0.0, 128
      %2225 = vxpose.xlu0.b32.cont [14/16] 0.0, 128
      %2226 = vxpose.xlu0.b32.cont [15/16] 0.0, 128
      %2227 = vxpose.xlu0.b32.end [16/16] 0.0, 128
      %v2228 = vpop.trf.xlu0
      %v2229 = vpop.trf.xlu0
      %v2230 = vpop.trf.xlu0
      %v2231 = vpop.trf.xlu0
      %v2232 = vpop.trf.xlu0
      %v2233 = vpop.trf.xlu0
      %v2234 = vpop.trf.xlu0
      %v2235 = vpop.trf.xlu0
      %v2236 = vpop.trf.xlu0
      %v2237 = vpop.trf.xlu0
      %v2238 = vpop.trf.xlu0
      %v2239 = vpop.trf.xlu0
      %v2240 = vpop.trf.xlu0
      %v2241 = vpop.trf.xlu0
      %v2242 = vpop.trf.xlu0
      %v2243 = vpop.trf.xlu0
      %v2244 = vrot.slane %v2196, 4
      %v2245 = vsel %vm616, 0.0, %v2244
      %v2247 = vunpack.c.l.s4 1983009808
      %v2248 = vunpack.c.0.s8 %v2247
      %v2249 = vperm.slane %v2196, %v2248
      %v2251 = vunpack.c.l.s4 1983009808
      %v2252 = vunpack.c.0.s8 %v2251
      %v2253 = vperm.slane %v2245, %v2252
      %v2254 = vrot.slane %v2228, 4
      %v2255 = vsel %vm616, 0.0, %v2254
      %v2257 = vunpack.c.l.s4 1983009808
      %v2258 = vunpack.c.0.s8 %v2257
      %v2259 = vperm.slane %v2228, %v2258
      %v2261 = vunpack.c.l.s4 1983009808
      %v2262 = vunpack.c.0.s8 %v2261
      %v2263 = vperm.slane %v2255, %v2262
      %v2264 = vrot.slane %v2259, 4
      %v2265 = vsel %vm616, %v2264, %v2249
      %v2266 = vrot.slane %v2249, 4
      %v2267 = vsel %vm616, %v2259, %v2266
      %v2269 = vunpack.c.l.s4 1934713408
      %v2270 = vunpack.c.0.s8 %v2269
      %v2271 = vperm.slane %v2265, %v2270
      %v2273 = vunpack.c.l.s4 1934713408
      %v2274 = vunpack.c.0.s8 %v2273
      %v2275 = vperm.slane %v2267, %v2274
      %v2276 = vrot.slane %v2263, 4
      %v2277 = vsel %vm616, %v2276, %v2253
      %v2278 = vrot.slane %v2253, 4
      %v2279 = vsel %vm616, %v2263, %v2278
      %v2281 = vunpack.c.l.s4 1934713408
      %v2282 = vunpack.c.0.s8 %v2281
      %v2283 = vperm.slane %v2277, %v2282
      %v2285 = vunpack.c.l.s4 1934713408
      %v2286 = vunpack.c.0.s8 %v2285
      %v2287 = vperm.slane %v2279, %v2286
      %v2288 = vrot.slane %v2271, 4
      %v2289 = vsel %vm616, 0.0, %v2288
      %v2290 = vrot.slane %v2275, 4
      %v2291 = vsel %vm616, 0.0, %v2290
      %v2292 = vrot.slane %v2283, 4
      %v2293 = vsel %vm616, 0.0, %v2292
      %v2294 = vrot.slane %v2287, 4
      %v2295 = vsel %vm616, 0.0, %v2294
      %v2296 = vsel %vm616, %v2290, %v2271
      %v2298 = vunpack.c.l.s4 1983009808
      %v2299 = vunpack.c.0.s8 %v2298
      %v2300 = vperm.slane %v2296, %v2299
      %v2301 = vrot.slane %v2291, 4
      %v2302 = vsel %vm616, %v2301, %v2289
      %v2304 = vunpack.c.l.s4 1983009808
      %v2305 = vunpack.c.0.s8 %v2304
      %v2306 = vperm.slane %v2302, %v2305
      %v2307 = vsel %vm616, %v2294, %v2283
      %v2309 = vunpack.c.l.s4 1983009808
      %v2310 = vunpack.c.0.s8 %v2309
      %v2311 = vperm.slane %v2307, %v2310
      %v2312 = vrot.slane %v2295, 4
      %v2313 = vsel %vm616, %v2312, %v2293
      %v2315 = vunpack.c.l.s4 1983009808
      %v2316 = vunpack.c.0.s8 %v2315
      %v2317 = vperm.slane %v2313, %v2316
      %v2318 = vrot.slane %v2306, 4
      %v2319 = vsel %vm616, %v2318, %v2300
      %v2321 = vunpack.c.l.s4 1934713408
      %v2322 = vunpack.c.0.s8 %v2321
      %v2323 = vperm.slane %v2319, %v2322
      %v2324 = vrot.slane %v2317, 4
      %v2325 = vsel %vm616, %v2324, %v2311
      %v2327 = vunpack.c.l.s4 1934713408
      %v2328 = vunpack.c.0.s8 %v2327
      %v2329 = vperm.slane %v2325, %v2328
      %v2330 = vrot.slane %v2329, 4
      %v2331 = vsel %vm616, %v2330, %v2323
      %v2332 = vrot.slane %v2323, 4
      %v2333 = vsel %vm616, %v2329, %v2332
      %2335 = vrot.lane.b32.xlu0 %v2333, 16
      %v2336 = vpop.permute.xlu0 %2335
      %v2338 = vsel %vm1464, %v2331, %v2336
      %v2339 = vpack.c.bf16 %v2338, %v2338
      %v2340 = vld [vmem:[%s8] sm:$0xf]
      %v2341 = vld [vmem:[%s8 + $0x4] sm:$0xf]
      %v2342 = vld [vmem:[%s8 + $0x8] sm:$0xf]
      %v2343 = vld [vmem:[%s8 + $0xc] sm:$0xf]
      %v2344 = vld [vmem:[%s9] sm:$0x1]
      %v2346 = vperm.slane %v2344, 0
      %v2352 = vunpack.c.l.b16 %v2340
      %v2353 = vunpack.c.l.b16 %v2341
      %v2354 = vunpack.c.l.b16 %v2342
      %v2355 = vunpack.c.l.b16 %v2343
      %v2356 = vpack.c.b16 %v2353, %v2352
      %v2357 = vpack.c.b16 %v2355, %v2354
      %v2361 = vsel %vm535, %v2339, 0
      %2363 = vmatpush.bf16.msra.mxu0 0
      %2364 = vmatpush.bf16.msra.mxu0 0
      %2365 = vmatpush.bf16.msra.mxu0 0
      %2366 = vmatpush.bf16.msra.mxu0 0
      %2367 = vmatpush.bf16.msra.mxu0 0
      %2368 = vmatpush.bf16.msra.mxu0 0
      %2369 = vmatpush.bf16.msra.mxu0 %v2357
      %2370 = vmatpush.bf16.msra.mxu0 %v2356
      %2371 = vmatmul.bf16.gmra.mxu0 %v2361
      %v2372 = vpop.f32.mrf.mxu0
      %v2373 = vadd.f32 %v2346, %v2372
      %v2374 = vpop.f32.mrf.mxu0
      %2375 = vdwg.mxu0
      %v2376 = vadd.f32 %v572, %v2373
      %v2377 = vld [vmem:[%s4] sm:$0x1]
      %v2378 = vld [vmem:[%s5] sm:$0x1]
      %v2379 = vsel %vm535, %v2376, 0.0
      %2380 = vadd.xlane.f32.xlu0 %v2379
      %v2381 = vpop.xlane.xlu0 %2380
      %v2382 = vmul.f32 %v2381, %v545
      %v2383 = vsub.f32 %v2376, %v2382
      %v2384 = vmul.f32 %v2383, %v2383
      %v2385 = vsel %vm535, %v2384, 0.0
      %2386 = vadd.xlane.f32.xlu0 %v2385
      %v2387 = vpop.xlane.xlu0 %2386
      %v2388 = vmul.f32 %v2387, %v545
      %v2389 = vadd.f32 %v2388, 1e-12
      %v2390 = vrsqrt.pop %v2389
      %v2391 = vmul.f32 %v2390, %v2389
      %v2392 = vmul.f32 %v2391, %v2390
      %v2393 = vmul.f32 0.5, %v2392
      %v2394 = vsub.f32 1.5, %v2393
      %v2395 = vmul.f32 %v2390, %v2394
      %vm2396 = vweird.f32 %v2389
      %vm2397 = vweird.f32 %v2390
      %vm2398 = vmor %vm2396, %vm2397
      %v2399 = vsel %vm2398, %v2390, %v2395
      %v2400 = vmul.f32 %v2383, %v2399
      %v2402 = vperm.slane %v2377, 0
      %v2404 = vmul.f32 %v2400, %v2402
      %v2406 = vperm.slane %v2378, 0
      %v2408 = vadd.f32 %v2404, %v2406
      %v2409 = vpack.c.bf16 %v2408, %v2408
      %v2410 = vld [vmem:[%s12] sm:$0xf]
      %v2411 = vld [vmem:[%s12 + $0x4] sm:$0xf]
      %v2412 = vld [vmem:[%s12 + $0x8] sm:$0xf]
      %v2413 = vld [vmem:[%s12 + $0xc] sm:$0xf]
      %v2414 = vld [vmem:[%s13] sm:$0x1]
      %v2416 = vperm.slane %v2414, 0
      %v2422 = vunpack.c.l.b16 %v2410
      %v2423 = vunpack.c.l.b16 %v2411
      %v2424 = vunpack.c.l.b16 %v2412
      %v2425 = vunpack.c.l.b16 %v2413
      %v2426 = vpack.c.b16 %v2423, %v2422
      %v2427 = vpack.c.b16 %v2425, %v2424
      %v2431 = vsel %vm535, %v2409, 0
      %2433 = vmatpush.bf16.msra.mxu0 0
      %2434 = vmatpush.bf16.msra.mxu0 0
      %2435 = vmatpush.bf16.msra.mxu0 0
      %2436 = vmatpush.bf16.msra.mxu0 0
      %2437 = vmatpush.bf16.msra.mxu0 0
      %2438 = vmatpush.bf16.msra.mxu0 0
      %2439 = vmatpush.bf16.msra.mxu0 %v2427
      %2440 = vmatpush.bf16.msra.mxu0 %v2426
      %2441 = vmatmul.bf16.gmra.mxu0 %v2431
      %v2442 = vpop.f32.mrf.mxu0
      %v2443 = vadd.f32 %v2416, %v2442
      %v2444 = vpop.f32.mrf.mxu0
      %2445 = vdwg.mxu0
      %v2446 = vmul.f32 %v2443, %v2443
      %v2447 = vmul.f32 %v2443, %v2446
      %v2448 = vmul.f32 %v2447, 0.044715
      %v2449 = vadd.f32 %v2443, %v2448
      %v2450 = vmul.f32 %v2449, 0.7978846
      %v2451 = vtanh.pop %v2450
      %v2452 = vadd.f32 %v2451, 1.0
      %v2453 = vmul.f32 %v2452, 0.5
      %v2454 = vmul.f32 %v2443, %v2453
      %v2455 = vpack.c.bf16 %v2454, %v2454
      %v2456 = vld [vmem:[%s14] sm:$0xf]
      %v2457 = vld [vmem:[%s14 + $0x4] sm:$0xf]
      %v2458 = vld [vmem:[%s14 + $0x8] sm:$0xf]
      %v2459 = vld [vmem:[%s14 + $0xc] sm:$0xf]
      %v2460 = vld [vmem:[%s14 + $0x10] sm:$0xf]
      %v2461 = vld [vmem:[%s14 + $0x14] sm:$0xf]
      %v2462 = vld [vmem:[%s14 + $0x18] sm:$0xf]
      %v2463 = vld [vmem:[%s14 + $0x1c] sm:$0xf]
      %v2464 = vld [vmem:[%s15] sm:$0x1]
      %v2466 = vperm.slane %v2464, 0
      %v2476 = vunpack.c.l.b16 %v2456
      %v2477 = vunpack.c.l.b16 %v2457
      %v2478 = vunpack.c.l.b16 %v2458
      %v2479 = vunpack.c.l.b16 %v2459
      %v2480 = vunpack.c.l.b16 %v2460
      %v2481 = vunpack.c.l.b16 %v2461
      %v2482 = vunpack.c.l.b16 %v2462
      %v2483 = vunpack.c.l.b16 %v2463
      %v2484 = vpack.c.b16 %v2477, %v2476
      %v2485 = vpack.c.b16 %v2479, %v2478
      %v2486 = vpack.c.b16 %v2481, %v2480
      %v2487 = vpack.c.b16 %v2483, %v2482
      %vm2492 = vcmask 523264
      %v2494 = vsel %vm2492, %v2455, 0
      %2496 = vmatpush.bf16.msra.mxu0 0
      %2497 = vmatpush.bf16.msra.mxu0 0
      %2498 = vmatpush.bf16.msra.mxu0 0
      %2499 = vmatpush.bf16.msra.mxu0 0
      %2500 = vmatpush.bf16.msra.mxu0 %v2487
      %2501 = vmatpush.bf16.msra.mxu0 %v2486
      %2502 = vmatpush.bf16.msra.mxu0 %v2485
      %2503 = vmatpush.bf16.msra.mxu0 %v2484
      %2504 = vmatmul.bf16.gmra.mxu0 %v2494
      %v2505 = vpop.f32.mrf.mxu0
      %v2506 = vadd.f32 %v2466, %v2505
      %v2507 = vpop.f32.mrf.mxu0
      %2508 = vdwg.mxu0
      %v2509 = vadd.f32 %v2408, %v2506
      %v2510 = vld [vmem:[%s10] sm:$0x1]
      %v2511 = vld [vmem:[%s11] sm:$0x1]
      %v2512 = vsel %vm535, %v2509, 0.0
      %2513 = vadd.xlane.f32.xlu0 %v2512
      %v2514 = vpop.xlane.xlu0 %2513
      %v2515 = vmul.f32 %v2514, %v545
      %v2516 = vsub.f32 %v2509, %v2515
      %v2517 = vmul.f32 %v2516, %v2516
      %v2518 = vsel %vm535, %v2517, 0.0
      %2519 = vadd.xlane.f32.xlu0 %v2518
      %v2520 = vpop.xlane.xlu0 %2519
      %v2521 = vmul.f32 %v2520, %v545
      %v2522 = vadd.f32 %v2521, 1e-12
      %v2523 = vrsqrt.pop %v2522
      %v2524 = vmul.f32 %v2523, %v2522
      %v2525 = vmul.f32 %v2524, %v2523
      %v2526 = vmul.f32 0.5, %v2525
      %v2527 = vsub.f32 1.5, %v2526
      %v2528 = vmul.f32 %v2523, %v2527
      %vm2529 = vweird.f32 %v2522
      %vm2530 = vweird.f32 %v2523
      %vm2531 = vmor %vm2529, %vm2530
      %v2532 = vsel %vm2531, %v2523, %v2528
      %v2533 = vmul.f32 %v2516, %v2532
      %v2535 = vperm.slane %v2510, 0
      %v2537 = vmul.f32 %v2533, %v2535
      %v2539 = vperm.slane %v2511, 0
      %v2541 = vadd.f32 %v2537, %v2539
      %v2542 = vpack.c.bf16 %v2541, %v2541
      %vm2543 = vcmask 257024
      %2544 = vst.msk [vmem:[%s530] sm:$0xf] %vm2543, %v2542
      %p2545 = scmp.lt.s32.totalorder %s27, 1
      %s2546 = scalar_select %p2545, %s27, 1
      %s2547 = smul.addr %s2546, 4
      %s2548 = scalar_lea.vmem %s16, %s2547
      // Predicated region
      $region85: #{multimodal_classifier_forward.3} parent=83 // pred_check
        %p2549 = pneg %p391
      $region86: #{multimodal_classifier_forward.3} parent=83 // pred_check_branch
        %2551 = sbr.rel (%p2549) target = $region88
      $region87: #{multimodal_classifier_forward.3} parent=83 // pred_region
        _
      $region88: #{multimodal_classifier_forward.3} parent=83 // pred_fallthru
        _
    $region84: #{multimodal_classifier_forward.3} parent=5 // pred_fallthru
      _
    %p2552 = scmp.le.s32.totalorder 2, %s22
    // Predicated region
    $region89: #{multimodal_classifier_forward.3} parent=5 // pred_check
      %p2553 = pneg %p2552
    $region90: #{multimodal_classifier_forward.3} parent=5 // pred_check_branch
      %2555 = sbr.rel (%p2553) target = $region92
    $region91: #{multimodal_classifier_forward.3} parent=5 // pred_region
      %s2556 = ssub.s32 %s22, 2
      // Predicated region
      $region93: #{multimodal_classifier_forward.3} parent=91 // pred_check
        %p2557 = pneg %p397
      $region94: #{multimodal_classifier_forward.3} parent=91 // pred_check_branch
        %2559 = sbr.rel (%p2557) target = $region96
      $region95: #{multimodal_classifier_forward.3} parent=91 // pred_region
        %p2560 = scmp.lt.s32.totalorder %s28, 1
        %s2561 = scalar_select %p2560, %s28, 1
        %s2562 = smul.addr %s2561, 4
        %s2563 = scalar_lea.vmem %s16, %s2562
      $region96: #{multimodal_classifier_forward.3} parent=91 // pred_fallthru
        _
    $region92: #{multimodal_classifier_forward.3} parent=5 // pred_fallthru
      _
  $region6: #{multimodal_classifier_forward.3} parent=0 // loop_footer
    %s26 = sadd.s32 1, %s22
  $region7: #{multimodal_classifier_forward.3} parent=0 // loop_footer_branch
    %21 = sbr.rel target = $region3
  $region8: #{multimodal_classifier_forward.3} parent=0 // loop_exit
    _

// kernel: multimodal_classifier_forward.4
$region0: #{multimodal_classifier_forward.4}
  #allocation0 [shape = 'u32[]', space=smem, size = 0x4, offset = 0x4, fixed_abs, tag = 'smem constant byte address 0x4 - core index']
  #allocation1 [shape = 'u32[72,128]{1,0:T(1,128)}', space=vmem, size = 0x9000, scoped, tag = 'internal scratch']
  %s0 = inlined_call_operand.vmem [shape: f32[2,4,192], index: 0, kind: input, shape index: {}]
  %s1 = inlined_call_operand.vmem [shape: bf16[192,32], index: 1, kind: input, shape index: {}]
  %s2 = inlined_call_operand.vmem [shape: f32[1,32], index: 2, kind: input, shape index: {}]
  %s3 = inlined_call_operand.vmem [shape: f32[5,32], index: 3, kind: input, shape index: {}]
  %s4 = inlined_call_operand.vmem [shape: f32[1,32], index: 4, kind: input, shape index: {}]
  %s5 = inlined_call_operand.vmem [shape: f32[1,32], index: 5, kind: input, shape index: {}]
  %s6 = inlined_call_operand.vmem [shape: f32[1,32], index: 6, kind: input, shape index: {}]
  %s7 = inlined_call_operand.vmem [shape: f32[1,32], index: 7, kind: input, shape index: {}]
  %s8 = inlined_call_operand.vmem [shape: bf16[32,96], index: 8, kind: input, shape index: {}]
  %s9 = inlined_call_operand.vmem [shape: f32[1,96], index: 9, kind: input, shape index: {}]
  %s10 = inlined_call_operand.vmem [shape: bf16[32,32], index: 10, kind: input, shape index: {}]
  %s11 = inlined_call_operand.vmem [shape: f32[1,32], index: 11, kind: input, shape index: {}]
  %s12 = inlined_call_operand.vmem [shape: f32[1,32], index: 12, kind: input, shape index: {}]
  %s13 = inlined_call_operand.vmem [shape: f32[1,32], index: 13, kind: input, shape index: {}]
  %s14 = inlined_call_operand.vmem [shape: bf16[32,64], index: 14, kind: input, shape index: {}]
  %s15 = inlined_call_operand.vmem [shape: f32[1,64], index: 15, kind: input, shape index: {}]
  %s16 = inlined_call_operand.vmem [shape: bf16[64,32], index: 16, kind: input, shape index: {}]
  %s17 = inlined_call_operand.vmem [shape: f32[1,32], index: 17, kind: input, shape index: {}]
  %s18 = inlined_call_operand.vmem [shape: bf16[2,5,32], index: 18, kind: output, shape index: {}]
  %s19 = sld [smem:[#allocation0]]
  $region105: #{multimodal_classifier_forward.4} parent=0
    _
  %s21 = ssub.s32 1, %s19
  %s22 = scalar_select 0, %s21, %s19
  loop: start=0, step=1, limit=4
  $region2: #{multimodal_classifier_forward.4} parent=0 // loop_pre_header
    _
  $region3: #{multimodal_classifier_forward.4} parent=0 // loop_header
    %s24 = sphi 0, %s28
    %p25 = scmp.ge.s32.totalorder %s24, 4
    %s34 = sphi 0, %s36
    %s37 = sphi 0, %s34
    %s38 = sphi 0, %s37
    %s54 = sphi 0, %s38
    %s58 = sphi 0, %s58
    %s60 = sphi 0, %s58
    %s61 = sphi 0, %s60
    %s75 = sphi 0, %s61
    %s79 = sphi 0, %s79
    %s81 = sphi 0, %s79
    %s82 = sphi 0, %s81
    %s96 = sphi 0, %s82
    %s100 = sphi 0, %s100
    %s102 = sphi 0, %s100
    %s103 = sphi 0, %s102
    %s117 = sphi 0, %s103
    %s121 = sphi 0, %s121
    %s123 = sphi 0, %s121
    %s124 = sphi 0, %s123
    %s138 = sphi 0, %s124
    %s142 = sphi 0, %s142
    %s144 = sphi 0, %s142
    %s145 = sphi 0, %s144
    %s159 = sphi 0, %s145
    %s163 = sphi 0, %s163
    %s165 = sphi 0, %s163
    %s166 = sphi 0, %s165
    %s180 = sphi 0, %s166
    %s184 = sphi 0, %s184
    %s186 = sphi 0, %s184
    %s187 = sphi 0, %s186
    %s201 = sphi 0, %s187
    %s205 = sphi 0, %s205
    %s207 = sphi 0, %s205
    %s208 = sphi 0, %s207
    %s222 = sphi 0, %s208
    %s226 = sphi 0, %s226
    %s228 = sphi 0, %s226
    %s229 = sphi 0, %s228
    %s243 = sphi 0, %s229
    %s247 = sphi 0, %s247
    %s249 = sphi 0, %s247
    %s250 = sphi 0, %s249
    %s264 = sphi 0, %s250
    %s268 = sphi 0, %s268
    %s270 = sphi 0, %s268
    %s271 = sphi 0, %s270
    %s285 = sphi 0, %s271
    %s289 = sphi 0, %s289
    %s291 = sphi 0, %s289
    %s292 = sphi 0, %s291
    %s306 = sphi 0, %s292
    %s310 = sphi 0, %s310
    %s312 = sphi 0, %s310
    %s313 = sphi 0, %s312
    %s327 = sphi 0, %s313
    %s331 = sphi 0, %s331
    %s333 = sphi 0, %s331
    %s334 = sphi 0, %s333
    %s348 = sphi 0, %s334
    %s352 = sphi 0, %s352
    %s354 = sphi 0, %s352
    %s355 = sphi 0, %s354
    %s369 = sphi 0, %s355
    %s373 = sphi 0, %s373
    %s375 = sphi 0, %s373
    %s376 = sphi 0, %s375
    %s390 = sphi 0, %s376
    %s394 = sphi 0, %s394
    %s396 = sphi 0, %s394
    %s397 = sphi 0, %s396
    %s411 = sphi 0, %s397
    %s417 = sphi 0, %s419
    %s420 = sphi 0, %s417
    %s421 = sphi 0, %s420
    %s437 = sphi 0, %s421
  $region4: #{multimodal_classifier_forward.4} parent=0 // loop_header_branch
    %27 = sbr.rel (%p25) target = $region8
  $region5: #{multimodal_classifier_forward.4} parent=0 // loop_body
    %s29 = ssub.s32 %s24, 1
    %s30 = ssub.s32 %s24, 2
    %s31 = sadd.s32 %s24, 1
    %s32 = ssub.s32 %s24, %s31
    %p33 = scmp.eq.s32.totalorder %s32, 0
    %s35 = sadd.s32 %s34, 1
    %s36 = scalar_select %p33, %s34, %s35
    %p39 = pneg %p33
    %p40 = scmp.eq.s32.totalorder %s24, 1
    %p41 = por %p39, %p40
    %p42 = scmp.ne.s32.totalorder %s34, %s37
    %p43 = scmp.eq.s32.totalorder %s24, 0
    %p44 = por %p42, %p43
    %p45 = scmp.ne.s32.totalorder %s34, %s37
    %p46 = scmp.eq.s32.totalorder %s29, 1
    %p47 = por %p45, %p46
    %p48 = scmp.ne.s32.totalorder %s37, %s38
    %p49 = scmp.eq.s32.totalorder %s29, 0
    %p50 = por %p48, %p49
    %p51 = scmp.ne.s32.totalorder %s37, %s38
    %p52 = scmp.eq.s32.totalorder %s30, 1
    %p53 = por %p51, %p52
    %p55 = scmp.ne.s32.totalorder %s38, %s54
    %p56 = scmp.eq.s32.totalorder %s30, 0
    %p57 = por %p55, %p56
    %s59 = sadd.s32 %s58, 1
    %p62 = scmp.eq.s32.totalorder %s24, 1
    %p63 = scmp.ne.s32.totalorder %s58, %s60
    %p64 = scmp.eq.s32.totalorder %s24, 0
    %p65 = por %p63, %p64
    %p66 = scmp.ne.s32.totalorder %s58, %s60
    %p67 = scmp.eq.s32.totalorder %s29, 1
    %p68 = por %p66, %p67
    %p69 = scmp.ne.s32.totalorder %s60, %s61
    %p70 = scmp.eq.s32.totalorder %s29, 0
    %p71 = por %p69, %p70
    %p72 = scmp.ne.s32.totalorder %s60, %s61
    %p73 = scmp.eq.s32.totalorder %s30, 1
    %p74 = por %p72, %p73
    %p76 = scmp.ne.s32.totalorder %s61, %s75
    %p77 = scmp.eq.s32.totalorder %s30, 0
    %p78 = por %p76, %p77
    %s80 = sadd.s32 %s79, 1
    %p83 = scmp.eq.s32.totalorder %s24, 1
    %p84 = scmp.ne.s32.totalorder %s79, %s81
    %p85 = scmp.eq.s32.totalorder %s24, 0
    %p86 = por %p84, %p85
    %p87 = scmp.ne.s32.totalorder %s79, %s81
    %p88 = scmp.eq.s32.totalorder %s29, 1
    %p89 = por %p87, %p88
    %p90 = scmp.ne.s32.totalorder %s81, %s82
    %p91 = scmp.eq.s32.totalorder %s29, 0
    %p92 = por %p90, %p91
    %p93 = scmp.ne.s32.totalorder %s81, %s82
    %p94 = scmp.eq.s32.totalorder %s30, 1
    %p95 = por %p93, %p94
    %p97 = scmp.ne.s32.totalorder %s82, %s96
    %p98 = scmp.eq.s32.totalorder %s30, 0
    %p99 = por %p97, %p98
    %s101 = sadd.s32 %s100, 1
    %p104 = scmp.eq.s32.totalorder %s24, 1
    %p105 = scmp.ne.s32.totalorder %s100, %s102
    %p106 = scmp.eq.s32.totalorder %s24, 0
    %p107 = por %p105, %p106
    %p108 = scmp.ne.s32.totalorder %s100, %s102
    %p109 = scmp.eq.s32.totalorder %s29, 1
    %p110 = por %p108, %p109
    %p111 = scmp.ne.s32.totalorder %s102, %s103
    %p112 = scmp.eq.s32.totalorder %s29, 0
    %p113 = por %p111, %p112
    %p114 = scmp.ne.s32.totalorder %s102, %s103
    %p115 = scmp.eq.s32.totalorder %s30, 1
    %p116 = por %p114, %p115
    %p118 = scmp.ne.s32.totalorder %s103, %s117
    %p119 = scmp.eq.s32.totalorder %s30, 0
    %p120 = por %p118, %p119
    %s122 = sadd.s32 %s121, 1
    %p125 = scmp.eq.s32.totalorder %s24, 1
    %p126 = scmp.ne.s32.totalorder %s121, %s123
    %p127 = scmp.eq.s32.totalorder %s24, 0
    %p128 = por %p126, %p127
    %p129 = scmp.ne.s32.totalorder %s121, %s123
    %p130 = scmp.eq.s32.totalorder %s29, 1
    %p131 = por %p129, %p130
    %p132 = scmp.ne.s32.totalorder %s123, %s124
    %p133 = scmp.eq.s32.totalorder %s29, 0
    %p134 = por %p132, %p133
    %p135 = scmp.ne.s32.totalorder %s123, %s124
    %p136 = scmp.eq.s32.totalorder %s30, 1
    %p137 = por %p135, %p136
    %p139 = scmp.ne.s32.totalorder %s124, %s138
    %p140 = scmp.eq.s32.totalorder %s30, 0
    %p141 = por %p139, %p140
    %s143 = sadd.s32 %s142, 1
    %p146 = scmp.eq.s32.totalorder %s24, 1
    %p147 = scmp.ne.s32.totalorder %s142, %s144
    %p148 = scmp.eq.s32.totalorder %s24, 0
    %p149 = por %p147, %p148
    %p150 = scmp.ne.s32.totalorder %s142, %s144
    %p151 = scmp.eq.s32.totalorder %s29, 1
    %p152 = por %p150, %p151
    %p153 = scmp.ne.s32.totalorder %s144, %s145
    %p154 = scmp.eq.s32.totalorder %s29, 0
    %p155 = por %p153, %p154
    %p156 = scmp.ne.s32.totalorder %s144, %s145
    %p157 = scmp.eq.s32.totalorder %s30, 1
    %p158 = por %p156, %p157
    %p160 = scmp.ne.s32.totalorder %s145, %s159
    %p161 = scmp.eq.s32.totalorder %s30, 0
    %p162 = por %p160, %p161
    %s164 = sadd.s32 %s163, 1
    %p167 = scmp.eq.s32.totalorder %s24, 1
    %p168 = scmp.ne.s32.totalorder %s163, %s165
    %p169 = scmp.eq.s32.totalorder %s24, 0
    %p170 = por %p168, %p169
    %p171 = scmp.ne.s32.totalorder %s163, %s165
    %p172 = scmp.eq.s32.totalorder %s29, 1
    %p173 = por %p171, %p172
    %p174 = scmp.ne.s32.totalorder %s165, %s166
    %p175 = scmp.eq.s32.totalorder %s29, 0
    %p176 = por %p174, %p175
    %p177 = scmp.ne.s32.totalorder %s165, %s166
    %p178 = scmp.eq.s32.totalorder %s30, 1
    %p179 = por %p177, %p178
    %p181 = scmp.ne.s32.totalorder %s166, %s180
    %p182 = scmp.eq.s32.totalorder %s30, 0
    %p183 = por %p181, %p182
    %s185 = sadd.s32 %s184, 1
    %p188 = scmp.eq.s32.totalorder %s24, 1
    %p189 = scmp.ne.s32.totalorder %s184, %s186
    %p190 = scmp.eq.s32.totalorder %s24, 0
    %p191 = por %p189, %p190
    %p192 = scmp.ne.s32.totalorder %s184, %s186
    %p193 = scmp.eq.s32.totalorder %s29, 1
    %p194 = por %p192, %p193
    %p195 = scmp.ne.s32.totalorder %s186, %s187
    %p196 = scmp.eq.s32.totalorder %s29, 0
    %p197 = por %p195, %p196
    %p198 = scmp.ne.s32.totalorder %s186, %s187
    %p199 = scmp.eq.s32.totalorder %s30, 1
    %p200 = por %p198, %p199
    %p202 = scmp.ne.s32.totalorder %s187, %s201
    %p203 = scmp.eq.s32.totalorder %s30, 0
    %p204 = por %p202, %p203
    %s206 = sadd.s32 %s205, 1
    %p209 = scmp.eq.s32.totalorder %s24, 1
    %p210 = scmp.ne.s32.totalorder %s205, %s207
    %p211 = scmp.eq.s32.totalorder %s24, 0
    %p212 = por %p210, %p211
    %p213 = scmp.ne.s32.totalorder %s205, %s207
    %p214 = scmp.eq.s32.totalorder %s29, 1
    %p215 = por %p213, %p214
    %p216 = scmp.ne.s32.totalorder %s207, %s208
    %p217 = scmp.eq.s32.totalorder %s29, 0
    %p218 = por %p216, %p217
    %p219 = scmp.ne.s32.totalorder %s207, %s208
    %p220 = scmp.eq.s32.totalorder %s30, 1
    %p221 = por %p219, %p220
    %p223 = scmp.ne.s32.totalorder %s208, %s222
    %p224 = scmp.eq.s32.totalorder %s30, 0
    %p225 = por %p223, %p224
    %s227 = sadd.s32 %s226, 1
    %p230 = scmp.eq.s32.totalorder %s24, 1
    %p231 = scmp.ne.s32.totalorder %s226, %s228
    %p232 = scmp.eq.s32.totalorder %s24, 0
    %p233 = por %p231, %p232
    %p234 = scmp.ne.s32.totalorder %s226, %s228
    %p235 = scmp.eq.s32.totalorder %s29, 1
    %p236 = por %p234, %p235
    %p237 = scmp.ne.s32.totalorder %s228, %s229
    %p238 = scmp.eq.s32.totalorder %s29, 0
    %p239 = por %p237, %p238
    %p240 = scmp.ne.s32.totalorder %s228, %s229
    %p241 = scmp.eq.s32.totalorder %s30, 1
    %p242 = por %p240, %p241
    %p244 = scmp.ne.s32.totalorder %s229, %s243
    %p245 = scmp.eq.s32.totalorder %s30, 0
    %p246 = por %p244, %p245
    %s248 = sadd.s32 %s247, 1
    %p251 = scmp.eq.s32.totalorder %s24, 1
    %p252 = scmp.ne.s32.totalorder %s247, %s249
    %p253 = scmp.eq.s32.totalorder %s24, 0
    %p254 = por %p252, %p253
    %p255 = scmp.ne.s32.totalorder %s247, %s249
    %p256 = scmp.eq.s32.totalorder %s29, 1
    %p257 = por %p255, %p256
    %p258 = scmp.ne.s32.totalorder %s249, %s250
    %p259 = scmp.eq.s32.totalorder %s29, 0
    %p260 = por %p258, %p259
    %p261 = scmp.ne.s32.totalorder %s249, %s250
    %p262 = scmp.eq.s32.totalorder %s30, 1
    %p263 = por %p261, %p262
    %p265 = scmp.ne.s32.totalorder %s250, %s264
    %p266 = scmp.eq.s32.totalorder %s30, 0
    %p267 = por %p265, %p266
    %s269 = sadd.s32 %s268, 1
    %p272 = scmp.eq.s32.totalorder %s24, 1
    %p273 = scmp.ne.s32.totalorder %s268, %s270
    %p274 = scmp.eq.s32.totalorder %s24, 0
    %p275 = por %p273, %p274
    %p276 = scmp.ne.s32.totalorder %s268, %s270
    %p277 = scmp.eq.s32.totalorder %s29, 1
    %p278 = por %p276, %p277
    %p279 = scmp.ne.s32.totalorder %s270, %s271
    %p280 = scmp.eq.s32.totalorder %s29, 0
    %p281 = por %p279, %p280
    %p282 = scmp.ne.s32.totalorder %s270, %s271
    %p283 = scmp.eq.s32.totalorder %s30, 1
    %p284 = por %p282, %p283
    %p286 = scmp.ne.s32.totalorder %s271, %s285
    %p287 = scmp.eq.s32.totalorder %s30, 0
    %p288 = por %p286, %p287
    %s290 = sadd.s32 %s289, 1
    %p293 = scmp.eq.s32.totalorder %s24, 1
    %p294 = scmp.ne.s32.totalorder %s289, %s291
    %p295 = scmp.eq.s32.totalorder %s24, 0
    %p296 = por %p294, %p295
    %p297 = scmp.ne.s32.totalorder %s289, %s291
    %p298 = scmp.eq.s32.totalorder %s29, 1
    %p299 = por %p297, %p298
    %p300 = scmp.ne.s32.totalorder %s291, %s292
    %p301 = scmp.eq.s32.totalorder %s29, 0
    %p302 = por %p300, %p301
    %p303 = scmp.ne.s32.totalorder %s291, %s292
    %p304 = scmp.eq.s32.totalorder %s30, 1
    %p305 = por %p303, %p304
    %p307 = scmp.ne.s32.totalorder %s292, %s306
    %p308 = scmp.eq.s32.totalorder %s30, 0
    %p309 = por %p307, %p308
    %s311 = sadd.s32 %s310, 1
    %p314 = scmp.eq.s32.totalorder %s24, 1
    %p315 = scmp.ne.s32.totalorder %s310, %s312
    %p316 = scmp.eq.s32.totalorder %s24, 0
    %p317 = por %p315, %p316
    %p318 = scmp.ne.s32.totalorder %s310, %s312
    %p319 = scmp.eq.s32.totalorder %s29, 1
    %p320 = por %p318, %p319
    %p321 = scmp.ne.s32.totalorder %s312, %s313
    %p322 = scmp.eq.s32.totalorder %s29, 0
    %p323 = por %p321, %p322
    %p324 = scmp.ne.s32.totalorder %s312, %s313
    %p325 = scmp.eq.s32.totalorder %s30, 1
    %p326 = por %p324, %p325
    %p328 = scmp.ne.s32.totalorder %s313, %s327
    %p329 = scmp.eq.s32.totalorder %s30, 0
    %p330 = por %p328, %p329
    %s332 = sadd.s32 %s331, 1
    %p335 = scmp.eq.s32.totalorder %s24, 1
    %p336 = scmp.ne.s32.totalorder %s331, %s333
    %p337 = scmp.eq.s32.totalorder %s24, 0
    %p338 = por %p336, %p337
    %p339 = scmp.ne.s32.totalorder %s331, %s333
    %p340 = scmp.eq.s32.totalorder %s29, 1
    %p341 = por %p339, %p340
    %p342 = scmp.ne.s32.totalorder %s333, %s334
    %p343 = scmp.eq.s32.totalorder %s29, 0
    %p344 = por %p342, %p343
    %p345 = scmp.ne.s32.totalorder %s333, %s334
    %p346 = scmp.eq.s32.totalorder %s30, 1
    %p347 = por %p345, %p346
    %p349 = scmp.ne.s32.totalorder %s334, %s348
    %p350 = scmp.eq.s32.totalorder %s30, 0
    %p351 = por %p349, %p350
    %s353 = sadd.s32 %s352, 1
    %p356 = scmp.eq.s32.totalorder %s24, 1
    %p357 = scmp.ne.s32.totalorder %s352, %s354
    %p358 = scmp.eq.s32.totalorder %s24, 0
    %p359 = por %p357, %p358
    %p360 = scmp.ne.s32.totalorder %s352, %s354
    %p361 = scmp.eq.s32.totalorder %s29, 1
    %p362 = por %p360, %p361
    %p363 = scmp.ne.s32.totalorder %s354, %s355
    %p364 = scmp.eq.s32.totalorder %s29, 0
    %p365 = por %p363, %p364
    %p366 = scmp.ne.s32.totalorder %s354, %s355
    %p367 = scmp.eq.s32.totalorder %s30, 1
    %p368 = por %p366, %p367
    %p370 = scmp.ne.s32.totalorder %s355, %s369
    %p371 = scmp.eq.s32.totalorder %s30, 0
    %p372 = por %p370, %p371
    %s374 = sadd.s32 %s373, 1
    %p377 = scmp.eq.s32.totalorder %s24, 1
    %p378 = scmp.ne.s32.totalorder %s373, %s375
    %p379 = scmp.eq.s32.totalorder %s24, 0
    %p380 = por %p378, %p379
    %p381 = scmp.ne.s32.totalorder %s373, %s375
    %p382 = scmp.eq.s32.totalorder %s29, 1
    %p383 = por %p381, %p382
    %p384 = scmp.ne.s32.totalorder %s375, %s376
    %p385 = scmp.eq.s32.totalorder %s29, 0
    %p386 = por %p384, %p385
    %p387 = scmp.ne.s32.totalorder %s375, %s376
    %p388 = scmp.eq.s32.totalorder %s30, 1
    %p389 = por %p387, %p388
    %p391 = scmp.ne.s32.totalorder %s376, %s390
    %p392 = scmp.eq.s32.totalorder %s30, 0
    %p393 = por %p391, %p392
    %s395 = sadd.s32 %s394, 1
    %p398 = scmp.eq.s32.totalorder %s24, 1
    %p399 = scmp.ne.s32.totalorder %s394, %s396
    %p400 = scmp.eq.s32.totalorder %s24, 0
    %p401 = por %p399, %p400
    %p402 = scmp.ne.s32.totalorder %s394, %s396
    %p403 = scmp.eq.s32.totalorder %s29, 1
    %p404 = por %p402, %p403
    %p405 = scmp.ne.s32.totalorder %s396, %s397
    %p406 = scmp.eq.s32.totalorder %s29, 0
    %p407 = por %p405, %p406
    %p408 = scmp.ne.s32.totalorder %s396, %s397
    %p409 = scmp.eq.s32.totalorder %s30, 1
    %p410 = por %p408, %p409
    %p412 = scmp.ne.s32.totalorder %s397, %s411
    %p413 = scmp.eq.s32.totalorder %s30, 0
    %p414 = por %p412, %p413
    %s415 = ssub.s32 %s24, %s31
    %p416 = scmp.eq.s32.totalorder %s415, 0
    %s418 = sadd.s32 %s417, 1
    %s419 = scalar_select %p416, %s417, %s418
    %p422 = pneg %p416
    %p423 = scmp.eq.s32.totalorder %s24, 1
    %p424 = por %p422, %p423
    %p425 = scmp.ne.s32.totalorder %s417, %s420
    %p426 = scmp.eq.s32.totalorder %s24, 0
    %p427 = por %p425, %p426
    %p428 = scmp.ne.s32.totalorder %s417, %s420
    %p429 = scmp.eq.s32.totalorder %s29, 1
    %p430 = por %p428, %p429
    %p431 = scmp.ne.s32.totalorder %s420, %s421
    %p432 = scmp.eq.s32.totalorder %s29, 0
    %p433 = por %p431, %p432
    %p434 = scmp.ne.s32.totalorder %s420, %s421
    %p435 = scmp.eq.s32.totalorder %s30, 1
    %p436 = por %p434, %p435
    %p438 = scmp.ne.s32.totalorder %s421, %s437
    %p439 = scmp.eq.s32.totalorder %s30, 0
    %p440 = por %p438, %p439
    %p441 = scmp.le.s32.totalorder 1, %s24
    %p442 = scmp.lt.s32.totalorder %s24, 3
    %p443 = pnand %p441, %p442
    %p444 = pneg %p443
    // Predicated region
    $region9: #{multimodal_classifier_forward.4} parent=5 // pred_check
      _
    $region10: #{multimodal_classifier_forward.4} parent=5 // pred_check_branch
      %446 = sbr.rel (%p443) target = $region12
    $region11: #{multimodal_classifier_forward.4} parent=5 // pred_region
      %s447 = ssub.s32 %s24, 1
      // Predicated region
      $region13: #{multimodal_classifier_forward.4} parent=11 // pred_check
        %p448 = pneg %p71
      $region14: #{multimodal_classifier_forward.4} parent=11 // pred_check_branch
        %450 = sbr.rel (%p448) target = $region16
      $region15: #{multimodal_classifier_forward.4} parent=11 // pred_region
        _
      $region16: #{multimodal_classifier_forward.4} parent=11 // pred_fallthru
        _
      // Predicated region
      $region17: #{multimodal_classifier_forward.4} parent=11 // pred_check
        %p451 = pneg %p92
      $region18: #{multimodal_classifier_forward.4} parent=11 // pred_check_branch
        %453 = sbr.rel (%p451) target = $region20
      $region19: #{multimodal_classifier_forward.4} parent=11 // pred_region
        _
      $region20: #{multimodal_classifier_forward.4} parent=11 // pred_fallthru
        _
      // Predicated region
      $region21: #{multimodal_classifier_forward.4} parent=11 // pred_check
        %p454 = pneg %p113
      $region22: #{multimodal_classifier_forward.4} parent=11 // pred_check_branch
        %456 = sbr.rel (%p454) target = $region24
      $region23: #{multimodal_classifier_forward.4} parent=11 // pred_region
        _
      $region24: #{multimodal_classifier_forward.4} parent=11 // pred_fallthru
        _
      // Predicated region
      $region25: #{multimodal_classifier_forward.4} parent=11 // pred_check
        %p457 = pneg %p134
      $region26: #{multimodal_classifier_forward.4} parent=11 // pred_check_branch
        %459 = sbr.rel (%p457) target = $region28
      $region27: #{multimodal_classifier_forward.4} parent=11 // pred_region
        _
      $region28: #{multimodal_classifier_forward.4} parent=11 // pred_fallthru
        _
      // Predicated region
      $region29: #{multimodal_classifier_forward.4} parent=11 // pred_check
        %p460 = pneg %p155
      $region30: #{multimodal_classifier_forward.4} parent=11 // pred_check_branch
        %462 = sbr.rel (%p460) target = $region32
      $region31: #{multimodal_classifier_forward.4} parent=11 // pred_region
        _
      $region32: #{multimodal_classifier_forward.4} parent=11 // pred_fallthru
        _
      // Predicated region
      $region33: #{multimodal_classifier_forward.4} parent=11 // pred_check
        %p463 = pneg %p176
      $region34: #{multimodal_classifier_forward.4} parent=11 // pred_check_branch
        %465 = sbr.rel (%p463) target = $region36
      $region35: #{multimodal_classifier_forward.4} parent=11 // pred_region
        _
      $region36: #{multimodal_classifier_forward.4} parent=11 // pred_fallthru
        _
      // Predicated region
      $region37: #{multimodal_classifier_forward.4} parent=11 // pred_check
        %p466 = pneg %p197
      $region38: #{multimodal_classifier_forward.4} parent=11 // pred_check_branch
        %468 = sbr.rel (%p466) target = $region40
      $region39: #{multimodal_classifier_forward.4} parent=11 // pred_region
        _
      $region40: #{multimodal_classifier_forward.4} parent=11 // pred_fallthru
        _
      // Predicated region
      $region41: #{multimodal_classifier_forward.4} parent=11 // pred_check
        %p469 = pneg %p218
      $region42: #{multimodal_classifier_forward.4} parent=11 // pred_check_branch
        %471 = sbr.rel (%p469) target = $region44
      $region43: #{multimodal_classifier_forward.4} parent=11 // pred_region
        _
      $region44: #{multimodal_classifier_forward.4} parent=11 // pred_fallthru
        _
      // Predicated region
      $region45: #{multimodal_classifier_forward.4} parent=11 // pred_check
        %p472 = pneg %p239
      $region46: #{multimodal_classifier_forward.4} parent=11 // pred_check_branch
        %474 = sbr.rel (%p472) target = $region48
      $region47: #{multimodal_classifier_forward.4} parent=11 // pred_region
        _
      $region48: #{multimodal_classifier_forward.4} parent=11 // pred_fallthru
        _
      // Predicated region
      $region49: #{multimodal_classifier_forward.4} parent=11 // pred_check
        %p475 = pneg %p260
      $region50: #{multimodal_classifier_forward.4} parent=11 // pred_check_branch
        %477 = sbr.rel (%p475) target = $region52
      $region51: #{multimodal_classifier_forward.4} parent=11 // pred_region
        _
      $region52: #{multimodal_classifier_forward.4} parent=11 // pred_fallthru
        _
      // Predicated region
      $region53: #{multimodal_classifier_forward.4} parent=11 // pred_check
        %p478 = pneg %p281
      $region54: #{multimodal_classifier_forward.4} parent=11 // pred_check_branch
        %480 = sbr.rel (%p478) target = $region56
      $region55: #{multimodal_classifier_forward.4} parent=11 // pred_region
        _
      $region56: #{multimodal_classifier_forward.4} parent=11 // pred_fallthru
        _
      // Predicated region
      $region57: #{multimodal_classifier_forward.4} parent=11 // pred_check
        %p481 = pneg %p302
      $region58: #{multimodal_classifier_forward.4} parent=11 // pred_check_branch
        %483 = sbr.rel (%p481) target = $region60
      $region59: #{multimodal_classifier_forward.4} parent=11 // pred_region
        _
      $region60: #{multimodal_classifier_forward.4} parent=11 // pred_fallthru
        _
      // Predicated region
      $region61: #{multimodal_classifier_forward.4} parent=11 // pred_check
        %p484 = pneg %p323
      $region62: #{multimodal_classifier_forward.4} parent=11 // pred_check_branch
        %486 = sbr.rel (%p484) target = $region64
      $region63: #{multimodal_classifier_forward.4} parent=11 // pred_region
        _
      $region64: #{multimodal_classifier_forward.4} parent=11 // pred_fallthru
        _
      // Predicated region
      $region65: #{multimodal_classifier_forward.4} parent=11 // pred_check
        %p487 = pneg %p344
      $region66: #{multimodal_classifier_forward.4} parent=11 // pred_check_branch
        %489 = sbr.rel (%p487) target = $region68
      $region67: #{multimodal_classifier_forward.4} parent=11 // pred_region
        _
      $region68: #{multimodal_classifier_forward.4} parent=11 // pred_fallthru
        _
      // Predicated region
      $region69: #{multimodal_classifier_forward.4} parent=11 // pred_check
        %p490 = pneg %p365
      $region70: #{multimodal_classifier_forward.4} parent=11 // pred_check_branch
        %492 = sbr.rel (%p490) target = $region72
      $region71: #{multimodal_classifier_forward.4} parent=11 // pred_region
        _
      $region72: #{multimodal_classifier_forward.4} parent=11 // pred_fallthru
        _
      // Predicated region
      $region73: #{multimodal_classifier_forward.4} parent=11 // pred_check
        %p493 = pneg %p386
      $region74: #{multimodal_classifier_forward.4} parent=11 // pred_check_branch
        %495 = sbr.rel (%p493) target = $region76
      $region75: #{multimodal_classifier_forward.4} parent=11 // pred_region
        _
      $region76: #{multimodal_classifier_forward.4} parent=11 // pred_fallthru
        _
      // Predicated region
      $region77: #{multimodal_classifier_forward.4} parent=11 // pred_check
        %p496 = pneg %p407
      $region78: #{multimodal_classifier_forward.4} parent=11 // pred_check_branch
        %498 = sbr.rel (%p496) target = $region80
      $region79: #{multimodal_classifier_forward.4} parent=11 // pred_region
        _
      $region80: #{multimodal_classifier_forward.4} parent=11 // pred_fallthru
        _
    $region12: #{multimodal_classifier_forward.4} parent=5 // pred_fallthru
      _
    %p499 = scmp.lt.s32.totalorder %s24, 2
    // Predicated region
    $region81: #{multimodal_classifier_forward.4} parent=5 // pred_check
      %p500 = pneg %p499
    $region82: #{multimodal_classifier_forward.4} parent=5 // pred_check_branch
      %502 = sbr.rel (%p500) target = $region84
    $region83: #{multimodal_classifier_forward.4} parent=5 // pred_region
      // Predicated region
      $region85: #{multimodal_classifier_forward.4} parent=83 // pred_check
        %p503 = pneg %p44
      $region86: #{multimodal_classifier_forward.4} parent=83 // pred_check_branch
        %505 = sbr.rel (%p503) target = $region88
      $region87: #{multimodal_classifier_forward.4} parent=83 // pred_region
        %p506 = scmp.lt.s32.totalorder %s24, 1
        %s507 = scalar_select %p506, %s24, 1
        %s508 = smul.addr %s507, 2
        %s509 = smul.addr %s508, 4
        %s510 = scalar_lea.vmem %s0, %s509
      $region88: #{multimodal_classifier_forward.4} parent=83 // pred_fallthru
        _
    $region84: #{multimodal_classifier_forward.4} parent=5 // pred_fallthru
      _
    %p511 = scmp.le.s32.totalorder 1, %s24
    %p512 = scmp.lt.s32.totalorder %s24, 3
    %p513 = pnand %p511, %p512
    %p514 = pneg %p513
    // Predicated region
    $region89: #{multimodal_classifier_forward.4} parent=5 // pred_check
      _
    $region90: #{multimodal_classifier_forward.4} parent=5 // pred_check_branch
      %516 = sbr.rel (%p513) target = $region92
    $region91: #{multimodal_classifier_forward.4} parent=5 // pred_region
      %s517 = ssub.s32 %s24, 1
      %p518 = scmp.lt.s32.totalorder %s29, 1
      %s519 = scalar_select %p518, %s29, 1
      %s520 = smul.addr %s519, 2
      %s521 = smul.addr %s520, 4
      %s522 = scalar_lea.vmem %s0, %s521
      %p523 = pneg %p50
      %p524 = pneg %p47
      %p525 = pneg %p71
      %p526 = pneg %p68
      %p527 = pneg %p92
      %p528 = pneg %p89
      %p529 = pneg %p113
      %p530 = pneg %p110
      %p531 = pneg %p134
      %p532 = pneg %p131
      %p533 = pneg %p155
      %p534 = pneg %p152
      %p535 = pneg %p176
      %p536 = pneg %p173
      %p537 = pneg %p197
      %p538 = pneg %p194
      %p539 = pneg %p218
      %p540 = pneg %p215
      %p541 = pneg %p239
      %p542 = pneg %p236
      %p543 = pneg %p260
      %p544 = pneg %p257
      %p545 = pneg %p281
      %p546 = pneg %p278
      %p547 = pneg %p302
      %p548 = pneg %p299
      %p549 = pneg %p323
      %p550 = pneg %p320
      %p551 = pneg %p344
      %p552 = pneg %p341
      %p553 = pneg %p365
      %p554 = pneg %p362
      %p555 = pneg %p386
      %p556 = pneg %p383
      %p557 = pneg %p407
      %p558 = pneg %p404
      %p559 = pneg %p433
      %p560 = pneg %p430
      %p561 = scmp.lt.s32.totalorder %s29, 1
      %s562 = scalar_select %p561, %s29, 1
      %s563 = smul.addr %s562, 4
      %s564 = scalar_lea.vmem %s18, %s563
      %p565 = scmp.lt.s32.totalorder %s29, 1
      %s566 = scalar_select %p565, %s29, 1
      %s567 = smul.addr %s566, 2
      %s568 = smul.addr %s567, 4
      %s569 = scalar_lea.vmem %s0, %s568
      %p570 = scmp.lt.s32.totalorder %s29, 1
      %s571 = scalar_select %p570, %s29, 1
      %s572 = smul.addr %s571, 4
      %s573 = scalar_lea.vmem %s18, %s572
      %v575 = vld [vmem:[%s569] sm:$0xff]
      %577 = vst [vmem:[#allocation1] ss:$2 sm:$0xff] %v575
      %v578 = vld.sshfl [vmem:[#allocation1] sm:$0xff pattern:$0x75316420]
      %v579 = vld.sshfl [vmem:[#allocation1 + $0x8] sm:$0xff pattern:$0x75316420]
      %v582 = vpack.c.bf16 %v578, %v578
      %v583 = vpack.c.bf16 %v579, %v579
      %v584 = vld [vmem:[%s1] sm:$0xf]
      %v585 = vld [vmem:[%s1 + $0x4] sm:$0xf]
      %v586 = vld [vmem:[%s1 + $0x8] sm:$0xf]
      %v587 = vld [vmem:[%s1 + $0xc] sm:$0xf]
      %v588 = vld [vmem:[%s1 + $0x10] sm:$0xf]
      %v589 = vld [vmem:[%s1 + $0x14] sm:$0xf]
      %v590 = vld [vmem:[%s1 + $0x18] sm:$0xf]
      %v591 = vld [vmem:[%s1 + $0x1c] sm:$0xf]
      %v592 = vld [vmem:[%s1 + $0x20] sm:$0xf]
      %v593 = vld [vmem:[%s1 + $0x24] sm:$0xf]
      %v594 = vld [vmem:[%s1 + $0x28] sm:$0xf]
      %v595 = vld [vmem:[%s1 + $0x2c] sm:$0xf]
      %v596 = vld [vmem:[%s1 + $0x30] sm:$0xf]
      %v597 = vld [vmem:[%s1 + $0x34] sm:$0xf]
      %v598 = vld [vmem:[%s1 + $0x38] sm:$0xf]
      %v599 = vld [vmem:[%s1 + $0x3c] sm:$0xf]
      %v600 = vld [vmem:[%s1 + $0x40] sm:$0xf]
      %v601 = vld [vmem:[%s1 + $0x44] sm:$0xf]
      %v602 = vld [vmem:[%s1 + $0x48] sm:$0xf]
      %v603 = vld [vmem:[%s1 + $0x4c] sm:$0xf]
      %v604 = vld [vmem:[%s1 + $0x50] sm:$0xf]
      %v605 = vld [vmem:[%s1 + $0x54] sm:$0xf]
      %v606 = vld [vmem:[%s1 + $0x58] sm:$0xf]
      %v607 = vld [vmem:[%s1 + $0x5c] sm:$0xf]
      %v632 = vunpack.c.l.b16 %v584
      %v633 = vunpack.c.l.b16 %v585
      %v634 = vunpack.c.l.b16 %v586
      %v635 = vunpack.c.l.b16 %v587
      %v636 = vunpack.c.l.b16 %v588
      %v637 = vunpack.c.l.b16 %v589
      %v638 = vunpack.c.l.b16 %v590
      %v639 = vunpack.c.l.b16 %v591
      %v640 = vunpack.c.l.b16 %v592
      %v641 = vunpack.c.l.b16 %v593
      %v642 = vunpack.c.l.b16 %v594
      %v643 = vunpack.c.l.b16 %v595
      %v644 = vunpack.c.l.b16 %v596
      %v645 = vunpack.c.l.b16 %v597
      %v646 = vunpack.c.l.b16 %v598
      %v647 = vunpack.c.l.b16 %v599
      %v648 = vunpack.c.l.b16 %v600
      %v649 = vunpack.c.l.b16 %v601
      %v650 = vunpack.c.l.b16 %v602
      %v651 = vunpack.c.l.b16 %v603
      %v652 = vunpack.c.l.b16 %v604
      %v653 = vunpack.c.l.b16 %v605
      %v654 = vunpack.c.l.b16 %v606
      %v655 = vunpack.c.l.b16 %v607
      %v656 = vpack.c.b16 %v633, %v632
      %v657 = vpack.c.b16 %v635, %v634
      %v658 = vpack.c.b16 %v637, %v636
      %v659 = vpack.c.b16 %v639, %v638
      %v660 = vpack.c.b16 %v641, %v640
      %v661 = vpack.c.b16 %v643, %v642
      %v662 = vpack.c.b16 %v645, %v644
      %v663 = vpack.c.b16 %v647, %v646
      %v664 = vpack.c.b16 %v649, %v648
      %v665 = vpack.c.b16 %v651, %v650
      %v666 = vpack.c.b16 %v653, %v652
      %v667 = vpack.c.b16 %v655, %v654
      %vm680 = vcmask 523264
      %v682 = vsel %vm680, %v583, 0
      %684 = vmatpush.bf16.msra.mxu0 %v663
      %685 = vmatpush.bf16.msra.mxu0 %v662
      %686 = vmatpush.bf16.msra.mxu0 %v661
      %687 = vmatpush.bf16.msra.mxu0 %v660
      %688 = vmatpush.bf16.msra.mxu0 %v659
      %689 = vmatpush.bf16.msra.mxu0 %v658
      %690 = vmatpush.bf16.msra.mxu0 %v657
      %691 = vmatpush.bf16.msra.mxu0 %v656
      %692 = vmatmul.bf16.gmra.mxu0 %v582
      %v693 = vpop.f32.mrf.mxu0
      %v694 = vadd.f32 0.0, %v693
      %v695 = vpop.f32.mrf.mxu0
      %696 = vdwg.mxu0
      %697 = vmatpush.bf16.msra.mxu0 0
      %698 = vmatpush.bf16.msra.mxu0 0
      %699 = vmatpush.bf16.msra.mxu0 0
      %700 = vmatpush.bf16.msra.mxu0 0
      %701 = vmatpush.bf16.msra.mxu0 %v667
      %702 = vmatpush.bf16.msra.mxu0 %v666
      %703 = vmatpush.bf16.msra.mxu0 %v665
      %704 = vmatpush.bf16.msra.mxu0 %v664
      %705 = vmatmul.bf16.gmra.mxu0 %v682
      %v706 = vpop.f32.mrf.mxu0
      %v707 = vadd.f32 %v694, %v706
      %v708 = vpop.f32.mrf.mxu0
      %709 = vdwg.mxu0
      %v710 = vld [vmem:[%s2] sm:$0x1]
      %v712 = vrot.slane %v707, 7
      %vm714 = vcmask 1040384
      %v715 = vsel %vm714, %v710, %v712
      %v716 = vld [vmem:[%s3] sm:$0x1f]
      %v717 = vadd.f32 %v715, %v716
      %v718 = vld [vmem:[%s4] sm:$0x1]
      %v719 = vld [vmem:[%s5] sm:$0x1]
      %vm720 = vcmask 258048
      %v721 = vsel %vm720, %v717, 0.0
      %722 = vadd.xlane.f32.xlu0 %v721
      %v723 = vpop.xlane.xlu0 %722
      %v724 = vrcp.pop 32.0
      %v725 = vmul.f32 32.0, %v724
      %v726 = vsub.f32 1.0, %v725
      %v727 = vmul.f32 %v724, %v726
      %v728 = vadd.f32 %v724, %v727
      %vm729 = vweird.f32 %v724
      %v730 = vsel %vm729, %v724, %v728
      %v731 = vmul.f32 %v723, %v730
      %v732 = vsub.f32 %v717, %v731
      %v733 = vmul.f32 %v732, %v732
      %v734 = vsel %vm720, %v733, 0.0
      %735 = vadd.xlane.f32.xlu0 %v734
      %v736 = vpop.xlane.xlu0 %735
      %v737 = vmul.f32 %v736, %v730
      %v738 = vadd.f32 %v737, 1e-05
      %v739 = vrsqrt.pop %v738
      %v740 = vmul.f32 %v739, %v738
      %v741 = vmul.f32 %v740, %v739
      %v742 = vmul.f32 0.5, %v741
      %v743 = vsub.f32 1.5, %v742
      %v744 = vmul.f32 %v739, %v743
      %vm745 = vweird.f32 %v738
      %vm746 = vweird.f32 %v739
      %vm747 = vmor %vm745, %vm746
      %v748 = vsel %vm747, %v739, %v744
      %v749 = vmul.f32 %v732, %v748
      %v751 = vperm.slane %v718, 0
      %v753 = vmul.f32 %v749, %v751
      %v755 = vperm.slane %v719, 0
      %v757 = vadd.f32 %v753, %v755
      %v758 = vld [vmem:[%s6] sm:$0x1]
      %v759 = vld [vmem:[%s7] sm:$0x1]
      %v760 = vsel %vm720, %v757, 0.0
      %761 = vadd.xlane.f32.xlu0 %v760
      %v762 = vpop.xlane.xlu0 %761
      %v763 = vmul.f32 %v762, %v730
      %v764 = vsub.f32 %v757, %v763
      %v765 = vmul.f32 %v764, %v764
      %v766 = vsel %vm720, %v765, 0.0
      %767 = vadd.xlane.f32.xlu0 %v766
      %v768 = vpop.xlane.xlu0 %767
      %v769 = vmul.f32 %v768, %v730
      %v770 = vadd.f32 %v769, 1e-05
      %v771 = vrsqrt.pop %v770
      %v772 = vmul.f32 %v771, %v770
      %v773 = vmul.f32 %v772, %v771
      %v774 = vmul.f32 0.5, %v773
      %v775 = vsub.f32 1.5, %v774
      %v776 = vmul.f32 %v771, %v775
      %vm777 = vweird.f32 %v770
      %vm778 = vweird.f32 %v771
      %vm779 = vmor %vm777, %vm778
      %v780 = vsel %vm779, %v771, %v776
      %v781 = vmul.f32 %v764, %v780
      %v783 = vperm.slane %v758, 0
      %v785 = vmul.f32 %v781, %v783
      %v787 = vperm.slane %v759, 0
      %v789 = vadd.f32 %v785, %v787
      %v790 = vpack.c.bf16 %v789, %v789
      %v791 = vld [vmem:[%s8] sm:$0xf]
      %v792 = vld [vmem:[%s8 + $0x4] sm:$0xf]
      %v793 = vld [vmem:[%s8 + $0x8] sm:$0xf]
      %v794 = vld [vmem:[%s8 + $0xc] sm:$0xf]
      %v795 = vld [vmem:[%s9] sm:$0x1]
      %v797 = vperm.slane %v795, 0
      %v803 = vunpack.c.l.b16 %v791
      %v804 = vunpack.c.l.b16 %v792
      %v805 = vunpack.c.l.b16 %v793
      %v806 = vunpack.c.l.b16 %v794
      %v807 = vpack.c.b16 %v804, %v803
      %v808 = vpack.c.b16 %v806, %v805
      %vm811 = vcmask 261120
      %v813 = vsel %vm811, %v790, 0
      %815 = vmatpush.bf16.msra.mxu0 0
      %816 = vmatpush.bf16.msra.mxu0 0
      %817 = vmatpush.bf16.msra.mxu0 0
      %818 = vmatpush.bf16.msra.mxu0 0
      %819 = vmatpush.bf16.msra.mxu0 0
      %820 = vmatpush.bf16.msra.mxu0 0
      %821 = vmatpush.bf16.msra.mxu0 %v808
      %822 = vmatpush.bf16.msra.mxu0 %v807
      %823 = vmatmul.bf16.gmra.mxu0 %v813
      %v824 = vpop.f32.mrf.mxu0
      %v825 = vadd.f32 %v797, %v824
      %v826 = vpop.f32.mrf.mxu0
      %827 = vdwg.mxu0
      %v828 = vmul.f32 %v825, 0.25
      %830 = vrot.lane.b32.xlu0 %v828, 112
      %v831 = vpop.permute.xlu0 %830
      %v834 = vunpack.c.l.s4 1983009808
      %v835 = vunpack.c.0.s8 %v834
      %v836 = vperm.slane %v828, %v835
      %v837 = vrot.slane %v828, 4
      %vm838 = vcmask 1047556
      %v839 = vsel %vm838, 0.0, %v837
      %v841 = vunpack.c.l.s4 1983009808
      %v842 = vunpack.c.0.s8 %v841
      %v843 = vperm.slane %v831, %v842
      %v844 = vrot.slane %v831, 4
      %v845 = vsel %vm838, 0.0, %v844
      %v846 = vrot.slane %v843, 4
      %v847 = vsel %vm838, %v846, %v836
      %v848 = vrot.slane %v836, 4
      %v849 = vsel %vm838, %v843, %v848
      %v851 = vunpack.c.l.s4 1934713408
      %v852 = vunpack.c.0.s8 %v851
      %v853 = vperm.slane %v847, %v852
      %v855 = vunpack.c.l.s4 1934713408
      %v856 = vunpack.c.0.s8 %v855
      %v857 = vperm.slane %v849, %v856
      %v858 = vrot.slane %v845, 4
      %v859 = vsel %vm838, %v858, %v839
      %v860 = vrot.slane %v853, 4
      %v861 = vsel %vm838, 0.0, %v860
      %v862 = vrot.slane %v857, 4
      %v863 = vsel %vm838, 0.0, %v862
      %v865 = vunpack.c.l.s4 1934713408
      %v866 = vunpack.c.0.s8 %v865
      %v867 = vperm.slane %v859, %v866
      %869 = vrot.lane.b32.xlu0 %v825, 112
      %v870 = vpop.permute.xlu0 %869
      %871 = vrot.lane.b32.xlu0 %v825, 96
      %v872 = vpop.permute.xlu0 %871
      %873 = vrot.lane.b32.xlu0 %v870, 96
      %v874 = vpop.permute.xlu0 %873
      %v878 = vunpack.c.l.s4 1983009808
      %v879 = vunpack.c.0.s8 %v878
      %v880 = vperm.slane %v872, %v879
      %v881 = vrot.slane %v872, 4
      %v882 = vsel %vm838, 0.0, %v881
      %v884 = vunpack.c.l.s4 1983009808
      %v885 = vunpack.c.0.s8 %v884
      %v886 = vperm.slane %v874, %v885
      %v887 = vrot.slane %v874, 4
      %v888 = vsel %vm838, 0.0, %v887
      %v889 = vrot.slane %v886, 4
      %v890 = vsel %vm838, %v889, %v880
      %v891 = vrot.slane %v880, 4
      %v892 = vsel %vm838, %v886, %v891
      %v894 = vunpack.c.l.s4 1934713408
      %v895 = vunpack.c.0.s8 %v894
      %v896 = vperm.slane %v890, %v895
      %v898 = vunpack.c.l.s4 1934713408
      %v899 = vunpack.c.0.s8 %v898
      %v900 = vperm.slane %v892, %v899
      %v901 = vrot.slane %v888, 4
      %v902 = vsel %vm838, %v901, %v882
      %v903 = vrot.slane %v896, 4
      %v904 = vsel %vm838, 0.0, %v903
      %v905 = vrot.slane %v900, 4
      %v906 = vsel %vm838, 0.0, %v905
      %v908 = vunpack.c.l.s4 1934713408
      %v909 = vunpack.c.0.s8 %v908
      %v910 = vperm.slane %v902, %v909
      %911 = vrot.lane.b32.xlu0 %v825, 64
      %v912 = vpop.permute.xlu0 %911
      %913 = vrot.lane.b32.xlu0 %v870, 64
      %v914 = vpop.permute.xlu0 %913
      %v918 = vunpack.c.l.s4 1983009808
      %v919 = vunpack.c.0.s8 %v918
      %v920 = vperm.slane %v912, %v919
      %v921 = vrot.slane %v912, 4
      %v922 = vsel %vm838, 0.0, %v921
      %v924 = vunpack.c.l.s4 1983009808
      %v925 = vunpack.c.0.s8 %v924
      %v926 = vperm.slane %v914, %v925
      %v927 = vrot.slane %v914, 4
      %v928 = vsel %vm838, 0.0, %v927
      %v929 = vrot.slane %v926, 4
      %v930 = vsel %vm838, %v929, %v920
      %v931 = vrot.slane %v920, 4
      %v932 = vsel %vm838, %v926, %v931
      %v934 = vunpack.c.l.s4 1934713408
      %v935 = vunpack.c.0.s8 %v934
      %v936 = vperm.slane %v930, %v935
      %v938 = vunpack.c.l.s4 1934713408
      %v939 = vunpack.c.0.s8 %v938
      %v940 = vperm.slane %v932, %v939
      %v941 = vrot.slane %v928, 4
      %v942 = vsel %vm838, %v941, %v922
      %v943 = vrot.slane %v936, 4
      %v944 = vsel %vm838, 0.0, %v943
      %v945 = vrot.slane %v940, 4
      %v946 = vsel %vm838, 0.0, %v945
      %v948 = vunpack.c.l.s4 1934713408
      %v949 = vunpack.c.0.s8 %v948
      %v950 = vperm.slane %v942, %v949
      %v951 = vpack.c.bf16 %v853, %v853
      %v952 = vpack.c.bf16 %v867, %v867
      %v953 = vpack.c.bf16 %v896, %v896
      %v954 = vpack.c.bf16 %v904, %v904
      %v955 = vpack.c.bf16 %v900, %v900
      %v956 = vpack.c.bf16 %v906, %v906
      %v957 = vpack.c.bf16 %v910, %v910
      %v958 = vrot.slane %v952, 4
      %vm959 = vcmask 1047556
      %v960 = vsel %vm959, %v958, %v951
      %v962 = vunpack.c.l.s4 1983009808
      %v963 = vunpack.c.0.s8 %v962
      %v964 = vperm.slane %v960, %v963
      %v965 = vpack.c.bf16 %v857, %v857
      %v966 = vrot.slane %v965, 4
      %v967 = vsel %vm959, %v966, %v964
      %v969 = vunpack.c.l.s4 1934713408
      %v970 = vunpack.c.0.s8 %v969
      %v971 = vperm.slane %v967, %v970
      %v972 = vpack.c.bf16 %v861, %v861
      %v973 = vpack.c.bf16 %v863, %v863
      %v974 = vrot.slane %v973, 4
      %v975 = vsel %vm959, %v974, %v972
      %v977 = vunpack.c.l.s4 1934713408
      %v978 = vunpack.c.0.s8 %v977
      %v979 = vperm.slane %v975, %v978
      %v982 = vpack.i.b16 %v979, %v971
      %v983 = vshrl.u32 %v971, 16
      %v984 = vshrl.u32 %v979, 16
      %v985 = vpack.i.b16 %v984, %v983
      %986 = vxpose.xlu0.c.b16.start [1/8] %v953, 128
      %987 = vxpose.xlu0.c.b16.cont [2/8] 0, 128
      %988 = vxpose.xlu0.c.b16.cont [3/8] 0, 128
      %989 = vxpose.xlu0.c.b16.cont [4/8] 0, 128
      %990 = vxpose.xlu0.c.b16.cont [5/8] 0, 128
      %991 = vxpose.xlu0.c.b16.cont [6/8] 0, 128
      %992 = vxpose.xlu0.c.b16.cont [7/8] 0, 128
      %993 = vxpose.xlu0.c.b16.end [8/8] 0, 128
      %v994 = vpop.trf.xlu0
      %v995 = vpop.trf.xlu0
      %v996 = vpop.trf.xlu0
      %v997 = vpop.trf.xlu0
      %v998 = vpop.trf.xlu0
      %v999 = vpop.trf.xlu0
      %v1000 = vpop.trf.xlu0
      %v1001 = vpop.trf.xlu0
      %1002 = vxpose.xlu0.c.b16.start [1/8] %v954, 128
      %1003 = vxpose.xlu0.c.b16.cont [2/8] 0, 128
      %1004 = vxpose.xlu0.c.b16.cont [3/8] 0, 128
      %1005 = vxpose.xlu0.c.b16.cont [4/8] 0, 128
      %1006 = vxpose.xlu0.c.b16.cont [5/8] 0, 128
      %1007 = vxpose.xlu0.c.b16.cont [6/8] 0, 128
      %1008 = vxpose.xlu0.c.b16.cont [7/8] 0, 128
      %1009 = vxpose.xlu0.c.b16.end [8/8] 0, 128
      %v1010 = vpop.trf.xlu0
      %v1011 = vpop.trf.xlu0
      %v1012 = vpop.trf.xlu0
      %v1013 = vpop.trf.xlu0
      %v1014 = vpop.trf.xlu0
      %v1015 = vpop.trf.xlu0
      %v1016 = vpop.trf.xlu0
      %v1017 = vpop.trf.xlu0
      %1018 = vxpose.xlu0.c.b16.start [1/8] %v955, 128
      %1019 = vxpose.xlu0.c.b16.cont [2/8] 0, 128
      %1020 = vxpose.xlu0.c.b16.cont [3/8] 0, 128
      %1021 = vxpose.xlu0.c.b16.cont [4/8] 0, 128
      %1022 = vxpose.xlu0.c.b16.cont [5/8] 0, 128
      %1023 = vxpose.xlu0.c.b16.cont [6/8] 0, 128
      %1024 = vxpose.xlu0.c.b16.cont [7/8] 0, 128
      %1025 = vxpose.xlu0.c.b16.end [8/8] 0, 128
      %v1026 = vpop.trf.xlu0
      %v1027 = vpop.trf.xlu0
      %v1028 = vpop.trf.xlu0
      %v1029 = vpop.trf.xlu0
      %v1030 = vpop.trf.xlu0
      %v1031 = vpop.trf.xlu0
      %v1032 = vpop.trf.xlu0
      %v1033 = vpop.trf.xlu0
      %1034 = vxpose.xlu0.c.b16.start [1/8] %v956, 128
      %1035 = vxpose.xlu0.c.b16.cont [2/8] 0, 128
      %1036 = vxpose.xlu0.c.b16.cont [3/8] 0, 128
      %1037 = vxpose.xlu0.c.b16.cont [4/8] 0, 128
      %1038 = vxpose.xlu0.c.b16.cont [5/8] 0, 128
      %1039 = vxpose.xlu0.c.b16.cont [6/8] 0, 128
      %1040 = vxpose.xlu0.c.b16.cont [7/8] 0, 128
      %1041 = vxpose.xlu0.c.b16.end [8/8] 0, 128
      %v1042 = vpop.trf.xlu0
      %v1043 = vpop.trf.xlu0
      %v1044 = vpop.trf.xlu0
      %v1045 = vpop.trf.xlu0
      %v1046 = vpop.trf.xlu0
      %v1047 = vpop.trf.xlu0
      %v1048 = vpop.trf.xlu0
      %v1049 = vpop.trf.xlu0
      %1050 = vxpose.xlu0.c.b16.start [1/8] %v957, 128
      %1051 = vxpose.xlu0.c.b16.cont [2/8] 0, 128
      %1052 = vxpose.xlu0.c.b16.cont [3/8] 0, 128
      %1053 = vxpose.xlu0.c.b16.cont [4/8] 0, 128
      %1054 = vxpose.xlu0.c.b16.cont [5/8] 0, 128
      %1055 = vxpose.xlu0.c.b16.cont [6/8] 0, 128
      %1056 = vxpose.xlu0.c.b16.cont [7/8] 0, 128
      %1057 = vxpose.xlu0.c.b16.end [8/8] 0, 128
      %v1058 = vpop.trf.xlu0
      %v1059 = vpop.trf.xlu0
      %v1060 = vpop.trf.xlu0
      %v1061 = vpop.trf.xlu0
      %v1062 = vpop.trf.xlu0
      %v1063 = vpop.trf.xlu0
      %v1064 = vpop.trf.xlu0
      %v1065 = vpop.trf.xlu0
      %v1068 = vpack.i.b16 %v1010, %v994
      %v1070 = vshrl.u32 %v994, 16
      %v1071 = vshrl.u32 %v1010, 16
      %v1072 = vpack.i.b16 %v1071, %v1070
      %v1076 = vpack.i.b16 %v1042, %v1026
      %v1078 = vshrl.u32 %v1026, 16
      %v1079 = vshrl.u32 %v1042, 16
      %v1080 = vpack.i.b16 %v1079, %v1078
      %v1084 = vpack.i.b16 0, %v1058
      %v1086 = vshrl.u32 %v1058, 16
      %v1087 = vshrl.u32 0, 16
      %v1088 = vpack.i.b16 %v1087, %v1086
      %v1090 = vpack.i.b16 0, 0
      %v1092 = vpack.i.b16 %v1087, %v1087
      %v1094 = vrot.slane %v1084, 4
      %v1095 = vsel %vm959, %v1094, %v1068
      %v1096 = vrot.slane %v1068, 4
      %v1097 = vsel %vm959, %v1084, %v1096
      %v1099 = vunpack.c.l.s4 1983009808
      %v1100 = vunpack.c.0.s8 %v1099
      %v1101 = vperm.slane %v1095, %v1100
      %v1103 = vunpack.c.l.s4 1983009808
      %v1104 = vunpack.c.0.s8 %v1103
      %v1105 = vperm.slane %v1097, %v1104
      %v1106 = vrot.slane %v1076, 4
      %v1107 = vsel %vm959, %v1090, %v1106
      %v1109 = vunpack.c.l.s4 1983009808
      %v1110 = vunpack.c.0.s8 %v1109
      %v1111 = vperm.slane %v1076, %v1110
      %v1113 = vunpack.c.l.s4 1983009808
      %v1114 = vunpack.c.0.s8 %v1113
      %v1115 = vperm.slane %v1107, %v1114
      %v1116 = vrot.slane %v1111, 4
      %v1117 = vsel %vm959, %v1116, %v1101
      %v1118 = vrot.slane %v1101, 4
      %v1119 = vsel %vm959, %v1111, %v1118
      %v1121 = vunpack.c.l.s4 1934713408
      %v1122 = vunpack.c.0.s8 %v1121
      %v1123 = vperm.slane %v1117, %v1122
      %v1125 = vunpack.c.l.s4 1934713408
      %v1126 = vunpack.c.0.s8 %v1125
      %v1127 = vperm.slane %v1119, %v1126
      %v1128 = vrot.slane %v1115, 4
      %v1129 = vsel %vm959, %v1128, %v1105
      %v1130 = vrot.slane %v1105, 4
      %v1131 = vsel %vm959, %v1115, %v1130
      %v1133 = vunpack.c.l.s4 1934713408
      %v1134 = vunpack.c.0.s8 %v1133
      %v1135 = vperm.slane %v1129, %v1134
      %v1137 = vunpack.c.l.s4 1934713408
      %v1138 = vunpack.c.0.s8 %v1137
      %v1139 = vperm.slane %v1131, %v1138
      %v1140 = vrot.slane %v1123, 4
      %v1141 = vsel %vm959, 0, %v1140
      %v1142 = vrot.slane %v1127, 4
      %v1143 = vsel %vm959, 0, %v1142
      %v1144 = vrot.slane %v1135, 4
      %v1145 = vsel %vm959, 0, %v1144
      %v1146 = vrot.slane %v1139, 4
      %v1147 = vsel %vm959, 0, %v1146
      %v1148 = vrot.slane %v1088, 4
      %v1149 = vsel %vm959, %v1148, %v1072
      %v1150 = vrot.slane %v1072, 4
      %v1151 = vsel %vm959, %v1088, %v1150
      %v1153 = vunpack.c.l.s4 1983009808
      %v1154 = vunpack.c.0.s8 %v1153
      %v1155 = vperm.slane %v1149, %v1154
      %v1157 = vunpack.c.l.s4 1983009808
      %v1158 = vunpack.c.0.s8 %v1157
      %v1159 = vperm.slane %v1151, %v1158
      %v1160 = vrot.slane %v1080, 4
      %v1161 = vsel %vm959, %v1092, %v1160
      %v1163 = vunpack.c.l.s4 1983009808
      %v1164 = vunpack.c.0.s8 %v1163
      %v1165 = vperm.slane %v1080, %v1164
      %v1167 = vunpack.c.l.s4 1983009808
      %v1168 = vunpack.c.0.s8 %v1167
      %v1169 = vperm.slane %v1161, %v1168
      %v1170 = vrot.slane %v1165, 4
      %v1171 = vsel %vm959, %v1170, %v1155
      %v1172 = vrot.slane %v1155, 4
      %v1173 = vsel %vm959, %v1165, %v1172
      %v1175 = vunpack.c.l.s4 1934713408
      %v1176 = vunpack.c.0.s8 %v1175
      %v1177 = vperm.slane %v1171, %v1176
      %v1179 = vunpack.c.l.s4 1934713408
      %v1180 = vunpack.c.0.s8 %v1179
      %v1181 = vperm.slane %v1173, %v1180
      %v1182 = vrot.slane %v1169, 4
      %v1183 = vsel %vm959, %v1182, %v1159
      %v1184 = vrot.slane %v1159, 4
      %v1185 = vsel %vm959, %v1169, %v1184
      %v1187 = vunpack.c.l.s4 1934713408
      %v1188 = vunpack.c.0.s8 %v1187
      %v1189 = vperm.slane %v1183, %v1188
      %v1191 = vunpack.c.l.s4 1934713408
      %v1192 = vunpack.c.0.s8 %v1191
      %v1193 = vperm.slane %v1185, %v1192
      %v1194 = vrot.slane %v1177, 4
      %v1195 = vsel %vm959, 0, %v1194
      %v1196 = vrot.slane %v1181, 4
      %v1197 = vsel %vm959, 0, %v1196
      %v1198 = vrot.slane %v1189, 4
      %v1199 = vsel %vm959, 0, %v1198
      %v1200 = vrot.slane %v1193, 4
      %v1201 = vsel %vm959, 0, %v1200
      %1202 = vxpose.xlu0.c.b16.start [1/8] %v1123, 128
      %1203 = vxpose.xlu0.c.b16.cont [2/8] 0, 128
      %1204 = vxpose.xlu0.c.b16.cont [3/8] 0, 128
      %1205 = vxpose.xlu0.c.b16.cont [4/8] 0, 128
      %1206 = vxpose.xlu0.c.b16.cont [5/8] 0, 128
      %1207 = vxpose.xlu0.c.b16.cont [6/8] 0, 128
      %1208 = vxpose.xlu0.c.b16.cont [7/8] 0, 128
      %1209 = vxpose.xlu0.c.b16.end [8/8] 0, 128
      %v1210 = vpop.trf.xlu0
      %v1211 = vpop.trf.xlu0
      %v1212 = vpop.trf.xlu0
      %v1213 = vpop.trf.xlu0
      %v1214 = vpop.trf.xlu0
      %v1215 = vpop.trf.xlu0
      %v1216 = vpop.trf.xlu0
      %v1217 = vpop.trf.xlu0
      %1218 = vxpose.xlu0.c.b16.start [1/8] %v1177, 128
      %1219 = vxpose.xlu0.c.b16.cont [2/8] 0, 128
      %1220 = vxpose.xlu0.c.b16.cont [3/8] 0, 128
      %1221 = vxpose.xlu0.c.b16.cont [4/8] 0, 128
      %1222 = vxpose.xlu0.c.b16.cont [5/8] 0, 128
      %1223 = vxpose.xlu0.c.b16.cont [6/8] 0, 128
      %1224 = vxpose.xlu0.c.b16.cont [7/8] 0, 128
      %1225 = vxpose.xlu0.c.b16.end [8/8] 0, 128
      %v1226 = vpop.trf.xlu0
      %v1227 = vpop.trf.xlu0
      %v1228 = vpop.trf.xlu0
      %v1229 = vpop.trf.xlu0
      %v1230 = vpop.trf.xlu0
      %v1231 = vpop.trf.xlu0
      %v1232 = vpop.trf.xlu0
      %v1233 = vpop.trf.xlu0
      %1234 = vxpose.xlu0.c.b16.start [1/8] %v1141, 128
      %1235 = vxpose.xlu0.c.b16.cont [2/8] 0, 128
      %1236 = vxpose.xlu0.c.b16.cont [3/8] 0, 128
      %1237 = vxpose.xlu0.c.b16.cont [4/8] 0, 128
      %1238 = vxpose.xlu0.c.b16.cont [5/8] 0, 128
      %1239 = vxpose.xlu0.c.b16.cont [6/8] 0, 128
      %1240 = vxpose.xlu0.c.b16.cont [7/8] 0, 128
      %1241 = vxpose.xlu0.c.b16.end [8/8] 0, 128
      %v1242 = vpop.trf.xlu0
      %v1243 = vpop.trf.xlu0
      %v1244 = vpop.trf.xlu0
      %v1245 = vpop.trf.xlu0
      %v1246 = vpop.trf.xlu0
      %v1247 = vpop.trf.xlu0
      %v1248 = vpop.trf.xlu0
      %v1249 = vpop.trf.xlu0
      %1250 = vxpose.xlu0.c.b16.start [1/8] %v1195, 128
      %1251 = vxpose.xlu0.c.b16.cont [2/8] 0, 128
      %1252 = vxpose.xlu0.c.b16.cont [3/8] 0, 128
      %1253 = vxpose.xlu0.c.b16.cont [4/8] 0, 128
      %1254 = vxpose.xlu0.c.b16.cont [5/8] 0, 128
      %1255 = vxpose.xlu0.c.b16.cont [6/8] 0, 128
      %1256 = vxpose.xlu0.c.b16.cont [7/8] 0, 128
      %1257 = vxpose.xlu0.c.b16.end [8/8] 0, 128
      %v1258 = vpop.trf.xlu0
      %v1259 = vpop.trf.xlu0
      %v1260 = vpop.trf.xlu0
      %v1261 = vpop.trf.xlu0
      %v1262 = vpop.trf.xlu0
      %v1263 = vpop.trf.xlu0
      %v1264 = vpop.trf.xlu0
      %v1265 = vpop.trf.xlu0
      %1266 = vxpose.xlu0.c.b16.start [1/8] %v1127, 128
      %1267 = vxpose.xlu0.c.b16.cont [2/8] 0, 128
      %1268 = vxpose.xlu0.c.b16.cont [3/8] 0, 128
      %1269 = vxpose.xlu0.c.b16.cont [4/8] 0, 128
      %1270 = vxpose.xlu0.c.b16.cont [5/8] 0, 128
      %1271 = vxpose.xlu0.c.b16.cont [6/8] 0, 128
      %1272 = vxpose.xlu0.c.b16.cont [7/8] 0, 128
      %1273 = vxpose.xlu0.c.b16.end [8/8] 0, 128
      %v1274 = vpop.trf.xlu0
      %v1275 = vpop.trf.xlu0
      %v1276 = vpop.trf.xlu0
      %v1277 = vpop.trf.xlu0
      %v1278 = vpop.trf.xlu0
      %v1279 = vpop.trf.xlu0
      %v1280 = vpop.trf.xlu0
      %v1281 = vpop.trf.xlu0
      %1282 = vxpose.xlu0.c.b16.start [1/8] %v1181, 128
      %1283 = vxpose.xlu0.c.b16.cont [2/8] 0, 128
      %1284 = vxpose.xlu0.c.b16.cont [3/8] 0, 128
      %1285 = vxpose.xlu0.c.b16.cont [4/8] 0, 128
      %1286 = vxpose.xlu0.c.b16.cont [5/8] 0, 128
      %1287 = vxpose.xlu0.c.b16.cont [6/8] 0, 128
      %1288 = vxpose.xlu0.c.b16.cont [7/8] 0, 128
      %1289 = vxpose.xlu0.c.b16.end [8/8] 0, 128
      %v1290 = vpop.trf.xlu0
      %v1291 = vpop.trf.xlu0
      %v1292 = vpop.trf.xlu0
      %v1293 = vpop.trf.xlu0
      %v1294 = vpop.trf.xlu0
      %v1295 = vpop.trf.xlu0
      %v1296 = vpop.trf.xlu0
      %v1297 = vpop.trf.xlu0
      %1298 = vxpose.xlu0.c.b16.start [1/8] %v1143, 128
      %1299 = vxpose.xlu0.c.b16.cont [2/8] 0, 128
      %1300 = vxpose.xlu0.c.b16.cont [3/8] 0, 128
      %1301 = vxpose.xlu0.c.b16.cont [4/8] 0, 128
      %1302 = vxpose.xlu0.c.b16.cont [5/8] 0, 128
      %1303 = vxpose.xlu0.c.b16.cont [6/8] 0, 128
      %1304 = vxpose.xlu0.c.b16.cont [7/8] 0, 128
      %1305 = vxpose.xlu0.c.b16.end [8/8] 0, 128
      %v1306 = vpop.trf.xlu0
      %v1307 = vpop.trf.xlu0
      %v1308 = vpop.trf.xlu0
      %v1309 = vpop.trf.xlu0
      %v1310 = vpop.trf.xlu0
      %v1311 = vpop.trf.xlu0
      %v1312 = vpop.trf.xlu0
      %v1313 = vpop.trf.xlu0
      %1314 = vxpose.xlu0.c.b16.start [1/8] %v1197, 128
      %1315 = vxpose.xlu0.c.b16.cont [2/8] 0, 128
      %1316 = vxpose.xlu0.c.b16.cont [3/8] 0, 128
      %1317 = vxpose.xlu0.c.b16.cont [4/8] 0, 128
      %1318 = vxpose.xlu0.c.b16.cont [5/8] 0, 128
      %1319 = vxpose.xlu0.c.b16.cont [6/8] 0, 128
      %1320 = vxpose.xlu0.c.b16.cont [7/8] 0, 128
      %1321 = vxpose.xlu0.c.b16.end [8/8] 0, 128
      %v1322 = vpop.trf.xlu0
      %v1323 = vpop.trf.xlu0
      %v1324 = vpop.trf.xlu0
      %v1325 = vpop.trf.xlu0
      %v1326 = vpop.trf.xlu0
      %v1327 = vpop.trf.xlu0
      %v1328 = vpop.trf.xlu0
      %v1329 = vpop.trf.xlu0
      %1330 = vxpose.xlu0.c.b16.start [1/8] %v1135, 128
      %1331 = vxpose.xlu0.c.b16.cont [2/8] 0, 128
      %1332 = vxpose.xlu0.c.b16.cont [3/8] 0, 128
      %1333 = vxpose.xlu0.c.b16.cont [4/8] 0, 128
      %1334 = vxpose.xlu0.c.b16.cont [5/8] 0, 128
      %1335 = vxpose.xlu0.c.b16.cont [6/8] 0, 128
      %1336 = vxpose.xlu0.c.b16.cont [7/8] 0, 128
      %1337 = vxpose.xlu0.c.b16.end [8/8] 0, 128
      %v1338 = vpop.trf.xlu0
      %v1339 = vpop.trf.xlu0
      %v1340 = vpop.trf.xlu0
      %v1341 = vpop.trf.xlu0
      %v1342 = vpop.trf.xlu0
      %v1343 = vpop.trf.xlu0
      %v1344 = vpop.trf.xlu0
      %v1345 = vpop.trf.xlu0
      %1346 = vxpose.xlu0.c.b16.start [1/8] %v1189, 128
      %1347 = vxpose.xlu0.c.b16.cont [2/8] 0, 128
      %1348 = vxpose.xlu0.c.b16.cont [3/8] 0, 128
      %1349 = vxpose.xlu0.c.b16.cont [4/8] 0, 128
      %1350 = vxpose.xlu0.c.b16.cont [5/8] 0, 128
      %1351 = vxpose.xlu0.c.b16.cont [6/8] 0, 128
      %1352 = vxpose.xlu0.c.b16.cont [7/8] 0, 128
      %1353 = vxpose.xlu0.c.b16.end [8/8] 0, 128
      %v1354 = vpop.trf.xlu0
      %v1355 = vpop.trf.xlu0
      %v1356 = vpop.trf.xlu0
      %v1357 = vpop.trf.xlu0
      %v1358 = vpop.trf.xlu0
      %v1359 = vpop.trf.xlu0
      %v1360 = vpop.trf.xlu0
      %v1361 = vpop.trf.xlu0
      %1362 = vxpose.xlu0.c.b16.start [1/8] %v1145, 128
      %1363 = vxpose.xlu0.c.b16.cont [2/8] 0, 128
      %1364 = vxpose.xlu0.c.b16.cont [3/8] 0, 128
      %1365 = vxpose.xlu0.c.b16.cont [4/8] 0, 128
      %1366 = vxpose.xlu0.c.b16.cont [5/8] 0, 128
      %1367 = vxpose.xlu0.c.b16.cont [6/8] 0, 128
      %1368 = vxpose.xlu0.c.b16.cont [7/8] 0, 128
      %1369 = vxpose.xlu0.c.b16.end [8/8] 0, 128
      %v1370 = vpop.trf.xlu0
      %v1371 = vpop.trf.xlu0
      %v1372 = vpop.trf.xlu0
      %v1373 = vpop.trf.xlu0
      %v1374 = vpop.trf.xlu0
      %v1375 = vpop.trf.xlu0
      %v1376 = vpop.trf.xlu0
      %v1377 = vpop.trf.xlu0
      %1378 = vxpose.xlu0.c.b16.start [1/8] %v1199, 128
      %1379 = vxpose.xlu0.c.b16.cont [2/8] 0, 128
      %1380 = vxpose.xlu0.c.b16.cont [3/8] 0, 128
      %1381 = vxpose.xlu0.c.b16.cont [4/8] 0, 128
      %1382 = vxpose.xlu0.c.b16.cont [5/8] 0, 128
      %1383 = vxpose.xlu0.c.b16.cont [6/8] 0, 128
      %1384 = vxpose.xlu0.c.b16.cont [7/8] 0, 128
      %1385 = vxpose.xlu0.c.b16.end [8/8] 0, 128
      %v1386 = vpop.trf.xlu0
      %v1387 = vpop.trf.xlu0
      %v1388 = vpop.trf.xlu0
      %v1389 = vpop.trf.xlu0
      %v1390 = vpop.trf.xlu0
      %v1391 = vpop.trf.xlu0
      %v1392 = vpop.trf.xlu0
      %v1393 = vpop.trf.xlu0
      %1394 = vxpose.xlu0.c.b16.start [1/8] %v1139, 128
      %1395 = vxpose.xlu0.c.b16.cont [2/8] 0, 128
      %1396 = vxpose.xlu0.c.b16.cont [3/8] 0, 128
      %1397 = vxpose.xlu0.c.b16.cont [4/8] 0, 128
      %1398 = vxpose.xlu0.c.b16.cont [5/8] 0, 128
      %1399 = vxpose.xlu0.c.b16.cont [6/8] 0, 128
      %1400 = vxpose.xlu0.c.b16.cont [7/8] 0, 128
      %1401 = vxpose.xlu0.c.b16.end [8/8] 0, 128
      %v1402 = vpop.trf.xlu0
      %v1403 = vpop.trf.xlu0
      %v1404 = vpop.trf.xlu0
      %v1405 = vpop.trf.xlu0
      %v1406 = vpop.trf.xlu0
      %v1407 = vpop.trf.xlu0
      %v1408 = vpop.trf.xlu0
      %v1409 = vpop.trf.xlu0
      %1410 = vxpose.xlu0.c.b16.start [1/8] %v1193, 128
      %1411 = vxpose.xlu0.c.b16.cont [2/8] 0, 128
      %1412 = vxpose.xlu0.c.b16.cont [3/8] 0, 128
      %1413 = vxpose.xlu0.c.b16.cont [4/8] 0, 128
      %1414 = vxpose.xlu0.c.b16.cont [5/8] 0, 128
      %1415 = vxpose.xlu0.c.b16.cont [6/8] 0, 128
      %1416 = vxpose.xlu0.c.b16.cont [7/8] 0, 128
      %1417 = vxpose.xlu0.c.b16.end [8/8] 0, 128
      %v1418 = vpop.trf.xlu0
      %v1419 = vpop.trf.xlu0
      %v1420 = vpop.trf.xlu0
      %v1421 = vpop.trf.xlu0
      %v1422 = vpop.trf.xlu0
      %v1423 = vpop.trf.xlu0
      %v1424 = vpop.trf.xlu0
      %v1425 = vpop.trf.xlu0
      %1426 = vxpose.xlu0.c.b16.start [1/8] %v1147, 128
      %1427 = vxpose.xlu0.c.b16.cont [2/8] 0, 128
      %1428 = vxpose.xlu0.c.b16.cont [3/8] 0, 128
      %1429 = vxpose.xlu0.c.b16.cont [4/8] 0, 128
      %1430 = vxpose.xlu0.c.b16.cont [5/8] 0, 128
      %1431 = vxpose.xlu0.c.b16.cont [6/8] 0, 128
      %1432 = vxpose.xlu0.c.b16.cont [7/8] 0, 128
      %1433 = vxpose.xlu0.c.b16.end [8/8] 0, 128
      %v1434 = vpop.trf.xlu0
      %v1435 = vpop.trf.xlu0
      %v1436 = vpop.trf.xlu0
      %v1437 = vpop.trf.xlu0
      %v1438 = vpop.trf.xlu0
      %v1439 = vpop.trf.xlu0
      %v1440 = vpop.trf.xlu0
      %v1441 = vpop.trf.xlu0
      %1442 = vxpose.xlu0.c.b16.start [1/8] %v1201, 128
      %1443 = vxpose.xlu0.c.b16.cont [2/8] 0, 128
      %1444 = vxpose.xlu0.c.b16.cont [3/8] 0, 128
      %1445 = vxpose.xlu0.c.b16.cont [4/8] 0, 128
      %1446 = vxpose.xlu0.c.b16.cont [5/8] 0, 128
      %1447 = vxpose.xlu0.c.b16.cont [6/8] 0, 128
      %1448 = vxpose.xlu0.c.b16.cont [7/8] 0, 128
      %1449 = vxpose.xlu0.c.b16.end [8/8] 0, 128
      %v1450 = vpop.trf.xlu0
      %v1451 = vpop.trf.xlu0
      %v1452 = vpop.trf.xlu0
      %v1453 = vpop.trf.xlu0
      %v1454 = vpop.trf.xlu0
      %v1455 = vpop.trf.xlu0
      %v1456 = vpop.trf.xlu0
      %v1457 = vpop.trf.xlu0
      %v1458 = vrot.slane %v1274, 4
      %v1459 = vsel %vm959, %v1458, %v1210
      %v1461 = vunpack.c.l.s4 1983009808
      %v1462 = vunpack.c.0.s8 %v1461
      %v1463 = vperm.slane %v1459, %v1462
      %v1464 = vrot.slane %v1306, 4
      %v1465 = vsel %vm959, %v1464, %v1242
      %v1467 = vunpack.c.l.s4 1983009808
      %v1468 = vunpack.c.0.s8 %v1467
      %v1469 = vperm.slane %v1465, %v1468
      %v1470 = vrot.slane %v1402, 4
      %v1471 = vsel %vm959, %v1470, %v1338
      %v1473 = vunpack.c.l.s4 1983009808
      %v1474 = vunpack.c.0.s8 %v1473
      %v1475 = vperm.slane %v1471, %v1474
      %v1476 = vrot.slane %v1434, 4
      %v1477 = vsel %vm959, %v1476, %v1370
      %v1479 = vunpack.c.l.s4 1983009808
      %v1480 = vunpack.c.0.s8 %v1479
      %v1481 = vperm.slane %v1477, %v1480
      %v1482 = vrot.slane %v1469, 4
      %v1483 = vsel %vm959, %v1482, %v1463
      %v1485 = vunpack.c.l.s4 1934713408
      %v1486 = vunpack.c.0.s8 %v1485
      %v1487 = vperm.slane %v1483, %v1486
      %v1488 = vrot.slane %v1481, 4
      %v1489 = vsel %vm959, %v1488, %v1475
      %v1491 = vunpack.c.l.s4 1934713408
      %v1492 = vunpack.c.0.s8 %v1491
      %v1493 = vperm.slane %v1489, %v1492
      %v1494 = vrot.slane %v1493, 4
      %v1495 = vsel %vm959, %v1494, %v1487
      %v1496 = vrot.slane %v1290, 4
      %v1497 = vsel %vm959, %v1496, %v1226
      %v1499 = vunpack.c.l.s4 1983009808
      %v1500 = vunpack.c.0.s8 %v1499
      %v1501 = vperm.slane %v1497, %v1500
      %v1502 = vrot.slane %v1322, 4
      %v1503 = vsel %vm959, %v1502, %v1258
      %v1505 = vunpack.c.l.s4 1983009808
      %v1506 = vunpack.c.0.s8 %v1505
      %v1507 = vperm.slane %v1503, %v1506
      %v1508 = vrot.slane %v1418, 4
      %v1509 = vsel %vm959, %v1508, %v1354
      %v1511 = vunpack.c.l.s4 1983009808
      %v1512 = vunpack.c.0.s8 %v1511
      %v1513 = vperm.slane %v1509, %v1512
      %v1514 = vrot.slane %v1450, 4
      %v1515 = vsel %vm959, %v1514, %v1386
      %v1517 = vunpack.c.l.s4 1983009808
      %v1518 = vunpack.c.0.s8 %v1517
      %v1519 = vperm.slane %v1515, %v1518
      %v1520 = vrot.slane %v1507, 4
      %v1521 = vsel %vm959, %v1520, %v1501
      %v1523 = vunpack.c.l.s4 1934713408
      %v1524 = vunpack.c.0.s8 %v1523
      %v1525 = vperm.slane %v1521, %v1524
      %v1526 = vrot.slane %v1519, 4
      %v1527 = vsel %vm959, %v1526, %v1513
      %v1529 = vunpack.c.l.s4 1934713408
      %v1530 = vunpack.c.0.s8 %v1529
      %v1531 = vperm.slane %v1527, %v1530
      %v1532 = vrot.slane %v1531, 4
      %v1533 = vsel %vm959, %v1532, %v1525
      %v1536 = vpack.i.b16 %v1533, %v1495
      %v1538 = vshrl.u32 %v1495, 16
      %v1539 = vshrl.u32 %v1533, 16
      %v1540 = vpack.i.b16 %v1539, %v1538
      %vm1542 = vcmask 130048
      %v1544 = vsel %vm1542, %v982, 0
      %1546 = vmatpush.bf16.msra.mxu0 0
      %1547 = vmatpush.bf16.msra.mxu0 0
      %1548 = vmatpush.bf16.msra.mxu0 0
      %1549 = vmatpush.bf16.msra.mxu0 0
      %1550 = vmatpush.bf16.msra.mxu0 0
      %1551 = vmatpush.bf16.msra.mxu0 0
      %1552 = vmatpush.bf16.msra.mxu0 0
      %1553 = vmatpush.bf16.msra.mxu0 %v1536
      %1554 = vmatmul.bf16.gmra.mxu0 %v1544
      %v1555 = vpop.f32.mrf.mxu0
      %v1556 = vadd.f32 0.0, %v1555
      %v1557 = vpop.f32.mrf.mxu0
      %1558 = vdwg.mxu0
      %v1560 = vsel %vm1542, %v985, 0
      %1562 = vmatpush.bf16.msra.mxu0 0
      %1563 = vmatpush.bf16.msra.mxu0 0
      %1564 = vmatpush.bf16.msra.mxu0 0
      %1565 = vmatpush.bf16.msra.mxu0 0
      %1566 = vmatpush.bf16.msra.mxu0 0
      %1567 = vmatpush.bf16.msra.mxu0 0
      %1568 = vmatpush.bf16.msra.mxu0 0
      %1569 = vmatpush.bf16.msra.mxu0 %v1540
      %1570 = vmatmul.bf16.gmra.mxu0 %v1560
      %v1571 = vpop.f32.mrf.mxu0
      %v1572 = vadd.f32 0.0, %v1571
      %v1573 = vpop.f32.mrf.mxu0
      %1574 = vdwg.mxu0
      %vm1575 = vcmask 36864
      %v1576 = vsel %vm1575, %v1556, -inf
      %1577 = vmax.xlane.f32.xlu0 %v1576
      %v1578 = vpop.xlane.xlu0 %1577
      %v1579 = vsel %vm1575, %v1572, -inf
      %1580 = vmax.xlane.f32.xlu0 %v1579
      %v1581 = vpop.xlane.xlu0 %1580
      %v1582 = vsub.f32 %v1556, %v1578
      %v1583 = vsub.f32 %v1572, %v1581
      %v1584 = vmul.f32 %v1582, 1.442695
      %v1585 = vpow.pop %v1584
      %v1586 = vmul.f32 %v1583, 1.442695
      %v1587 = vpow.pop %v1586
      %v1588 = vsel %vm1575, %v1585, 0.0
      %1589 = vadd.xlane.f32.xlu0 %v1588
      %v1590 = vpop.xlane.xlu0 %1589
      %v1591 = vsel %vm1575, %v1587, 0.0
      %1592 = vadd.xlane.f32.xlu0 %v1591
      %v1593 = vpop.xlane.xlu0 %1592
      %v1594 = vrcp.pop %v1590
      %v1595 = vrcp.pop %v1593
      %v1596 = vmul.f32 %v1585, %v1594
      %v1597 = vmul.f32 %v1587, %v1595
      %v1598 = vpack.c.bf16 %v1596, %v1596
      %v1599 = vpack.c.bf16 %v1597, %v1597
      %v1600 = vpack.c.bf16 %v936, %v936
      %v1601 = vpack.c.bf16 %v944, %v944
      %v1602 = vpack.c.bf16 %v940, %v940
      %v1603 = vpack.c.bf16 %v946, %v946
      %v1604 = vpack.c.bf16 %v950, %v950
      %1605 = vxpose.xlu0.c.b16.start [1/8] %v1600, 128
      %1606 = vxpose.xlu0.c.b16.cont [2/8] 0, 128
      %1607 = vxpose.xlu0.c.b16.cont [3/8] 0, 128
      %1608 = vxpose.xlu0.c.b16.cont [4/8] 0, 128
      %1609 = vxpose.xlu0.c.b16.cont [5/8] 0, 128
      %1610 = vxpose.xlu0.c.b16.cont [6/8] 0, 128
      %1611 = vxpose.xlu0.c.b16.cont [7/8] 0, 128
      %1612 = vxpose.xlu0.c.b16.end [8/8] 0, 128
      %v1613 = vpop.trf.xlu0
      %v1614 = vpop.trf.xlu0
      %v1615 = vpop.trf.xlu0
      %v1616 = vpop.trf.xlu0
      %v1617 = vpop.trf.xlu0
      %v1618 = vpop.trf.xlu0
      %v1619 = vpop.trf.xlu0
      %v1620 = vpop.trf.xlu0
      %1621 = vxpose.xlu0.c.b16.start [1/8] %v1601, 128
      %1622 = vxpose.xlu0.c.b16.cont [2/8] 0, 128
      %1623 = vxpose.xlu0.c.b16.cont [3/8] 0, 128
      %1624 = vxpose.xlu0.c.b16.cont [4/8] 0, 128
      %1625 = vxpose.xlu0.c.b16.cont [5/8] 0, 128
      %1626 = vxpose.xlu0.c.b16.cont [6/8] 0, 128
      %1627 = vxpose.xlu0.c.b16.cont [7/8] 0, 128
      %1628 = vxpose.xlu0.c.b16.end [8/8] 0, 128
      %v1629 = vpop.trf.xlu0
      %v1630 = vpop.trf.xlu0
      %v1631 = vpop.trf.xlu0
      %v1632 = vpop.trf.xlu0
      %v1633 = vpop.trf.xlu0
      %v1634 = vpop.trf.xlu0
      %v1635 = vpop.trf.xlu0
      %v1636 = vpop.trf.xlu0
      %1637 = vxpose.xlu0.c.b16.start [1/8] %v1602, 128
      %1638 = vxpose.xlu0.c.b16.cont [2/8] 0, 128
      %1639 = vxpose.xlu0.c.b16.cont [3/8] 0, 128
      %1640 = vxpose.xlu0.c.b16.cont [4/8] 0, 128
      %1641 = vxpose.xlu0.c.b16.cont [5/8] 0, 128
      %1642 = vxpose.xlu0.c.b16.cont [6/8] 0, 128
      %1643 = vxpose.xlu0.c.b16.cont [7/8] 0, 128
      %1644 = vxpose.xlu0.c.b16.end [8/8] 0, 128
      %v1645 = vpop.trf.xlu0
      %v1646 = vpop.trf.xlu0
      %v1647 = vpop.trf.xlu0
      %v1648 = vpop.trf.xlu0
      %v1649 = vpop.trf.xlu0
      %v1650 = vpop.trf.xlu0
      %v1651 = vpop.trf.xlu0
      %v1652 = vpop.trf.xlu0
      %1653 = vxpose.xlu0.c.b16.start [1/8] %v1603, 128
      %1654 = vxpose.xlu0.c.b16.cont [2/8] 0, 128
      %1655 = vxpose.xlu0.c.b16.cont [3/8] 0, 128
      %1656 = vxpose.xlu0.c.b16.cont [4/8] 0, 128
      %1657 = vxpose.xlu0.c.b16.cont [5/8] 0, 128
      %1658 = vxpose.xlu0.c.b16.cont [6/8] 0, 128
      %1659 = vxpose.xlu0.c.b16.cont [7/8] 0, 128
      %1660 = vxpose.xlu0.c.b16.end [8/8] 0, 128
      %v1661 = vpop.trf.xlu0
      %v1662 = vpop.trf.xlu0
      %v1663 = vpop.trf.xlu0
      %v1664 = vpop.trf.xlu0
      %v1665 = vpop.trf.xlu0
      %v1666 = vpop.trf.xlu0
      %v1667 = vpop.trf.xlu0
      %v1668 = vpop.trf.xlu0
      %1669 = vxpose.xlu0.c.b16.start [1/8] %v1604, 128
      %1670 = vxpose.xlu0.c.b16.cont [2/8] 0, 128
      %1671 = vxpose.xlu0.c.b16.cont [3/8] 0, 128
      %1672 = vxpose.xlu0.c.b16.cont [4/8] 0, 128
      %1673 = vxpose.xlu0.c.b16.cont [5/8] 0, 128
      %1674 = vxpose.xlu0.c.b16.cont [6/8] 0, 128
      %1675 = vxpose.xlu0.c.b16.cont [7/8] 0, 128
      %1676 = vxpose.xlu0.c.b16.end [8/8] 0, 128
      %v1677 = vpop.trf.xlu0
      %v1678 = vpop.trf.xlu0
      %v1679 = vpop.trf.xlu0
      %v1680 = vpop.trf.xlu0
      %v1681 = vpop.trf.xlu0
      %v1682 = vpop.trf.xlu0
      %v1683 = vpop.trf.xlu0
      %v1684 = vpop.trf.xlu0
      %v1687 = vpack.i.b16 %v1629, %v1613
      %v1689 = vshrl.u32 %v1613, 16
      %v1690 = vshrl.u32 %v1629, 16
      %v1691 = vpack.i.b16 %v1690, %v1689
      %v1695 = vpack.i.b16 %v1661, %v1645
      %v1697 = vshrl.u32 %v1645, 16
      %v1698 = vshrl.u32 %v1661, 16
      %v1699 = vpack.i.b16 %v1698, %v1697
      %v1702 = vpack.i.b16 0, %v1677
      %v1704 = vshrl.u32 %v1677, 16
      %v1705 = vpack.i.b16 %v1087, %v1704
      %v1707 = vrot.slane %v1702, 4
      %v1708 = vsel %vm959, %v1707, %v1687
      %v1709 = vrot.slane %v1687, 4
      %v1710 = vsel %vm959, %v1702, %v1709
      %v1712 = vunpack.c.l.s4 1983009808
      %v1713 = vunpack.c.0.s8 %v1712
      %v1714 = vperm.slane %v1708, %v1713
      %v1716 = vunpack.c.l.s4 1983009808
      %v1717 = vunpack.c.0.s8 %v1716
      %v1718 = vperm.slane %v1710, %v1717
      %v1719 = vrot.slane %v1695, 4
      %v1720 = vsel %vm959, %v1090, %v1719
      %v1722 = vunpack.c.l.s4 1983009808
      %v1723 = vunpack.c.0.s8 %v1722
      %v1724 = vperm.slane %v1695, %v1723
      %v1726 = vunpack.c.l.s4 1983009808
      %v1727 = vunpack.c.0.s8 %v1726
      %v1728 = vperm.slane %v1720, %v1727
      %v1729 = vrot.slane %v1724, 4
      %v1730 = vsel %vm959, %v1729, %v1714
      %v1731 = vrot.slane %v1714, 4
      %v1732 = vsel %vm959, %v1724, %v1731
      %v1734 = vunpack.c.l.s4 1934713408
      %v1735 = vunpack.c.0.s8 %v1734
      %v1736 = vperm.slane %v1730, %v1735
      %v1738 = vunpack.c.l.s4 1934713408
      %v1739 = vunpack.c.0.s8 %v1738
      %v1740 = vperm.slane %v1732, %v1739
      %v1741 = vrot.slane %v1728, 4
      %v1742 = vsel %vm959, %v1741, %v1718
      %v1743 = vrot.slane %v1718, 4
      %v1744 = vsel %vm959, %v1728, %v1743
      %v1746 = vunpack.c.l.s4 1934713408
      %v1747 = vunpack.c.0.s8 %v1746
      %v1748 = vperm.slane %v1742, %v1747
      %v1750 = vunpack.c.l.s4 1934713408
      %v1751 = vunpack.c.0.s8 %v1750
      %v1752 = vperm.slane %v1744, %v1751
      %v1753 = vrot.slane %v1736, 4
      %v1754 = vsel %vm959, 0, %v1753
      %v1755 = vrot.slane %v1740, 4
      %v1756 = vsel %vm959, 0, %v1755
      %v1757 = vrot.slane %v1748, 4
      %v1758 = vsel %vm959, 0, %v1757
      %v1759 = vrot.slane %v1752, 4
      %v1760 = vsel %vm959, 0, %v1759
      %v1761 = vrot.slane %v1705, 4
      %v1762 = vsel %vm959, %v1761, %v1691
      %v1763 = vrot.slane %v1691, 4
      %v1764 = vsel %vm959, %v1705, %v1763
      %v1766 = vunpack.c.l.s4 1983009808
      %v1767 = vunpack.c.0.s8 %v1766
      %v1768 = vperm.slane %v1762, %v1767
      %v1770 = vunpack.c.l.s4 1983009808
      %v1771 = vunpack.c.0.s8 %v1770
      %v1772 = vperm.slane %v1764, %v1771
      %v1773 = vrot.slane %v1699, 4
      %v1774 = vsel %vm959, %v1092, %v1773
      %v1776 = vunpack.c.l.s4 1983009808
      %v1777 = vunpack.c.0.s8 %v1776
      %v1778 = vperm.slane %v1699, %v1777
      %v1780 = vunpack.c.l.s4 1983009808
      %v1781 = vunpack.c.0.s8 %v1780
      %v1782 = vperm.slane %v1774, %v1781
      %v1783 = vrot.slane %v1778, 4
      %v1784 = vsel %vm959, %v1783, %v1768
      %v1785 = vrot.slane %v1768, 4
      %v1786 = vsel %vm959, %v1778, %v1785
      %v1788 = vunpack.c.l.s4 1934713408
      %v1789 = vunpack.c.0.s8 %v1788
      %v1790 = vperm.slane %v1784, %v1789
      %v1792 = vunpack.c.l.s4 1934713408
      %v1793 = vunpack.c.0.s8 %v1792
      %v1794 = vperm.slane %v1786, %v1793
      %v1795 = vrot.slane %v1782, 4
      %v1796 = vsel %vm959, %v1795, %v1772
      %v1797 = vrot.slane %v1772, 4
      %v1798 = vsel %vm959, %v1782, %v1797
      %v1800 = vunpack.c.l.s4 1934713408
      %v1801 = vunpack.c.0.s8 %v1800
      %v1802 = vperm.slane %v1796, %v1801
      %v1804 = vunpack.c.l.s4 1934713408
      %v1805 = vunpack.c.0.s8 %v1804
      %v1806 = vperm.slane %v1798, %v1805
      %v1807 = vrot.slane %v1790, 4
      %v1808 = vsel %vm959, 0, %v1807
      %v1809 = vrot.slane %v1794, 4
      %v1810 = vsel %vm959, 0, %v1809
      %v1811 = vrot.slane %v1802, 4
      %v1812 = vsel %vm959, 0, %v1811
      %v1813 = vrot.slane %v1806, 4
      %v1814 = vsel %vm959, 0, %v1813
      %1815 = vxpose.xlu0.c.b16.start [1/8] %v1736, 128
      %1816 = vxpose.xlu0.c.b16.cont [2/8] 0, 128
      %1817 = vxpose.xlu0.c.b16.cont [3/8] 0, 128
      %1818 = vxpose.xlu0.c.b16.cont [4/8] 0, 128
      %1819 = vxpose.xlu0.c.b16.cont [5/8] 0, 128
      %1820 = vxpose.xlu0.c.b16.cont [6/8] 0, 128
      %1821 = vxpose.xlu0.c.b16.cont [7/8] 0, 128
      %1822 = vxpose.xlu0.c.b16.end [8/8] 0, 128
      %v1823 = vpop.trf.xlu0
      %v1824 = vpop.trf.xlu0
      %v1825 = vpop.trf.xlu0
      %v1826 = vpop.trf.xlu0
      %v1827 = vpop.trf.xlu0
      %v1828 = vpop.trf.xlu0
      %v1829 = vpop.trf.xlu0
      %v1830 = vpop.trf.xlu0
      %1831 = vxpose.xlu0.c.b16.start [1/8] %v1790, 128
      %1832 = vxpose.xlu0.c.b16.cont [2/8] 0, 128
      %1833 = vxpose.xlu0.c.b16.cont [3/8] 0, 128
      %1834 = vxpose.xlu0.c.b16.cont [4/8] 0, 128
      %1835 = vxpose.xlu0.c.b16.cont [5/8] 0, 128
      %1836 = vxpose.xlu0.c.b16.cont [6/8] 0, 128
      %1837 = vxpose.xlu0.c.b16.cont [7/8] 0, 128
      %1838 = vxpose.xlu0.c.b16.end [8/8] 0, 128
      %v1839 = vpop.trf.xlu0
      %v1840 = vpop.trf.xlu0
      %v1841 = vpop.trf.xlu0
      %v1842 = vpop.trf.xlu0
      %v1843 = vpop.trf.xlu0
      %v1844 = vpop.trf.xlu0
      %v1845 = vpop.trf.xlu0
      %v1846 = vpop.trf.xlu0
      %1847 = vxpose.xlu0.c.b16.start [1/8] %v1754, 128
      %1848 = vxpose.xlu0.c.b16.cont [2/8] 0, 128
      %1849 = vxpose.xlu0.c.b16.cont [3/8] 0, 128
      %1850 = vxpose.xlu0.c.b16.cont [4/8] 0, 128
      %1851 = vxpose.xlu0.c.b16.cont [5/8] 0, 128
      %1852 = vxpose.xlu0.c.b16.cont [6/8] 0, 128
      %1853 = vxpose.xlu0.c.b16.cont [7/8] 0, 128
      %1854 = vxpose.xlu0.c.b16.end [8/8] 0, 128
      %v1855 = vpop.trf.xlu0
      %v1856 = vpop.trf.xlu0
      %v1857 = vpop.trf.xlu0
      %v1858 = vpop.trf.xlu0
      %v1859 = vpop.trf.xlu0
      %v1860 = vpop.trf.xlu0
      %v1861 = vpop.trf.xlu0
      %v1862 = vpop.trf.xlu0
      %1863 = vxpose.xlu0.c.b16.start [1/8] %v1808, 128
      %1864 = vxpose.xlu0.c.b16.cont [2/8] 0, 128
      %1865 = vxpose.xlu0.c.b16.cont [3/8] 0, 128
      %1866 = vxpose.xlu0.c.b16.cont [4/8] 0, 128
      %1867 = vxpose.xlu0.c.b16.cont [5/8] 0, 128
      %1868 = vxpose.xlu0.c.b16.cont [6/8] 0, 128
      %1869 = vxpose.xlu0.c.b16.cont [7/8] 0, 128
      %1870 = vxpose.xlu0.c.b16.end [8/8] 0, 128
      %v1871 = vpop.trf.xlu0
      %v1872 = vpop.trf.xlu0
      %v1873 = vpop.trf.xlu0
      %v1874 = vpop.trf.xlu0
      %v1875 = vpop.trf.xlu0
      %v1876 = vpop.trf.xlu0
      %v1877 = vpop.trf.xlu0
      %v1878 = vpop.trf.xlu0
      %1879 = vxpose.xlu0.c.b16.start [1/8] %v1740, 128
      %1880 = vxpose.xlu0.c.b16.cont [2/8] 0, 128
      %1881 = vxpose.xlu0.c.b16.cont [3/8] 0, 128
      %1882 = vxpose.xlu0.c.b16.cont [4/8] 0, 128
      %1883 = vxpose.xlu0.c.b16.cont [5/8] 0, 128
      %1884 = vxpose.xlu0.c.b16.cont [6/8] 0, 128
      %1885 = vxpose.xlu0.c.b16.cont [7/8] 0, 128
      %1886 = vxpose.xlu0.c.b16.end [8/8] 0, 128
      %v1887 = vpop.trf.xlu0
      %v1888 = vpop.trf.xlu0
      %v1889 = vpop.trf.xlu0
      %v1890 = vpop.trf.xlu0
      %v1891 = vpop.trf.xlu0
      %v1892 = vpop.trf.xlu0
      %v1893 = vpop.trf.xlu0
      %v1894 = vpop.trf.xlu0
      %1895 = vxpose.xlu0.c.b16.start [1/8] %v1794, 128
      %1896 = vxpose.xlu0.c.b16.cont [2/8] 0, 128
      %1897 = vxpose.xlu0.c.b16.cont [3/8] 0, 128
      %1898 = vxpose.xlu0.c.b16.cont [4/8] 0, 128
      %1899 = vxpose.xlu0.c.b16.cont [5/8] 0, 128
      %1900 = vxpose.xlu0.c.b16.cont [6/8] 0, 128
      %1901 = vxpose.xlu0.c.b16.cont [7/8] 0, 128
      %1902 = vxpose.xlu0.c.b16.end [8/8] 0, 128
      %v1903 = vpop.trf.xlu0
      %v1904 = vpop.trf.xlu0
      %v1905 = vpop.trf.xlu0
      %v1906 = vpop.trf.xlu0
      %v1907 = vpop.trf.xlu0
      %v1908 = vpop.trf.xlu0
      %v1909 = vpop.trf.xlu0
      %v1910 = vpop.trf.xlu0
      %1911 = vxpose.xlu0.c.b16.start [1/8] %v1756, 128
      %1912 = vxpose.xlu0.c.b16.cont [2/8] 0, 128
      %1913 = vxpose.xlu0.c.b16.cont [3/8] 0, 128
      %1914 = vxpose.xlu0.c.b16.cont [4/8] 0, 128
      %1915 = vxpose.xlu0.c.b16.cont [5/8] 0, 128
      %1916 = vxpose.xlu0.c.b16.cont [6/8] 0, 128
      %1917 = vxpose.xlu0.c.b16.cont [7/8] 0, 128
      %1918 = vxpose.xlu0.c.b16.end [8/8] 0, 128
      %v1919 = vpop.trf.xlu0
      %v1920 = vpop.trf.xlu0
      %v1921 = vpop.trf.xlu0
      %v1922 = vpop.trf.xlu0
      %v1923 = vpop.trf.xlu0
      %v1924 = vpop.trf.xlu0
      %v1925 = vpop.trf.xlu0
      %v1926 = vpop.trf.xlu0
      %1927 = vxpose.xlu0.c.b16.start [1/8] %v1810, 128
      %1928 = vxpose.xlu0.c.b16.cont [2/8] 0, 128
      %1929 = vxpose.xlu0.c.b16.cont [3/8] 0, 128
      %1930 = vxpose.xlu0.c.b16.cont [4/8] 0, 128
      %1931 = vxpose.xlu0.c.b16.cont [5/8] 0, 128
      %1932 = vxpose.xlu0.c.b16.cont [6/8] 0, 128
      %1933 = vxpose.xlu0.c.b16.cont [7/8] 0, 128
      %1934 = vxpose.xlu0.c.b16.end [8/8] 0, 128
      %v1935 = vpop.trf.xlu0
      %v1936 = vpop.trf.xlu0
      %v1937 = vpop.trf.xlu0
      %v1938 = vpop.trf.xlu0
      %v1939 = vpop.trf.xlu0
      %v1940 = vpop.trf.xlu0
      %v1941 = vpop.trf.xlu0
      %v1942 = vpop.trf.xlu0
      %1943 = vxpose.xlu0.c.b16.start [1/8] %v1748, 128
      %1944 = vxpose.xlu0.c.b16.cont [2/8] 0, 128
      %1945 = vxpose.xlu0.c.b16.cont [3/8] 0, 128
      %1946 = vxpose.xlu0.c.b16.cont [4/8] 0, 128
      %1947 = vxpose.xlu0.c.b16.cont [5/8] 0, 128
      %1948 = vxpose.xlu0.c.b16.cont [6/8] 0, 128
      %1949 = vxpose.xlu0.c.b16.cont [7/8] 0, 128
      %1950 = vxpose.xlu0.c.b16.end [8/8] 0, 128
      %v1951 = vpop.trf.xlu0
      %v1952 = vpop.trf.xlu0
      %v1953 = vpop.trf.xlu0
      %v1954 = vpop.trf.xlu0
      %v1955 = vpop.trf.xlu0
      %v1956 = vpop.trf.xlu0
      %v1957 = vpop.trf.xlu0
      %v1958 = vpop.trf.xlu0
      %1959 = vxpose.xlu0.c.b16.start [1/8] %v1802, 128
      %1960 = vxpose.xlu0.c.b16.cont [2/8] 0, 128
      %1961 = vxpose.xlu0.c.b16.cont [3/8] 0, 128
      %1962 = vxpose.xlu0.c.b16.cont [4/8] 0, 128
      %1963 = vxpose.xlu0.c.b16.cont [5/8] 0, 128
      %1964 = vxpose.xlu0.c.b16.cont [6/8] 0, 128
      %1965 = vxpose.xlu0.c.b16.cont [7/8] 0, 128
      %1966 = vxpose.xlu0.c.b16.end [8/8] 0, 128
      %v1967 = vpop.trf.xlu0
      %v1968 = vpop.trf.xlu0
      %v1969 = vpop.trf.xlu0
      %v1970 = vpop.trf.xlu0
      %v1971 = vpop.trf.xlu0
      %v1972 = vpop.trf.xlu0
      %v1973 = vpop.trf.xlu0
      %v1974 = vpop.trf.xlu0
      %1975 = vxpose.xlu0.c.b16.start [1/8] %v1758, 128
      %1976 = vxpose.xlu0.c.b16.cont [2/8] 0, 128
      %1977 = vxpose.xlu0.c.b16.cont [3/8] 0, 128
      %1978 = vxpose.xlu0.c.b16.cont [4/8] 0, 128
      %1979 = vxpose.xlu0.c.b16.cont [5/8] 0, 128
      %1980 = vxpose.xlu0.c.b16.cont [6/8] 0, 128
      %1981 = vxpose.xlu0.c.b16.cont [7/8] 0, 128
      %1982 = vxpose.xlu0.c.b16.end [8/8] 0, 128
      %v1983 = vpop.trf.xlu0
      %v1984 = vpop.trf.xlu0
      %v1985 = vpop.trf.xlu0
      %v1986 = vpop.trf.xlu0
      %v1987 = vpop.trf.xlu0
      %v1988 = vpop.trf.xlu0
      %v1989 = vpop.trf.xlu0
      %v1990 = vpop.trf.xlu0
      %1991 = vxpose.xlu0.c.b16.start [1/8] %v1812, 128
      %1992 = vxpose.xlu0.c.b16.cont [2/8] 0, 128
      %1993 = vxpose.xlu0.c.b16.cont [3/8] 0, 128
      %1994 = vxpose.xlu0.c.b16.cont [4/8] 0, 128
      %1995 = vxpose.xlu0.c.b16.cont [5/8] 0, 128
      %1996 = vxpose.xlu0.c.b16.cont [6/8] 0, 128
      %1997 = vxpose.xlu0.c.b16.cont [7/8] 0, 128
      %1998 = vxpose.xlu0.c.b16.end [8/8] 0, 128
      %v1999 = vpop.trf.xlu0
      %v2000 = vpop.trf.xlu0
      %v2001 = vpop.trf.xlu0
      %v2002 = vpop.trf.xlu0
      %v2003 = vpop.trf.xlu0
      %v2004 = vpop.trf.xlu0
      %v2005 = vpop.trf.xlu0
      %v2006 = vpop.trf.xlu0
      %2007 = vxpose.xlu0.c.b16.start [1/8] %v1752, 128
      %2008 = vxpose.xlu0.c.b16.cont [2/8] 0, 128
      %2009 = vxpose.xlu0.c.b16.cont [3/8] 0, 128
      %2010 = vxpose.xlu0.c.b16.cont [4/8] 0, 128
      %2011 = vxpose.xlu0.c.b16.cont [5/8] 0, 128
      %2012 = vxpose.xlu0.c.b16.cont [6/8] 0, 128
      %2013 = vxpose.xlu0.c.b16.cont [7/8] 0, 128
      %2014 = vxpose.xlu0.c.b16.end [8/8] 0, 128
      %v2015 = vpop.trf.xlu0
      %v2016 = vpop.trf.xlu0
      %v2017 = vpop.trf.xlu0
      %v2018 = vpop.trf.xlu0
      %v2019 = vpop.trf.xlu0
      %v2020 = vpop.trf.xlu0
      %v2021 = vpop.trf.xlu0
      %v2022 = vpop.trf.xlu0
      %2023 = vxpose.xlu0.c.b16.start [1/8] %v1806, 128
      %2024 = vxpose.xlu0.c.b16.cont [2/8] 0, 128
      %2025 = vxpose.xlu0.c.b16.cont [3/8] 0, 128
      %2026 = vxpose.xlu0.c.b16.cont [4/8] 0, 128
      %2027 = vxpose.xlu0.c.b16.cont [5/8] 0, 128
      %2028 = vxpose.xlu0.c.b16.cont [6/8] 0, 128
      %2029 = vxpose.xlu0.c.b16.cont [7/8] 0, 128
      %2030 = vxpose.xlu0.c.b16.end [8/8] 0, 128
      %v2031 = vpop.trf.xlu0
      %v2032 = vpop.trf.xlu0
      %v2033 = vpop.trf.xlu0
      %v2034 = vpop.trf.xlu0
      %v2035 = vpop.trf.xlu0
      %v2036 = vpop.trf.xlu0
      %v2037 = vpop.trf.xlu0
      %v2038 = vpop.trf.xlu0
      %2039 = vxpose.xlu0.c.b16.start [1/8] %v1760, 128
      %2040 = vxpose.xlu0.c.b16.cont [2/8] 0, 128
      %2041 = vxpose.xlu0.c.b16.cont [3/8] 0, 128
      %2042 = vxpose.xlu0.c.b16.cont [4/8] 0, 128
      %2043 = vxpose.xlu0.c.b16.cont [5/8] 0, 128
      %2044 = vxpose.xlu0.c.b16.cont [6/8] 0, 128
      %2045 = vxpose.xlu0.c.b16.cont [7/8] 0, 128
      %2046 = vxpose.xlu0.c.b16.end [8/8] 0, 128
      %v2047 = vpop.trf.xlu0
      %v2048 = vpop.trf.xlu0
      %v2049 = vpop.trf.xlu0
      %v2050 = vpop.trf.xlu0
      %v2051 = vpop.trf.xlu0
      %v2052 = vpop.trf.xlu0
      %v2053 = vpop.trf.xlu0
      %v2054 = vpop.trf.xlu0
      %2055 = vxpose.xlu0.c.b16.start [1/8] %v1814, 128
      %2056 = vxpose.xlu0.c.b16.cont [2/8] 0, 128
      %2057 = vxpose.xlu0.c.b16.cont [3/8] 0, 128
      %2058 = vxpose.xlu0.c.b16.cont [4/8] 0, 128
      %2059 = vxpose.xlu0.c.b16.cont [5/8] 0, 128
      %2060 = vxpose.xlu0.c.b16.cont [6/8] 0, 128
      %2061 = vxpose.xlu0.c.b16.cont [7/8] 0, 128
      %2062 = vxpose.xlu0.c.b16.end [8/8] 0, 128
      %v2063 = vpop.trf.xlu0
      %v2064 = vpop.trf.xlu0
      %v2065 = vpop.trf.xlu0
      %v2066 = vpop.trf.xlu0
      %v2067 = vpop.trf.xlu0
      %v2068 = vpop.trf.xlu0
      %v2069 = vpop.trf.xlu0
      %v2070 = vpop.trf.xlu0
      %v2071 = vrot.slane %v1887, 4
      %v2072 = vsel %vm959, %v2071, %v1823
      %v2074 = vunpack.c.l.s4 1983009808
      %v2075 = vunpack.c.0.s8 %v2074
      %v2076 = vperm.slane %v2072, %v2075
      %v2077 = vrot.slane %v1919, 4
      %v2078 = vsel %vm959, %v2077, %v1855
      %v2080 = vunpack.c.l.s4 1983009808
      %v2081 = vunpack.c.0.s8 %v2080
      %v2082 = vperm.slane %v2078, %v2081
      %v2083 = vrot.slane %v2015, 4
      %v2084 = vsel %vm959, %v2083, %v1951
      %v2086 = vunpack.c.l.s4 1983009808
      %v2087 = vunpack.c.0.s8 %v2086
      %v2088 = vperm.slane %v2084, %v2087
      %v2089 = vrot.slane %v2047, 4
      %v2090 = vsel %vm959, %v2089, %v1983
      %v2092 = vunpack.c.l.s4 1983009808
      %v2093 = vunpack.c.0.s8 %v2092
      %v2094 = vperm.slane %v2090, %v2093
      %v2095 = vrot.slane %v2082, 4
      %v2096 = vsel %vm959, %v2095, %v2076
      %v2098 = vunpack.c.l.s4 1934713408
      %v2099 = vunpack.c.0.s8 %v2098
      %v2100 = vperm.slane %v2096, %v2099
      %v2101 = vrot.slane %v2094, 4
      %v2102 = vsel %vm959, %v2101, %v2088
      %v2104 = vunpack.c.l.s4 1934713408
      %v2105 = vunpack.c.0.s8 %v2104
      %v2106 = vperm.slane %v2102, %v2105
      %v2107 = vrot.slane %v2106, 4
      %v2108 = vsel %vm959, %v2107, %v2100
      %v2109 = vrot.slane %v1903, 4
      %v2110 = vsel %vm959, %v2109, %v1839
      %v2112 = vunpack.c.l.s4 1983009808
      %v2113 = vunpack.c.0.s8 %v2112
      %v2114 = vperm.slane %v2110, %v2113
      %v2115 = vrot.slane %v1935, 4
      %v2116 = vsel %vm959, %v2115, %v1871
      %v2118 = vunpack.c.l.s4 1983009808
      %v2119 = vunpack.c.0.s8 %v2118
      %v2120 = vperm.slane %v2116, %v2119
      %v2121 = vrot.slane %v2031, 4
      %v2122 = vsel %vm959, %v2121, %v1967
      %v2124 = vunpack.c.l.s4 1983009808
      %v2125 = vunpack.c.0.s8 %v2124
      %v2126 = vperm.slane %v2122, %v2125
      %v2127 = vrot.slane %v2063, 4
      %v2128 = vsel %vm959, %v2127, %v1999
      %v2130 = vunpack.c.l.s4 1983009808
      %v2131 = vunpack.c.0.s8 %v2130
      %v2132 = vperm.slane %v2128, %v2131
      %v2133 = vrot.slane %v2120, 4
      %v2134 = vsel %vm959, %v2133, %v2114
      %v2136 = vunpack.c.l.s4 1934713408
      %v2137 = vunpack.c.0.s8 %v2136
      %v2138 = vperm.slane %v2134, %v2137
      %v2139 = vrot.slane %v2132, 4
      %v2140 = vsel %vm959, %v2139, %v2126
      %v2142 = vunpack.c.l.s4 1934713408
      %v2143 = vunpack.c.0.s8 %v2142
      %v2144 = vperm.slane %v2140, %v2143
      %v2145 = vrot.slane %v2144, 4
      %v2146 = vsel %vm959, %v2145, %v2138
      %v2149 = vpack.i.b16 %v2146, %v2108
      %v2150 = vshrl.u32 %v2108, 16
      %v2151 = vshrl.u32 %v2146, 16
      %v2152 = vpack.i.b16 %v2151, %v2150
      %vm2153 = vcmask 39936
      %v2155 = vsel %vm2153, %v2149, 0
      %v2158 = vsel %vm2153, %v1598, 0
      %2160 = vmatpush.bf16.xpose.msra.mxu0 0
      %2161 = vmatpush.bf16.xpose.msra.mxu0 0
      %2162 = vmatpush.bf16.xpose.msra.mxu0 0
      %2163 = vmatpush.bf16.xpose.msra.mxu0 0
      %2164 = vmatpush.bf16.xpose.msra.mxu0 0
      %2165 = vmatpush.bf16.xpose.msra.mxu0 0
      %2166 = vmatpush.bf16.xpose.msra.mxu0 0
      %2167 = vmatpush.bf16.xpose.msra.mxu0 %v2158
      %2168 = vmatmul.bf16.gmra.mxu0 %v2155
      %v2169 = vpop.f32.mrf.mxu0
      %v2170 = vadd.f32 0.0, %v2169
      %v2171 = vpop.f32.mrf.mxu0
      %v2172 = vadd.f32 0.0, %v2171
      %2173 = vdwg.mxu0
      %v2175 = vsel %vm2153, %v2152, 0
      %v2178 = vsel %vm2153, %v1599, 0
      %2180 = vmatpush.bf16.xpose.msra.mxu0 0
      %2181 = vmatpush.bf16.xpose.msra.mxu0 0
      %2182 = vmatpush.bf16.xpose.msra.mxu0 0
      %2183 = vmatpush.bf16.xpose.msra.mxu0 0
      %2184 = vmatpush.bf16.xpose.msra.mxu0 0
      %2185 = vmatpush.bf16.xpose.msra.mxu0 0
      %2186 = vmatpush.bf16.xpose.msra.mxu0 0
      %2187 = vmatpush.bf16.xpose.msra.mxu0 %v2178
      %2188 = vmatmul.bf16.gmra.mxu0 %v2175
      %v2189 = vpop.f32.mrf.mxu0
      %v2190 = vadd.f32 0.0, %v2189
      %v2191 = vpop.f32.mrf.mxu0
      %v2192 = vadd.f32 0.0, %v2191
      %2193 = vdwg.mxu0
      %2194 = vxpose.xlu0.b32.start [1/16] %v2170, 128
      %2195 = vxpose.xlu0.b32.cont [2/16] %v2172, 128
      %2196 = vxpose.xlu0.b32.cont [3/16] 0.0, 128
      %2197 = vxpose.xlu0.b32.cont [4/16] 0.0, 128
      %2198 = vxpose.xlu0.b32.cont [5/16] 0.0, 128
      %2199 = vxpose.xlu0.b32.cont [6/16] 0.0, 128
      %2200 = vxpose.xlu0.b32.cont [7/16] 0.0, 128
      %2201 = vxpose.xlu0.b32.cont [8/16] 0.0, 128
      %2202 = vxpose.xlu0.b32.cont [9/16] 0.0, 128
      %2203 = vxpose.xlu0.b32.cont [10/16] 0.0, 128
      %2204 = vxpose.xlu0.b32.cont [11/16] 0.0, 128
      %2205 = vxpose.xlu0.b32.cont [12/16] 0.0, 128
      %2206 = vxpose.xlu0.b32.cont [13/16] 0.0, 128
      %2207 = vxpose.xlu0.b32.cont [14/16] 0.0, 128
      %2208 = vxpose.xlu0.b32.cont [15/16] 0.0, 128
      %2209 = vxpose.xlu0.b32.end [16/16] 0.0, 128
      %v2210 = vpop.trf.xlu0
      %v2211 = vpop.trf.xlu0
      %v2212 = vpop.trf.xlu0
      %v2213 = vpop.trf.xlu0
      %v2214 = vpop.trf.xlu0
      %v2215 = vpop.trf.xlu0
      %v2216 = vpop.trf.xlu0
      %v2217 = vpop.trf.xlu0
      %v2218 = vpop.trf.xlu0
      %v2219 = vpop.trf.xlu0
      %v2220 = vpop.trf.xlu0
      %v2221 = vpop.trf.xlu0
      %v2222 = vpop.trf.xlu0
      %v2223 = vpop.trf.xlu0
      %v2224 = vpop.trf.xlu0
      %v2225 = vpop.trf.xlu0
      %2226 = vxpose.xlu0.b32.start [1/16] %v2190, 128
      %2227 = vxpose.xlu0.b32.cont [2/16] %v2192, 128
      %2228 = vxpose.xlu0.b32.cont [3/16] 0.0, 128
      %2229 = vxpose.xlu0.b32.cont [4/16] 0.0, 128
      %2230 = vxpose.xlu0.b32.cont [5/16] 0.0, 128
      %2231 = vxpose.xlu0.b32.cont [6/16] 0.0, 128
      %2232 = vxpose.xlu0.b32.cont [7/16] 0.0, 128
      %2233 = vxpose.xlu0.b32.cont [8/16] 0.0, 128
      %2234 = vxpose.xlu0.b32.cont [9/16] 0.0, 128
      %2235 = vxpose.xlu0.b32.cont [10/16] 0.0, 128
      %2236 = vxpose.xlu0.b32.cont [11/16] 0.0, 128
      %2237 = vxpose.xlu0.b32.cont [12/16] 0.0, 128
      %2238 = vxpose.xlu0.b32.cont [13/16] 0.0, 128
      %2239 = vxpose.xlu0.b32.cont [14/16] 0.0, 128
      %2240 = vxpose.xlu0.b32.cont [15/16] 0.0, 128
      %2241 = vxpose.xlu0.b32.end [16/16] 0.0, 128
      %v2242 = vpop.trf.xlu0
      %v2243 = vpop.trf.xlu0
      %v2244 = vpop.trf.xlu0
      %v2245 = vpop.trf.xlu0
      %v2246 = vpop.trf.xlu0
      %v2247 = vpop.trf.xlu0
      %v2248 = vpop.trf.xlu0
      %v2249 = vpop.trf.xlu0
      %v2250 = vpop.trf.xlu0
      %v2251 = vpop.trf.xlu0
      %v2252 = vpop.trf.xlu0
      %v2253 = vpop.trf.xlu0
      %v2254 = vpop.trf.xlu0
      %v2255 = vpop.trf.xlu0
      %v2256 = vpop.trf.xlu0
      %v2257 = vpop.trf.xlu0
      %v2259 = vunpack.c.l.s4 1983009808
      %v2260 = vunpack.c.0.s8 %v2259
      %v2261 = vperm.slane %v2210, %v2260
      %v2262 = vrot.slane %v2210, 4
      %v2263 = vsel %vm838, 0.0, %v2262
      %v2265 = vunpack.c.l.s4 1983009808
      %v2266 = vunpack.c.0.s8 %v2265
      %v2267 = vperm.slane %v2242, %v2266
      %v2268 = vrot.slane %v2242, 4
      %v2269 = vsel %vm838, 0.0, %v2268
      %v2270 = vrot.slane %v2267, 4
      %v2271 = vsel %vm838, %v2270, %v2261
      %v2272 = vrot.slane %v2261, 4
      %v2273 = vsel %vm838, %v2267, %v2272
      %v2275 = vunpack.c.l.s4 1934713408
      %v2276 = vunpack.c.0.s8 %v2275
      %v2277 = vperm.slane %v2271, %v2276
      %v2279 = vunpack.c.l.s4 1934713408
      %v2280 = vunpack.c.0.s8 %v2279
      %v2281 = vperm.slane %v2273, %v2280
      %v2282 = vrot.slane %v2269, 4
      %v2283 = vsel %vm838, %v2282, %v2263
      %v2284 = vrot.slane %v2277, 4
      %v2285 = vsel %vm838, 0.0, %v2284
      %v2286 = vrot.slane %v2281, 4
      %v2287 = vsel %vm838, 0.0, %v2286
      %v2288 = vsel %vm838, %v2286, %v2277
      %v2290 = vunpack.c.l.s4 1983009808
      %v2291 = vunpack.c.0.s8 %v2290
      %v2292 = vperm.slane %v2288, %v2291
      %v2293 = vrot.slane %v2287, 4
      %v2294 = vsel %vm838, %v2293, %v2285
      %v2296 = vunpack.c.l.s4 1983009808
      %v2297 = vunpack.c.0.s8 %v2296
      %v2298 = vperm.slane %v2294, %v2297
      %v2299 = vrot.slane %v2298, 4
      %v2300 = vsel %vm838, %v2299, %v2292
      %v2302 = vunpack.c.l.s4 1934713408
      %v2303 = vunpack.c.0.s8 %v2302
      %v2304 = vperm.slane %v2300, %v2303
      %v2306 = vunpack.c.l.s4 1934713408
      %v2307 = vunpack.c.0.s8 %v2306
      %v2308 = vperm.slane %v2283, %v2307
      %v2310 = vunpack.c.l.s4 1934713408
      %v2311 = vunpack.c.0.s8 %v2310
      %v2312 = vperm.slane %v2308, %v2311
      %v2313 = vrot.slane %v2312, 4
      %v2314 = vsel %vm838, %v2313, %v2304
      %v2315 = vrot.slane %v2304, 4
      %v2316 = vsel %vm838, %v2312, %v2315
      %2318 = vrot.lane.b32.xlu0 %v2316, 16
      %v2319 = vpop.permute.xlu0 %2318
      %v2321 = vsel %vm1542, %v2314, %v2319
      %v2322 = vpack.c.bf16 %v2321, %v2321
      %v2323 = vld [vmem:[%s10] sm:$0xf]
      %v2324 = vld [vmem:[%s10 + $0x4] sm:$0xf]
      %v2325 = vld [vmem:[%s10 + $0x8] sm:$0xf]
      %v2326 = vld [vmem:[%s10 + $0xc] sm:$0xf]
      %v2327 = vld [vmem:[%s11] sm:$0x1]
      %v2329 = vperm.slane %v2327, 0
      %v2335 = vunpack.c.l.b16 %v2323
      %v2336 = vunpack.c.l.b16 %v2324
      %v2337 = vunpack.c.l.b16 %v2325
      %v2338 = vunpack.c.l.b16 %v2326
      %v2339 = vpack.c.b16 %v2336, %v2335
      %v2340 = vpack.c.b16 %v2338, %v2337
      %v2344 = vsel %vm811, %v2322, 0
      %2346 = vmatpush.bf16.msra.mxu0 0
      %2347 = vmatpush.bf16.msra.mxu0 0
      %2348 = vmatpush.bf16.msra.mxu0 0
      %2349 = vmatpush.bf16.msra.mxu0 0
      %2350 = vmatpush.bf16.msra.mxu0 0
      %2351 = vmatpush.bf16.msra.mxu0 0
      %2352 = vmatpush.bf16.msra.mxu0 %v2340
      %2353 = vmatpush.bf16.msra.mxu0 %v2339
      %2354 = vmatmul.bf16.gmra.mxu0 %v2344
      %v2355 = vpop.f32.mrf.mxu0
      %v2356 = vadd.f32 %v2329, %v2355
      %v2357 = vpop.f32.mrf.mxu0
      %2358 = vdwg.mxu0
      %v2359 = vadd.f32 %v757, %v2356
      %v2360 = vld [vmem:[%s12] sm:$0x1]
      %v2361 = vld [vmem:[%s13] sm:$0x1]
      %v2362 = vsel %vm720, %v2359, 0.0
      %2363 = vadd.xlane.f32.xlu0 %v2362
      %v2364 = vpop.xlane.xlu0 %2363
      %v2365 = vmul.f32 %v2364, %v730
      %v2366 = vsub.f32 %v2359, %v2365
      %v2367 = vmul.f32 %v2366, %v2366
      %v2368 = vsel %vm720, %v2367, 0.0
      %2369 = vadd.xlane.f32.xlu0 %v2368
      %v2370 = vpop.xlane.xlu0 %2369
      %v2371 = vmul.f32 %v2370, %v730
      %v2372 = vadd.f32 %v2371, 1e-05
      %v2373 = vrsqrt.pop %v2372
      %v2374 = vmul.f32 %v2373, %v2372
      %v2375 = vmul.f32 %v2374, %v2373
      %v2376 = vmul.f32 0.5, %v2375
      %v2377 = vsub.f32 1.5, %v2376
      %v2378 = vmul.f32 %v2373, %v2377
      %vm2379 = vweird.f32 %v2372
      %vm2380 = vweird.f32 %v2373
      %vm2381 = vmor %vm2379, %vm2380
      %v2382 = vsel %vm2381, %v2373, %v2378
      %v2383 = vmul.f32 %v2366, %v2382
      %v2385 = vperm.slane %v2360, 0
      %v2387 = vmul.f32 %v2383, %v2385
      %v2389 = vperm.slane %v2361, 0
      %v2391 = vadd.f32 %v2387, %v2389
      %v2392 = vpack.c.bf16 %v2391, %v2391
      %v2393 = vld [vmem:[%s14] sm:$0xf]
      %v2394 = vld [vmem:[%s14 + $0x4] sm:$0xf]
      %v2395 = vld [vmem:[%s14 + $0x8] sm:$0xf]
      %v2396 = vld [vmem:[%s14 + $0xc] sm:$0xf]
      %v2397 = vld [vmem:[%s15] sm:$0x1]
      %v2399 = vperm.slane %v2397, 0
      %v2405 = vunpack.c.l.b16 %v2393
      %v2406 = vunpack.c.l.b16 %v2394
      %v2407 = vunpack.c.l.b16 %v2395
      %v2408 = vunpack.c.l.b16 %v2396
      %v2409 = vpack.c.b16 %v2406, %v2405
      %v2410 = vpack.c.b16 %v2408, %v2407
      %v2414 = vsel %vm811, %v2392, 0
      %2416 = vmatpush.bf16.msra.mxu0 0
      %2417 = vmatpush.bf16.msra.mxu0 0
      %2418 = vmatpush.bf16.msra.mxu0 0
      %2419 = vmatpush.bf16.msra.mxu0 0
      %2420 = vmatpush.bf16.msra.mxu0 0
      %2421 = vmatpush.bf16.msra.mxu0 0
      %2422 = vmatpush.bf16.msra.mxu0 %v2410
      %2423 = vmatpush.bf16.msra.mxu0 %v2409
      %2424 = vmatmul.bf16.gmra.mxu0 %v2414
      %v2425 = vpop.f32.mrf.mxu0
      %v2426 = vadd.f32 %v2399, %v2425
      %v2427 = vpop.f32.mrf.mxu0
      %2428 = vdwg.mxu0
      %v2429 = vmul.f32 %v2426, 1.702
      %v2430 = vxor.u32 %v2429, 2147483648
      %v2431 = vmul.f32 %v2430, 1.442695
      %v2432 = vpow.pop %v2431
      %v2433 = vadd.f32 %v2432, 1.0
      %v2434 = vrcp.pop %v2433
      %v2435 = vmul.f32 %v2433, %v2434
      %v2436 = vsub.f32 1.0, %v2435
      %v2437 = vmul.f32 %v2434, %v2436
      %v2438 = vadd.f32 %v2434, %v2437
      %vm2439 = vweird.f32 %v2433
      %vm2440 = vweird.f32 %v2434
      %vm2441 = vmor %vm2439, %vm2440
      %v2442 = vsel %vm2441, %v2434, %v2438
      %v2443 = vand.u32 2147483647, %v2433
      %vm2444 = vcmp.eq.f32.partialorder %v2443, 8.507059e+37
      %v2445 = vand.u32 %v2433, 2147483648
      %v2446 = vor.u32 1.1754944e-38, %v2445
      %v2447 = vsel %vm2444, %v2446, %v2442
      %v2448 = vmul.f32 1.0, %v2447
      %v2449 = vmul.f32 %v2426, %v2448
      %v2450 = vpack.c.bf16 %v2449, %v2449
      %v2451 = vld [vmem:[%s16] sm:$0xf]
      %v2452 = vld [vmem:[%s16 + $0x4] sm:$0xf]
      %v2453 = vld [vmem:[%s16 + $0x8] sm:$0xf]
      %v2454 = vld [vmem:[%s16 + $0xc] sm:$0xf]
      %v2455 = vld [vmem:[%s16 + $0x10] sm:$0xf]
      %v2456 = vld [vmem:[%s16 + $0x14] sm:$0xf]
      %v2457 = vld [vmem:[%s16 + $0x18] sm:$0xf]
      %v2458 = vld [vmem:[%s16 + $0x1c] sm:$0xf]
      %v2459 = vld [vmem:[%s17] sm:$0x1]
      %v2461 = vperm.slane %v2459, 0
      %v2471 = vunpack.c.l.b16 %v2451
      %v2472 = vunpack.c.l.b16 %v2452
      %v2473 = vunpack.c.l.b16 %v2453
      %v2474 = vunpack.c.l.b16 %v2454
      %v2475 = vunpack.c.l.b16 %v2455
      %v2476 = vunpack.c.l.b16 %v2456
      %v2477 = vunpack.c.l.b16 %v2457
      %v2478 = vunpack.c.l.b16 %v2458
      %v2479 = vpack.c.b16 %v2472, %v2471
      %v2480 = vpack.c.b16 %v2474, %v2473
      %v2481 = vpack.c.b16 %v2476, %v2475
      %v2482 = vpack.c.b16 %v2478, %v2477
      %v2488 = vsel %vm680, %v2450, 0
      %2490 = vmatpush.bf16.msra.mxu0 0
      %2491 = vmatpush.bf16.msra.mxu0 0
      %2492 = vmatpush.bf16.msra.mxu0 0
      %2493 = vmatpush.bf16.msra.mxu0 0
      %2494 = vmatpush.bf16.msra.mxu0 %v2482
      %2495 = vmatpush.bf16.msra.mxu0 %v2481
      %2496 = vmatpush.bf16.msra.mxu0 %v2480
      %2497 = vmatpush.bf16.msra.mxu0 %v2479
      %2498 = vmatmul.bf16.gmra.mxu0 %v2488
      %v2499 = vpop.f32.mrf.mxu0
      %v2500 = vadd.f32 %v2461, %v2499
      %v2501 = vpop.f32.mrf.mxu0
      %2502 = vdwg.mxu0
      %v2503 = vadd.f32 %v2359, %v2500
      %v2504 = vpack.c.bf16 %v2503, %v2503
      %vm2505 = vcmask 256000
      %vm2506 = vsmask.f32 2304
      %vm2507 = vmand %vm2505, %vm2506
      %v2508 = vld [vmem:[%s573] sm:$0x7]
      %v2509 = vsel %vm2507, %v2504, %v2508
      %2510 = vst [vmem:[%s573] sm:$0x7] %v2509
      %p2511 = scmp.lt.s32.totalorder %s29, 1
      %s2512 = scalar_select %p2511, %s29, 1
      %s2513 = smul.addr %s2512, 4
      %s2514 = scalar_lea.vmem %s18, %s2513
      // Predicated region
      $region93: #{multimodal_classifier_forward.4} parent=91 // pred_check
        %p2515 = pneg %p430
      $region94: #{multimodal_classifier_forward.4} parent=91 // pred_check_branch
        %2517 = sbr.rel (%p2515) target = $region96
      $region95: #{multimodal_classifier_forward.4} parent=91 // pred_region
        _
      $region96: #{multimodal_classifier_forward.4} parent=91 // pred_fallthru
        _
    $region92: #{multimodal_classifier_forward.4} parent=5 // pred_fallthru
      _
    %p2518 = scmp.le.s32.totalorder 2, %s24
    // Predicated region
    $region97: #{multimodal_classifier_forward.4} parent=5 // pred_check
      %p2519 = pneg %p2518
    $region98: #{multimodal_classifier_forward.4} parent=5 // pred_check_branch
      %2521 = sbr.rel (%p2519) target = $region100
    $region99: #{multimodal_classifier_forward.4} parent=5 // pred_region
      %s2522 = ssub.s32 %s24, 2
      // Predicated region
      $region101: #{multimodal_classifier_forward.4} parent=99 // pred_check
        %p2523 = pneg %p436
      $region102: #{multimodal_classifier_forward.4} parent=99 // pred_check_branch
        %2525 = sbr.rel (%p2523) target = $region104
      $region103: #{multimodal_classifier_forward.4} parent=99 // pred_region
        %p2526 = scmp.lt.s32.totalorder %s30, 1
        %s2527 = scalar_select %p2526, %s30, 1
        %s2528 = smul.addr %s2527, 4
        %s2529 = scalar_lea.vmem %s18, %s2528
      $region104: #{multimodal_classifier_forward.4} parent=99 // pred_fallthru
        _
    $region100: #{multimodal_classifier_forward.4} parent=5 // pred_fallthru
      _
  $region6: #{multimodal_classifier_forward.4} parent=0 // loop_footer
    %s28 = sadd.s32 1, %s24
  $region7: #{multimodal_classifier_forward.4} parent=0 // loop_footer_branch
    %23 = sbr.rel target = $region3
  $region8: #{multimodal_classifier_forward.4} parent=0 // loop_exit
    _

</llo_original>
